<compile_context>
chip_gen: v5e
topology: v5e:2x2
jax: 0.10.0
libtpu: 0.0.40
codegen_flags: <defaults>
</compile_context>

<pallas_src>
import functools
import math

import jax
import jax.numpy as jnp
from jax.experimental import pallas as pl
from jax.experimental.pallas import tpu as pltpu


def _self_attn_kernel(hid_ref, src_ref, mask_ref,
                      wq_ref, bq_ref, wkv_ref, bkv_ref, wk2_ref, bk2_ref,
                      out_ref,
                      kcat_scr, v_scr,
                      *, num_heads: int, head_size: int, q_tile: int):
    """Grid = (batch, q_tile). K/V/K2 built once per batch element into scratch."""
    nh, dh = num_heads, head_size
    H = nh * dh
    S = hid_ref.shape[1]
    t = pl.program_id(1)

    # ---- once per batch element: project K, V (from hidden) and K2 (from source) ----
    @pl.when(t == 0)
    def _build_kv():
        h_all = hid_ref[0]                          # [S, H]  bf16
        src = src_ref[0]                            # [S, H]  bf16
        kv = jnp.dot(h_all, wkv_ref[...],
                     preferred_element_type=jnp.float32) + bkv_ref[0]      # [S, 2H] f32
        k2 = jnp.dot(src, wk2_ref[...],
                     preferred_element_type=jnp.float32) + bk2_ref[0]      # [S, H]  f32
        k = kv[:, :H].reshape(S, nh, dh)
        v = kv[:, H:].reshape(S, nh, dh)
        k2 = k2.reshape(S, nh, dh)
        # head-major, fused [k | k2] along the contraction dim -> single score matmul.
        kcat = jnp.concatenate([k, k2], axis=-1)                           # [S, nh, 2dh]
        kcat_scr[...] = jnp.transpose(kcat, (1, 0, 2)).astype(jnp.bfloat16)  # [nh, S, 2dh]
        v_scr[...] = jnp.transpose(v, (1, 0, 2)).astype(jnp.bfloat16)        # [nh, S, dh]
        # f32 accumulators die here; only bf16 scratch survives the attention math.

    # ---- per query tile ----
    q_start = pl.multiple_of(t * q_tile, q_tile)
    h_q = hid_ref[0, pl.ds(q_start, q_tile), :]                            # [TQ, H] bf16

    # Fused q|q2 projection (weights already head-major + pre-scaled by 1/sqrt(dh)).
    qcat = jnp.dot(h_q, wq_ref[...],
                   preferred_element_type=jnp.float32) + bq_ref[0]         # [TQ, 2H] f32
    q_cat = jnp.transpose(qcat.reshape(q_tile, nh, 2 * dh),
                          (1, 0, 2)).astype(jnp.bfloat16)                  # [nh, TQ, 2dh]

    # scores = q.kT / sqrt(dh) + q2.k2T / sqrt(dh)  (scale folded into the weights).
    scores = jnp.einsum("hqd,hkd->hqk", q_cat, kcat_scr[...],
                        preferred_element_type=jnp.float32)                # [nh, TQ, S]
    scores = scores + mask_ref[0][None]                                    # one mask add

    # Numerically stable softmax with deferred normalization.
    m = jnp.max(scores, axis=-1, keepdims=True)
    e = jnp.exp(scores - m)                                                # in [0, 1]
    denom = jnp.sum(e, axis=-1, keepdims=True)                             # [nh, TQ, 1]

    # TODO(synk): attention-prob dropout omitted (identity in eval mode).
    ctx = jnp.einsum("hqk,hkd->hqd", e.astype(jnp.bfloat16), v_scr[...],
                     preferred_element_type=jnp.float32)                   # [nh, TQ, dh]
    ctx = ctx * pl.reciprocal(denom, approx=True)                          # small tensor

    # Single lane-dense [TQ, H] write, heads re-interleaved along lanes.
    out_ref[0] = jnp.transpose(ctx, (1, 0, 2)).reshape(q_tile, H).astype(out_ref.dtype)


def prepare_params(params, *, num_heads: int):
    """Build fused / head-major / bf16 weight constants ONCE (outside the per-step call)."""
    H = params["wq"].shape[0]
    assert H % num_heads == 0
    dh = H // num_heads
    scale = 1.0 / math.sqrt(dh)

    # Head-major fused q|q2 weight: for head h, columns are [q_h (dh) | q2_h (dh)].
    # 1/sqrt(dh) is folded in here (applies to both the q.k and q2.k2 score terms).
    wq_h = params["wq"].reshape(H, num_heads, dh)
    wq2_h = params["wq2"].reshape(H, num_heads, dh)
    w_qcat = (jnp.concatenate([wq_h, wq2_h], axis=-1).reshape(H, 2 * H)
              * scale).astype(jnp.bfloat16)                                # [H, 2H]
    bq_h = params["bq"].reshape(1, num_heads, dh)
    bq2_h = params["bq2"].reshape(1, num_heads, dh)
    b_qcat = (jnp.concatenate([bq_h, bq2_h], axis=-1).reshape(1, 2 * H)
              * scale).astype(jnp.float32)                                 # [1, 2H]

    # Fused k|v projection from hidden_states (used once per batch element).
    w_kv = jnp.concatenate([params["wk"], params["wv"]], axis=1).astype(jnp.bfloat16)
    b_kv = jnp.concatenate([params["bk"], params["bv"]], axis=1).astype(jnp.float32)
    wk2 = params["wk2"].astype(jnp.bfloat16)
    bk2 = params["bk2"].astype(jnp.float32)

    return dict(w_qcat=w_qcat, b_qcat=b_qcat, w_kv=w_kv, b_kv=b_kv, wk2=wk2, bk2=bk2)


def _vmem_limit_bytes():
    cap = 128 * 1024 * 1024
    try:
        cap = getattr(pltpu.get_tpu_info(), "vmem_capacity_bytes", cap)
    except Exception:
        pass
    # ~3/4 of physical, capped at 100 MiB: ≈48 MiB on v7x (64 MiB), 96 MiB on v5e/v6e.
    return int(min(cap * 3 // 4, 100 * 1024 * 1024))


def _pick_q_tile(S, tq_max=256):
    for cand in (tq_max, 256, 128, 64, 32, 16, 8):
        if cand <= S and S % cand == 0:
            return cand
    return S


def my_bert_self_attention(hidden_states, attention_mask, source_embedding, prepared,
                           *, num_heads: int, q_tile_max: int = 256):
    """hidden_states: [B, S, H]; attention_mask: [B, 1, S] additive;
    source_embedding: [B, S, H]; prepared: output of prepare_params()."""
    B, S, H = hidden_states.shape
    assert source_embedding.shape == (B, S, H)
    assert attention_mask.shape == (B, 1, S)
    assert H % num_heads == 0
    head_size = H // num_heads
    TQ = _pick_q_tile(S, q_tile_max)
    n_q_tiles = S // TQ

    # bf16 activations into the kernel: halves HBM->VMEM traffic; matmuls are bf16 anyway.
    hid_bf16 = hidden_states.astype(jnp.bfloat16)
    src_bf16 = source_embedding.astype(jnp.bfloat16)
    mask_f32 = attention_mask.astype(jnp.float32)

    kernel = functools.partial(_self_attn_kernel, num_heads=num_heads,
                               head_size=head_size, q_tile=TQ)

    def build_call(single_buffer_weights):
        def wspec(shape):
            idx = (lambda b, t: (0, 0))
            if single_buffer_weights:
                # Constant-index blocks: single-buffered (no double-buffer VMEM waste).
                return pl.BlockSpec(shape, idx, pipeline_mode=pl.Buffered(1))
            return pl.BlockSpec(shape, idx)

        return pl.pallas_call(
            kernel,
            # TODO(synk): emit bf16 output if the downstream BertSelfOutput accepts bf16.
            out_shape=jax.ShapeDtypeStruct((B, S, H), jnp.float32),
            grid_spec=pltpu.PrefetchScalarGridSpec(
                num_scalar_prefetch=0,
                grid=(B, n_q_tiles),
                in_specs=[
                    pl.BlockSpec((1, S, H), lambda b, t: (b, 0, 0)),   # hidden_states
                    pl.BlockSpec((1, S, H), lambda b, t: (b, 0, 0)),   # source_embedding
                    pl.BlockSpec((1, 1, S), lambda b, t: (b, 0, 0)),   # attention_mask
                    wspec((H, 2 * H)),                                  # fused q|q2 weight
                    wspec((1, 2 * H)),                                  # fused q|q2 bias
                    wspec((H, 2 * H)),                                  # fused k|v weight
                    wspec((1, 2 * H)),                                  # fused k|v bias
                    wspec((H, H)),                                      # src-subthread key weight
                    wspec((1, H)),                                      # src-subthread key bias
                ],
                out_specs=pl.BlockSpec((1, TQ, H), lambda b, t: (b, t, 0)),
                scratch_shapes=[
                    pltpu.VMEM((num_heads, S, 2 * head_size), jnp.bfloat16),  # k|k2 head-major
                    pltpu.VMEM((num_heads, S, head_size), jnp.bfloat16),      # v   head-major
                ],
            ),
            compiler_params=pltpu.CompilerParams(
                dimension_semantics=("parallel", "arbitrary"),
                vmem_limit_bytes=_vmem_limit_bytes()),
        )

    args = (hid_bf16, src_bf16, mask_f32,
            prepared["w_qcat"], prepared["b_qcat"],
            prepared["w_kv"], prepared["b_kv"],
            prepared["wk2"], prepared["bk2"])
    try:
        return build_call(single_buffer_weights=True)(*args)
    except Exception:
        # Fallback for jax builds without pipeline_mode / Buffered(1) support.
        return build_call(single_buffer_weights=False)(*args)


def _reference(hidden_states, attention_mask, source_embedding, params, *, num_heads):
    """Plain-JAX f32 mirror of the PyTorch forward (eval mode)."""
    B, S, H = hidden_states.shape
    dh = H // num_heads

    def split_heads(x):  # [B, S, H] -> [B, nH, S, dh]
        return x.reshape(B, S, num_heads, dh).transpose(0, 2, 1, 3)

    q = split_heads(hidden_states @ params["wq"] + params["bq"][0])
    k = split_heads(hidden_states @ params["wk"] + params["bk"][0])
    v = split_heads(hidden_states @ params["wv"] + params["bv"][0])
    scores = jnp.einsum("bhqd,bhkd->bhqk", q, k) / math.sqrt(dh)

    q2 = split_heads(hidden_states @ params["wq2"] + params["bq2"][0])
    k2 = split_heads(source_embedding @ params["wk2"] + params["bk2"][0])
    scores2 = jnp.einsum("bhqd,bhkd->bhqk", q2, k2) / math.sqrt(dh)

    scores = scores + scores2 + attention_mask[:, None, :, :]  # [B,1,1,S] broadcast
    probs = jax.nn.softmax(scores, axis=-1)
    ctx = jnp.einsum("bhqk,bhkd->bhqd", probs, v)
    return ctx.transpose(0, 2, 1, 3).reshape(B, S, H)


if __name__ == "__main__":
    B, S, H, NH = 2, 8, 32, 4

    key = jax.random.PRNGKey(0)
    keys = jax.random.split(key, 16)

    hidden = jax.random.normal(keys[0], (B, S, H), dtype=jnp.float32)
    source = jax.random.normal(keys[1], (B, S, H), dtype=jnp.float32)
    # BERT-style additive mask: 0 for attend, -10000 for masked positions.
    mask_bits = (jax.random.uniform(keys[2], (B, 1, S)) < 0.9).astype(jnp.float32)
    attn_mask = (1.0 - mask_bits) * -10000.0

    def linear_params(kw, kb):
        # nn.Linear(H, H): weight [out, in], bias [out]; pre-transposed so y = x @ W + b.
        w = jax.random.normal(kw, (H, H), dtype=jnp.float32) * 0.05
        b = jax.random.normal(kb, (1, H), dtype=jnp.float32) * 0.05
        return w, b

    params = {}
    params["wq"], params["bq"] = linear_params(keys[3], keys[4])
    params["wk"], params["bk"] = linear_params(keys[5], keys[6])
    params["wv"], params["bv"] = linear_params(keys[7], keys[8])
    params["wq2"], params["bq2"] = linear_params(keys[9], keys[10])
    params["wk2"], params["bk2"] = linear_params(keys[11], keys[12])

    prepared = prepare_params(params, num_heads=NH)   # fused bf16 constants built once

    out = my_bert_self_attention(hidden, attn_mask, source, prepared, num_heads=NH)
    out = jax.block_until_ready(out)

    ref = _reference(hidden, attn_mask, source, params, num_heads=NH)
    assert out.shape == (B, S, H)
    # bf16 MXU operands + approx reciprocal -> looser tolerance than the pure-f32 reference.
    assert jnp.allclose(out, ref, atol=2e-2, rtol=2e-2), "mismatch vs reference"

    print("KERNEL_OK")
</pallas_src>

<mosaic_0001>
module attributes {stable_mosaic.version = 11 : i64} {
  func.func @_self_attn_kernel(%arg0: i32, %arg1: i32, %arg2: memref<1x8x32xbf16, #tpu.memory_space<vmem>>, %arg3: memref<1x8x32xbf16, #tpu.memory_space<vmem>>, %arg4: memref<1x1x8xf32, #tpu.memory_space<vmem>>, %arg5: memref<32x64xbf16, #tpu.memory_space<vmem>>, %arg6: memref<1x64xf32, #tpu.memory_space<vmem>>, %arg7: memref<32x64xbf16, #tpu.memory_space<vmem>>, %arg8: memref<1x64xf32, #tpu.memory_space<vmem>>, %arg9: memref<32x32xbf16, #tpu.memory_space<vmem>>, %arg10: memref<1x32xf32, #tpu.memory_space<vmem>>, %arg11: memref<1x8x32xf32, #tpu.memory_space<vmem>>, %arg12: memref<4x8x16xbf16, #tpu.memory_space<vmem>>, %arg13: memref<4x8x8xbf16, #tpu.memory_space<vmem>>) attributes {dimension_semantics = [#tpu.dimension_semantics<parallel>, #tpu.dimension_semantics<arbitrary>], iteration_bounds = array<i64: 2, 1>, scalar_prefetch = 0 : i64, scratch_operands = 2 : i64, tpu.core_type = #tpu.core_type<tc>, window_params = [{transform_indices = @transform_0, window_bounds = array<i64: 1, 8, 32>}, {transform_indices = @transform_1, window_bounds = array<i64: 1, 8, 32>}, {transform_indices = @transform_2, window_bounds = array<i64: 1, 1, 8>}, {pipeline_mode = #tpu.pipeline_mode<synchronous>, transform_indices = @transform_3, window_bounds = array<i64: 32, 64>}, {pipeline_mode = #tpu.pipeline_mode<synchronous>, transform_indices = @transform_4, window_bounds = array<i64: 1, 64>}, {pipeline_mode = #tpu.pipeline_mode<synchronous>, transform_indices = @transform_5, window_bounds = array<i64: 32, 64>}, {pipeline_mode = #tpu.pipeline_mode<synchronous>, transform_indices = @transform_6, window_bounds = array<i64: 1, 64>}, {pipeline_mode = #tpu.pipeline_mode<synchronous>, transform_indices = @transform_7, window_bounds = array<i64: 32, 32>}, {pipeline_mode = #tpu.pipeline_mode<synchronous>, transform_indices = @transform_8, window_bounds = array<i64: 1, 32>}, {transform_indices = @transform_9, window_bounds = array<i64: 1, 8, 32>}]} {
    %c0_i32 = arith.constant 0 : i32
    %0 = arith.cmpi eq, %arg1, %c0_i32 : i32
    %1 = arith.extui %0 : i1 to i32
    %c0_i32_0 = arith.constant 0 : i32
    %2 = arith.cmpi ne, %1, %c0_i32_0 : i32
    scf.if %2 {
      %c0_22 = arith.constant 0 : index
      %c0_23 = arith.constant 0 : index
      %c0_24 = arith.constant 0 : index
      %43 = vector.load %arg2[%c0_22, %c0_23, %c0_24] : memref<1x8x32xbf16, #tpu.memory_space<vmem>>, vector<1x8x32xbf16>
      %44 = vector.shape_cast %43 : vector<1x8x32xbf16> to vector<8x32xbf16>
      %c0_25 = arith.constant 0 : index
      %c0_26 = arith.constant 0 : index
      %c0_27 = arith.constant 0 : index
      %45 = vector.load %arg3[%c0_25, %c0_26, %c0_27] : memref<1x8x32xbf16, #tpu.memory_space<vmem>>, vector<1x8x32xbf16>
      %46 = vector.shape_cast %45 : vector<1x8x32xbf16> to vector<8x32xbf16>
      %c0_28 = arith.constant 0 : index
      %c0_29 = arith.constant 0 : index
      %47 = vector.load %arg7[%c0_28, %c0_29] : memref<32x64xbf16, #tpu.memory_space<vmem>>, vector<32x64xbf16>
      %cst_30 = arith.constant dense<0.000000e+00> : vector<8x64xf32>
      %48 = tpu.matmul %44, %47, %cst_30 {dimension_numbers = #tpu.dot_dimension_numbers<[1], [0], [0], [1], [0, 0, 1, 1], [], []>} : vector<8x32xbf16>, vector<32x64xbf16>, vector<8x64xf32> -> vector<8x64xf32>
      %c0_31 = arith.constant 0 : index
      %c0_32 = arith.constant 0 : index
      %49 = vector.load %arg8[%c0_31, %c0_32] : memref<1x64xf32, #tpu.memory_space<vmem>>, vector<1x64xf32>
      %50 = vector.shape_cast %49 : vector<1x64xf32> to vector<64xf32>
      %51 = vector.shape_cast %50 : vector<64xf32> to vector<1x64xf32>
      %52 = vector.broadcast %51 : vector<1x64xf32> to vector<8x64xf32>
      %53 = arith.addf %48, %52 : vector<8x64xf32>
      %c0_33 = arith.constant 0 : index
      %c0_34 = arith.constant 0 : index
      %54 = vector.load %arg9[%c0_33, %c0_34] : memref<32x32xbf16, #tpu.memory_space<vmem>>, vector<32x32xbf16>
      %cst_35 = arith.constant dense<0.000000e+00> : vector<8x32xf32>
      %55 = tpu.matmul %46, %54, %cst_35 {dimension_numbers = #tpu.dot_dimension_numbers<[1], [0], [0], [1], [0, 0, 1, 1], [], []>} : vector<8x32xbf16>, vector<32x32xbf16>, vector<8x32xf32> -> vector<8x32xf32>
      %c0_36 = arith.constant 0 : index
      %c0_37 = arith.constant 0 : index
      %56 = vector.load %arg10[%c0_36, %c0_37] : memref<1x32xf32, #tpu.memory_space<vmem>>, vector<1x32xf32>
      %57 = vector.shape_cast %56 : vector<1x32xf32> to vector<32xf32>
      %58 = vector.shape_cast %57 : vector<32xf32> to vector<1x32xf32>
      %59 = vector.broadcast %58 : vector<1x32xf32> to vector<8x32xf32>
      %60 = arith.addf %55, %59 : vector<8x32xf32>
      %61 = vector.extract_strided_slice %53 {offsets = [0, 0], sizes = [8, 32], strides = [1, 1]} : vector<8x64xf32> to vector<8x32xf32>
      %62 = vector.shape_cast %61 : vector<8x32xf32> to vector<8x4x8xf32>
      %63 = vector.extract_strided_slice %53 {offsets = [0, 32], sizes = [8, 32], strides = [1, 1]} : vector<8x64xf32> to vector<8x32xf32>
      %64 = vector.shape_cast %63 : vector<8x32xf32> to vector<8x4x8xf32>
      %65 = vector.shape_cast %60 : vector<8x32xf32> to vector<8x4x8xf32>
      %66 = tpu.concatenate %62, %65 in 2 : vector<8x4x8xf32>, vector<8x4x8xf32> -> vector<8x4x16xf32>
      %67 = tpu.transpose %66, [1, 0, 2] : vector<8x4x16xf32> -> vector<4x8x16xf32>
      %68 = arith.truncf %67 : vector<4x8x16xf32> to vector<4x8x16xbf16>
      %c0_38 = arith.constant 0 : index
      %c0_39 = arith.constant 0 : index
      %c0_40 = arith.constant 0 : index
      %69 = vector.load %arg12[%c0_38, %c0_39, %c0_40] : memref<4x8x16xbf16, #tpu.memory_space<vmem>>, vector<4x8x16xbf16>
      tpu.vector_store %arg12[%c0_38, %c0_39, %c0_40], %68 {strides = array<i32>} : memref<4x8x16xbf16, #tpu.memory_space<vmem>>, vector<4x8x16xbf16>,
      %70 = tpu.transpose %64, [1, 0, 2] : vector<8x4x8xf32> -> vector<4x8x8xf32>
      %71 = arith.truncf %70 : vector<4x8x8xf32> to vector<4x8x8xbf16>
      %c0_41 = arith.constant 0 : index
      %c0_42 = arith.constant 0 : index
      %c0_43 = arith.constant 0 : index
      %72 = vector.load %arg13[%c0_41, %c0_42, %c0_43] : memref<4x8x8xbf16, #tpu.memory_space<vmem>>, vector<4x8x8xbf16>
      tpu.vector_store %arg13[%c0_41, %c0_42, %c0_43], %71 {strides = array<i32>} : memref<4x8x8xbf16, #tpu.memory_space<vmem>>, vector<4x8x8xbf16>,
    } else {
    }
    %c8_i32 = arith.constant 8 : i32
    %3 = arith.muli %arg1, %c8_i32 : i32
    %4 = tpu.assume_multiple %3, 8 : i32
    %c0 = arith.constant 0 : index
    %5 = arith.index_cast %4 : i32 to index
    %c0_1 = arith.constant 0 : index
    %6 = vector.load %arg2[%c0, %5, %c0_1] : memref<1x8x32xbf16, #tpu.memory_space<vmem>>, vector<1x8x32xbf16>
    %7 = vector.shape_cast %6 : vector<1x8x32xbf16> to vector<8x32xbf16>
    %c0_2 = arith.constant 0 : index
    %c0_3 = arith.constant 0 : index
    %8 = vector.load %arg5[%c0_2, %c0_3] : memref<32x64xbf16, #tpu.memory_space<vmem>>, vector<32x64xbf16>
    %cst = arith.constant dense<0.000000e+00> : vector<8x64xf32>
    %9 = tpu.matmul %7, %8, %cst {dimension_numbers = #tpu.dot_dimension_numbers<[1], [0], [0], [1], [0, 0, 1, 1], [], []>} : vector<8x32xbf16>, vector<32x64xbf16>, vector<8x64xf32> -> vector<8x64xf32>
    %c0_4 = arith.constant 0 : index
    %c0_5 = arith.constant 0 : index
    %10 = vector.load %arg6[%c0_4, %c0_5] : memref<1x64xf32, #tpu.memory_space<vmem>>, vector<1x64xf32>
    %11 = vector.shape_cast %10 : vector<1x64xf32> to vector<64xf32>
    %12 = vector.shape_cast %11 : vector<64xf32> to vector<1x64xf32>
    %13 = vector.broadcast %12 : vector<1x64xf32> to vector<8x64xf32>
    %14 = arith.addf %9, %13 : vector<8x64xf32>
    %15 = vector.shape_cast %14 : vector<8x64xf32> to vector<8x4x16xf32>
    %16 = tpu.transpose %15, [1, 0, 2] : vector<8x4x16xf32> -> vector<4x8x16xf32>
    %17 = arith.truncf %16 : vector<4x8x16xf32> to vector<4x8x16xbf16>
    %c0_6 = arith.constant 0 : index
    %c0_7 = arith.constant 0 : index
    %c0_8 = arith.constant 0 : index
    %18 = vector.load %arg12[%c0_6, %c0_7, %c0_8] : memref<4x8x16xbf16, #tpu.memory_space<vmem>>, vector<4x8x16xbf16>
    "tpu.trace_start"() <{level = 10 : i32, message = "hqd,hkd->hqk"}> : () -> ()
    %cst_9 = arith.constant dense<0.000000e+00> : vector<4x8x8xf32>
    %19 = tpu.matmul %17, %18, %cst_9 {dimension_numbers = #tpu.dot_dimension_numbers<[2], [2], [1], [1], [0, 0, 0, 1, 1, 1], [0], [0]>} : vector<4x8x16xbf16>, vector<4x8x16xbf16>, vector<4x8x8xf32> -> vector<4x8x8xf32>
    "tpu.trace_stop"() : () -> ()
    %c0_10 = arith.constant 0 : index
    %c0_11 = arith.constant 0 : index
    %c0_12 = arith.constant 0 : index
    %20 = vector.load %arg4[%c0_10, %c0_11, %c0_12] : memref<1x1x8xf32, #tpu.memory_space<vmem>>, vector<1x1x8xf32>
    %21 = vector.shape_cast %20 : vector<1x1x8xf32> to vector<1x8xf32>
    %22 = vector.shape_cast %21 : vector<1x8xf32> to vector<1x1x8xf32>
    %23 = vector.broadcast %22 : vector<1x1x8xf32> to vector<4x8x8xf32>
    %24 = arith.addf %19, %23 : vector<4x8x8xf32>
    %cst_13 = arith.constant dense<0xFF800000> : vector<4x8xf32>
    %25 = vector.multi_reduction <maximumf>, %24, %cst_13 [2] : vector<4x8x8xf32> to vector<4x8xf32>
    %26 = vector.shape_cast %25 : vector<4x8xf32> to vector<4x8x1xf32>
    %27 = vector.broadcast %26 : vector<4x8x1xf32> to vector<4x8x8xf32>
    %28 = arith.subf %24, %27 : vector<4x8x8xf32>
    %29 = math.exp %28 : vector<4x8x8xf32>
    %cst_14 = arith.constant dense<0.000000e+00> : vector<4x8xf32>
    %30 = vector.multi_reduction <add>, %29, %cst_14 [2] : vector<4x8x8xf32> to vector<4x8xf32>
    %31 = vector.shape_cast %30 : vector<4x8xf32> to vector<4x8x1xf32>
    %32 = arith.truncf %29 : vector<4x8x8xf32> to vector<4x8x8xbf16>
    %c0_15 = arith.constant 0 : index
    %c0_16 = arith.constant 0 : index
    %c0_17 = arith.constant 0 : index
    %33 = vector.load %arg13[%c0_15, %c0_16, %c0_17] : memref<4x8x8xbf16, #tpu.memory_space<vmem>>, vector<4x8x8xbf16>
    "tpu.trace_start"() <{level = 10 : i32, message = "hqk,hkd->hqd"}> : () -> ()
    %cst_18 = arith.constant dense<0.000000e+00> : vector<4x8x8xf32>
    %34 = tpu.matmul %32, %33, %cst_18 {dimension_numbers = #tpu.dot_dimension_numbers<[2], [1], [1], [2], [0, 0, 0, 1, 1, 2], [0], [0]>} : vector<4x8x8xbf16>, vector<4x8x8xbf16>, vector<4x8x8xf32> -> vector<4x8x8xf32>
    "tpu.trace_stop"() : () -> ()
    %35 = tpu.reciprocal %31 {approx = true} : vector<4x8x1xf32> -> vector<4x8x1xf32>
    %36 = vector.broadcast %35 : vector<4x8x1xf32> to vector<4x8x8xf32>
    %37 = arith.mulf %34, %36 : vector<4x8x8xf32>
    %38 = tpu.transpose %37, [1, 0, 2] : vector<4x8x8xf32> -> vector<8x4x8xf32>
    %39 = vector.shape_cast %38 : vector<8x4x8xf32> to vector<8x32xf32>
    %c0_19 = arith.constant 0 : index
    %c0_20 = arith.constant 0 : index
    %c0_21 = arith.constant 0 : index
    %40 = vector.load %arg11[%c0_19, %c0_20, %c0_21] : memref<1x8x32xf32, #tpu.memory_space<vmem>>, vector<1x8x32xf32>
    %41 = vector.shape_cast %40 : vector<1x8x32xf32> to vector<8x32xf32>
    %42 = vector.shape_cast %39 : vector<8x32xf32> to vector<1x8x32xf32>
    tpu.vector_store %arg11[%c0_19, %c0_20, %c0_21], %42 {strides = array<i32>} : memref<1x8x32xf32, #tpu.memory_space<vmem>>, vector<1x8x32xf32>,
    return
  }
  func.func @transform_0(%arg0: i32, %arg1: i32) -> (i32, i32, i32) {
    %c0_i32 = arith.constant 0 : i32
    %c0_i32_0 = arith.constant 0 : i32
    %c0_i32_1 = arith.constant 0 : i32
    return %arg0, %c0_i32, %c0_i32_0 : i32, i32, i32
  }
  func.func @transform_1(%arg0: i32, %arg1: i32) -> (i32, i32, i32) {
    %c0_i32 = arith.constant 0 : i32
    %c0_i32_0 = arith.constant 0 : i32
    %c0_i32_1 = arith.constant 0 : i32
    return %arg0, %c0_i32, %c0_i32_0 : i32, i32, i32
  }
  func.func @transform_2(%arg0: i32, %arg1: i32) -> (i32, i32, i32) {
    %c0_i32 = arith.constant 0 : i32
    %c0_i32_0 = arith.constant 0 : i32
    %c0_i32_1 = arith.constant 0 : i32
    return %arg0, %c0_i32, %c0_i32_0 : i32, i32, i32
  }
  func.func @transform_3(%arg0: i32, %arg1: i32) -> (i32, i32) {
    %c0_i32 = arith.constant 0 : i32
    %c0_i32_0 = arith.constant 0 : i32
    %c0_i32_1 = arith.constant 0 : i32
    return %c0_i32, %c0_i32_0 : i32, i32
  }
  func.func @transform_4(%arg0: i32, %arg1: i32) -> (i32, i32) {
    %c0_i32 = arith.constant 0 : i32
    %c0_i32_0 = arith.constant 0 : i32
    %c0_i32_1 = arith.constant 0 : i32
    return %c0_i32, %c0_i32_0 : i32, i32
  }
  func.func @transform_5(%arg0: i32, %arg1: i32) -> (i32, i32) {
    %c0_i32 = arith.constant 0 : i32
    %c0_i32_0 = arith.constant 0 : i32
    %c0_i32_1 = arith.constant 0 : i32
    return %c0_i32, %c0_i32_0 : i32, i32
  }
  func.func @transform_6(%arg0: i32, %arg1: i32) -> (i32, i32) {
    %c0_i32 = arith.constant 0 : i32
    %c0_i32_0 = arith.constant 0 : i32
    %c0_i32_1 = arith.constant 0 : i32
    return %c0_i32, %c0_i32_0 : i32, i32
  }
  func.func @transform_7(%arg0: i32, %arg1: i32) -> (i32, i32) {
    %c0_i32 = arith.constant 0 : i32
    %c0_i32_0 = arith.constant 0 : i32
    %c0_i32_1 = arith.constant 0 : i32
    return %c0_i32, %c0_i32_0 : i32, i32
  }
  func.func @transform_8(%arg0: i32, %arg1: i32) -> (i32, i32) {
    %c0_i32 = arith.constant 0 : i32
    %c0_i32_0 = arith.constant 0 : i32
    %c0_i32_1 = arith.constant 0 : i32
    return %c0_i32, %c0_i32_0 : i32, i32
  }
  func.func @transform_9(%arg0: i32, %arg1: i32) -> (i32, i32, i32) {
    %c0_i32 = arith.constant 0 : i32
    %c0_i32_0 = arith.constant 0 : i32
    return %arg0, %arg1, %c0_i32 : i32, i32, i32
  }
}

module attributes {stable_mosaic.version = 11 : i64} {
  func.func @_self_attn_kernel(%arg0: i32, %arg1: i32, %arg2: memref<1x8x32xbf16, #tpu.memory_space<vmem>>, %arg3: memref<1x8x32xbf16, #tpu.memory_space<vmem>>, %arg4: memref<1x1x8xf32, #tpu.memory_space<vmem>>, %arg5: memref<32x64xbf16, #tpu.memory_space<vmem>>, %arg6: memref<1x64xf32, #tpu.memory_space<vmem>>, %arg7: memref<32x64xbf16, #tpu.memory_space<vmem>>, %arg8: memref<1x64xf32, #tpu.memory_space<vmem>>, %arg9: memref<32x32xbf16, #tpu.memory_space<vmem>>, %arg10: memref<1x32xf32, #tpu.memory_space<vmem>>, %arg11: memref<1x8x32xf32, #tpu.memory_space<vmem>>, %arg12: memref<4x8x16xbf16, #tpu.memory_space<vmem>>, %arg13: memref<4x8x8xbf16, #tpu.memory_space<vmem>>) attributes {dimension_semantics = [#tpu.dimension_semantics<parallel>, #tpu.dimension_semantics<arbitrary>], iteration_bounds = array<i64: 2, 1>, scalar_prefetch = 0 : i64, scratch_operands = 2 : i64, tpu.core_type = #tpu.core_type<tc>, window_params = [{transform_indices = @transform_0, window_bounds = array<i64: 1, 8, 32>}, {transform_indices = @transform_1, window_bounds = array<i64: 1, 8, 32>}, {transform_indices = @transform_2, window_bounds = array<i64: 1, 1, 8>}, {pipeline_mode = #tpu.pipeline_mode<synchronous>, transform_indices = @transform_3, window_bounds = array<i64: 32, 64>}, {pipeline_mode = #tpu.pipeline_mode<synchronous>, transform_indices = @transform_4, window_bounds = array<i64: 1, 64>}, {pipeline_mode = #tpu.pipeline_mode<synchronous>, transform_indices = @transform_5, window_bounds = array<i64: 32, 64>}, {pipeline_mode = #tpu.pipeline_mode<synchronous>, transform_indices = @transform_6, window_bounds = array<i64: 1, 64>}, {pipeline_mode = #tpu.pipeline_mode<synchronous>, transform_indices = @transform_7, window_bounds = array<i64: 32, 32>}, {pipeline_mode = #tpu.pipeline_mode<synchronous>, transform_indices = @transform_8, window_bounds = array<i64: 1, 32>}, {transform_indices = @transform_9, window_bounds = array<i64: 1, 8, 32>}]} {
    %c0_i32 = arith.constant 0 : i32
    %0 = arith.cmpi eq, %arg1, %c0_i32 : i32
    %1 = arith.extui %0 : i1 to i32
    %c0_i32_0 = arith.constant 0 : i32
    %2 = arith.cmpi ne, %1, %c0_i32_0 : i32
    scf.if %2 {
      %c0_22 = arith.constant 0 : index
      %c0_23 = arith.constant 0 : index
      %c0_24 = arith.constant 0 : index
      %43 = vector.load %arg2[%c0_22, %c0_23, %c0_24] : memref<1x8x32xbf16, #tpu.memory_space<vmem>>, vector<1x8x32xbf16>
      %44 = vector.shape_cast %43 : vector<1x8x32xbf16> to vector<8x32xbf16>
      %c0_25 = arith.constant 0 : index
      %c0_26 = arith.constant 0 : index
      %c0_27 = arith.constant 0 : index
      %45 = vector.load %arg3[%c0_25, %c0_26, %c0_27] : memref<1x8x32xbf16, #tpu.memory_space<vmem>>, vector<1x8x32xbf16>
      %46 = vector.shape_cast %45 : vector<1x8x32xbf16> to vector<8x32xbf16>
      %c0_28 = arith.constant 0 : index
      %c0_29 = arith.constant 0 : index
      %47 = vector.load %arg7[%c0_28, %c0_29] : memref<32x64xbf16, #tpu.memory_space<vmem>>, vector<32x64xbf16>
      %cst_30 = arith.constant dense<0.000000e+00> : vector<8x64xf32>
      %48 = tpu.matmul %44, %47, %cst_30 {dimension_numbers = #tpu.dot_dimension_numbers<[1], [0], [0], [1], [0, 0, 1, 1], [], []>} : vector<8x32xbf16>, vector<32x64xbf16>, vector<8x64xf32> -> vector<8x64xf32>
      %c0_31 = arith.constant 0 : index
      %c0_32 = arith.constant 0 : index
      %49 = vector.load %arg8[%c0_31, %c0_32] : memref<1x64xf32, #tpu.memory_space<vmem>>, vector<1x64xf32>
      %50 = vector.shape_cast %49 : vector<1x64xf32> to vector<64xf32>
      %51 = vector.shape_cast %50 : vector<64xf32> to vector<1x64xf32>
      %52 = vector.broadcast %51 : vector<1x64xf32> to vector<8x64xf32>
      %53 = arith.addf %48, %52 : vector<8x64xf32>
      %c0_33 = arith.constant 0 : index
      %c0_34 = arith.constant 0 : index
      %54 = vector.load %arg9[%c0_33, %c0_34] : memref<32x32xbf16, #tpu.memory_space<vmem>>, vector<32x32xbf16>
      %cst_35 = arith.constant dense<0.000000e+00> : vector<8x32xf32>
      %55 = tpu.matmul %46, %54, %cst_35 {dimension_numbers = #tpu.dot_dimension_numbers<[1], [0], [0], [1], [0, 0, 1, 1], [], []>} : vector<8x32xbf16>, vector<32x32xbf16>, vector<8x32xf32> -> vector<8x32xf32>
      %c0_36 = arith.constant 0 : index
      %c0_37 = arith.constant 0 : index
      %56 = vector.load %arg10[%c0_36, %c0_37] : memref<1x32xf32, #tpu.memory_space<vmem>>, vector<1x32xf32>
      %57 = vector.shape_cast %56 : vector<1x32xf32> to vector<32xf32>
      %58 = vector.shape_cast %57 : vector<32xf32> to vector<1x32xf32>
      %59 = vector.broadcast %58 : vector<1x32xf32> to vector<8x32xf32>
      %60 = arith.addf %55, %59 : vector<8x32xf32>
      %61 = vector.extract_strided_slice %53 {offsets = [0, 0], sizes = [8, 32], strides = [1, 1]} : vector<8x64xf32> to vector<8x32xf32>
      %62 = vector.shape_cast %61 : vector<8x32xf32> to vector<8x4x8xf32>
      %63 = vector.extract_strided_slice %53 {offsets = [0, 32], sizes = [8, 32], strides = [1, 1]} : vector<8x64xf32> to vector<8x32xf32>
      %64 = vector.shape_cast %63 : vector<8x32xf32> to vector<8x4x8xf32>
      %65 = vector.shape_cast %60 : vector<8x32xf32> to vector<8x4x8xf32>
      %66 = tpu.concatenate %62, %65 in 2 : vector<8x4x8xf32>, vector<8x4x8xf32> -> vector<8x4x16xf32>
      %67 = tpu.transpose %66, [1, 0, 2] : vector<8x4x16xf32> -> vector<4x8x16xf32>
      %68 = arith.truncf %67 : vector<4x8x16xf32> to vector<4x8x16xbf16>
      %c0_38 = arith.constant 0 : index
      %c0_39 = arith.constant 0 : index
      %c0_40 = arith.constant 0 : index
      %69 = vector.load %arg12[%c0_38, %c0_39, %c0_40] : memref<4x8x16xbf16, #tpu.memory_space<vmem>>, vector<4x8x16xbf16>
      tpu.vector_store %arg12[%c0_38, %c0_39, %c0_40], %68 {strides = array<i32>} : memref<4x8x16xbf16, #tpu.memory_space<vmem>>, vector<4x8x16xbf16>,
      %70 = tpu.transpose %64, [1, 0, 2] : vector<8x4x8xf32> -> vector<4x8x8xf32>
      %71 = arith.truncf %70 : vector<4x8x8xf32> to vector<4x8x8xbf16>
      %c0_41 = arith.constant 0 : index
      %c0_42 = arith.constant 0 : index
      %c0_43 = arith.constant 0 : index
      %72 = vector.load %arg13[%c0_41, %c0_42, %c0_43] : memref<4x8x8xbf16, #tpu.memory_space<vmem>>, vector<4x8x8xbf16>
      tpu.vector_store %arg13[%c0_41, %c0_42, %c0_43], %71 {strides = array<i32>} : memref<4x8x8xbf16, #tpu.memory_space<vmem>>, vector<4x8x8xbf16>,
    } else {
    }
    %c8_i32 = arith.constant 8 : i32
    %3 = arith.muli %arg1, %c8_i32 : i32
    %4 = tpu.assume_multiple %3, 8 : i32
    %c0 = arith.constant 0 : index
    %5 = arith.index_cast %4 : i32 to index
    %c0_1 = arith.constant 0 : index
    %6 = vector.load %arg2[%c0, %5, %c0_1] : memref<1x8x32xbf16, #tpu.memory_space<vmem>>, vector<1x8x32xbf16>
    %7 = vector.shape_cast %6 : vector<1x8x32xbf16> to vector<8x32xbf16>
    %c0_2 = arith.constant 0 : index
    %c0_3 = arith.constant 0 : index
    %8 = vector.load %arg5[%c0_2, %c0_3] : memref<32x64xbf16, #tpu.memory_space<vmem>>, vector<32x64xbf16>
    %cst = arith.constant dense<0.000000e+00> : vector<8x64xf32>
    %9 = tpu.matmul %7, %8, %cst {dimension_numbers = #tpu.dot_dimension_numbers<[1], [0], [0], [1], [0, 0, 1, 1], [], []>} : vector<8x32xbf16>, vector<32x64xbf16>, vector<8x64xf32> -> vector<8x64xf32>
    %c0_4 = arith.constant 0 : index
    %c0_5 = arith.constant 0 : index
    %10 = vector.load %arg6[%c0_4, %c0_5] : memref<1x64xf32, #tpu.memory_space<vmem>>, vector<1x64xf32>
    %11 = vector.shape_cast %10 : vector<1x64xf32> to vector<64xf32>
    %12 = vector.shape_cast %11 : vector<64xf32> to vector<1x64xf32>
    %13 = vector.broadcast %12 : vector<1x64xf32> to vector<8x64xf32>
    %14 = arith.addf %9, %13 : vector<8x64xf32>
    %15 = vector.shape_cast %14 : vector<8x64xf32> to vector<8x4x16xf32>
    %16 = tpu.transpose %15, [1, 0, 2] : vector<8x4x16xf32> -> vector<4x8x16xf32>
    %17 = arith.truncf %16 : vector<4x8x16xf32> to vector<4x8x16xbf16>
    %c0_6 = arith.constant 0 : index
    %c0_7 = arith.constant 0 : index
    %c0_8 = arith.constant 0 : index
    %18 = vector.load %arg12[%c0_6, %c0_7, %c0_8] : memref<4x8x16xbf16, #tpu.memory_space<vmem>>, vector<4x8x16xbf16>
    "tpu.trace_start"() <{level = 10 : i32, message = "hqd,hkd->hqk"}> : () -> ()
    %cst_9 = arith.constant dense<0.000000e+00> : vector<4x8x8xf32>
    %19 = tpu.matmul %17, %18, %cst_9 {dimension_numbers = #tpu.dot_dimension_numbers<[2], [2], [1], [1], [0, 0, 0, 1, 1, 1], [0], [0]>} : vector<4x8x16xbf16>, vector<4x8x16xbf16>, vector<4x8x8xf32> -> vector<4x8x8xf32>
    "tpu.trace_stop"() : () -> ()
    %c0_10 = arith.constant 0 : index
    %c0_11 = arith.constant 0 : index
    %c0_12 = arith.constant 0 : index
    %20 = vector.load %arg4[%c0_10, %c0_11, %c0_12] : memref<1x1x8xf32, #tpu.memory_space<vmem>>, vector<1x1x8xf32>
    %21 = vector.shape_cast %20 : vector<1x1x8xf32> to vector<1x8xf32>
    %22 = vector.shape_cast %21 : vector<1x8xf32> to vector<1x1x8xf32>
    %23 = vector.broadcast %22 : vector<1x1x8xf32> to vector<4x8x8xf32>
    %24 = arith.addf %19, %23 : vector<4x8x8xf32>
    %cst_13 = arith.constant dense<0xFF800000> : vector<4x8xf32>
    %25 = vector.multi_reduction <maximumf>, %24, %cst_13 [2] : vector<4x8x8xf32> to vector<4x8xf32>
    %26 = vector.shape_cast %25 : vector<4x8xf32> to vector<4x8x1xf32>
    %27 = vector.broadcast %26 : vector<4x8x1xf32> to vector<4x8x8xf32>
    %28 = arith.subf %24, %27 : vector<4x8x8xf32>
    %29 = math.exp %28 : vector<4x8x8xf32>
    %cst_14 = arith.constant dense<0.000000e+00> : vector<4x8xf32>
    %30 = vector.multi_reduction <add>, %29, %cst_14 [2] : vector<4x8x8xf32> to vector<4x8xf32>
    %31 = vector.shape_cast %30 : vector<4x8xf32> to vector<4x8x1xf32>
    %32 = arith.truncf %29 : vector<4x8x8xf32> to vector<4x8x8xbf16>
    %c0_15 = arith.constant 0 : index
    %c0_16 = arith.constant 0 : index
    %c0_17 = arith.constant 0 : index
    %33 = vector.load %arg13[%c0_15, %c0_16, %c0_17] : memref<4x8x8xbf16, #tpu.memory_space<vmem>>, vector<4x8x8xbf16>
    "tpu.trace_start"() <{level = 10 : i32, message = "hqk,hkd->hqd"}> : () -> ()
    %cst_18 = arith.constant dense<0.000000e+00> : vector<4x8x8xf32>
    %34 = tpu.matmul %32, %33, %cst_18 {dimension_numbers = #tpu.dot_dimension_numbers<[2], [1], [1], [2], [0, 0, 0, 1, 1, 2], [0], [0]>} : vector<4x8x8xbf16>, vector<4x8x8xbf16>, vector<4x8x8xf32> -> vector<4x8x8xf32>
    "tpu.trace_stop"() : () -> ()
    %35 = tpu.reciprocal %31 {approx = true} : vector<4x8x1xf32> -> vector<4x8x1xf32>
    %36 = vector.broadcast %35 : vector<4x8x1xf32> to vector<4x8x8xf32>
    %37 = arith.mulf %34, %36 : vector<4x8x8xf32>
    %38 = tpu.transpose %37, [1, 0, 2] : vector<4x8x8xf32> -> vector<8x4x8xf32>
    %39 = vector.shape_cast %38 : vector<8x4x8xf32> to vector<8x32xf32>
    %c0_19 = arith.constant 0 : index
    %c0_20 = arith.constant 0 : index
    %c0_21 = arith.constant 0 : index
    %40 = vector.load %arg11[%c0_19, %c0_20, %c0_21] : memref<1x8x32xf32, #tpu.memory_space<vmem>>, vector<1x8x32xf32>
    %41 = vector.shape_cast %40 : vector<1x8x32xf32> to vector<8x32xf32>
    %42 = vector.shape_cast %39 : vector<8x32xf32> to vector<1x8x32xf32>
    tpu.vector_store %arg11[%c0_19, %c0_20, %c0_21], %42 {strides = array<i32>} : memref<1x8x32xf32, #tpu.memory_space<vmem>>, vector<1x8x32xf32>,
    return
  }
  func.func @transform_0(%arg0: i32, %arg1: i32) -> (i32, i32, i32) {
    %c0_i32 = arith.constant 0 : i32
    %c0_i32_0 = arith.constant 0 : i32
    %c0_i32_1 = arith.constant 0 : i32
    return %arg0, %c0_i32, %c0_i32_0 : i32, i32, i32
  }
  func.func @transform_1(%arg0: i32, %arg1: i32) -> (i32, i32, i32) {
    %c0_i32 = arith.constant 0 : i32
    %c0_i32_0 = arith.constant 0 : i32
    %c0_i32_1 = arith.constant 0 : i32
    return %arg0, %c0_i32, %c0_i32_0 : i32, i32, i32
  }
  func.func @transform_2(%arg0: i32, %arg1: i32) -> (i32, i32, i32) {
    %c0_i32 = arith.constant 0 : i32
    %c0_i32_0 = arith.constant 0 : i32
    %c0_i32_1 = arith.constant 0 : i32
    return %arg0, %c0_i32, %c0_i32_0 : i32, i32, i32
  }
  func.func @transform_3(%arg0: i32, %arg1: i32) -> (i32, i32) {
    %c0_i32 = arith.constant 0 : i32
    %c0_i32_0 = arith.constant 0 : i32
    %c0_i32_1 = arith.constant 0 : i32
    return %c0_i32, %c0_i32_0 : i32, i32
  }
  func.func @transform_4(%arg0: i32, %arg1: i32) -> (i32, i32) {
    %c0_i32 = arith.constant 0 : i32
    %c0_i32_0 = arith.constant 0 : i32
    %c0_i32_1 = arith.constant 0 : i32
    return %c0_i32, %c0_i32_0 : i32, i32
  }
  func.func @transform_5(%arg0: i32, %arg1: i32) -> (i32, i32) {
    %c0_i32 = arith.constant 0 : i32
    %c0_i32_0 = arith.constant 0 : i32
    %c0_i32_1 = arith.constant 0 : i32
    return %c0_i32, %c0_i32_0 : i32, i32
  }
  func.func @transform_6(%arg0: i32, %arg1: i32) -> (i32, i32) {
    %c0_i32 = arith.constant 0 : i32
    %c0_i32_0 = arith.constant 0 : i32
    %c0_i32_1 = arith.constant 0 : i32
    return %c0_i32, %c0_i32_0 : i32, i32
  }
  func.func @transform_7(%arg0: i32, %arg1: i32) -> (i32, i32) {
    %c0_i32 = arith.constant 0 : i32
    %c0_i32_0 = arith.constant 0 : i32
    %c0_i32_1 = arith.constant 0 : i32
    return %c0_i32, %c0_i32_0 : i32, i32
  }
  func.func @transform_8(%arg0: i32, %arg1: i32) -> (i32, i32) {
    %c0_i32 = arith.constant 0 : i32
    %c0_i32_0 = arith.constant 0 : i32
    %c0_i32_1 = arith.constant 0 : i32
    return %c0_i32, %c0_i32_0 : i32, i32
  }
  func.func @transform_9(%arg0: i32, %arg1: i32) -> (i32, i32, i32) {
    %c0_i32 = arith.constant 0 : i32
    %c0_i32_0 = arith.constant 0 : i32
    return %arg0, %arg1, %c0_i32 : i32, i32, i32
  }
}

</mosaic_0001>

<llo_original>
// kernel: tpu_custom_call.1
$region0: #{tpu_custom_call.1}
  #allocation0 [shape = 'u32[]', space=smem, size = 0x4, offset = 0x4, fixed_abs, tag = 'smem constant byte address 0x4 - core index']
  #allocation1 [shape = 'u32[72,128]{1,0:T(1,128)}', space=vmem, size = 0x9000, scoped, tag = 'internal scratch']
  #allocation2 [shape = 'bf16[4,8,16]{2,1,0:T(8,128)(2,1)}', space=vmem, size = 0x2000, scoped, tag = 'scratch operand']
  #allocation3 [shape = 'bf16[4,8,8]{2,1,0:T(8,128)(2,1)}', space=vmem, size = 0x2000, scoped, tag = 'scratch operand']
  %s0 = inlined_call_operand.hbm [shape: bf16[2,8,32], index: 0, kind: input, shape index: {}]
  %s1 = inlined_call_operand.hbm [shape: bf16[2,8,32], index: 1, kind: input, shape index: {}]
  %s2 = inlined_call_operand.hbm [shape: f32[2,1,8], index: 2, kind: input, shape index: {}]
  %s3 = inlined_call_operand.hbm [shape: bf16[32,64], index: 3, kind: input, shape index: {}]
  %s4 = inlined_call_operand.vmem [shape: f32[1,64], index: 4, kind: input, shape index: {}]
  %s5 = inlined_call_operand.hbm [shape: bf16[32,64], index: 5, kind: input, shape index: {}]
  %s6 = inlined_call_operand.vmem [shape: f32[1,64], index: 6, kind: input, shape index: {}]
  %s7 = inlined_call_operand.hbm [shape: bf16[32,32], index: 7, kind: input, shape index: {}]
  %s8 = inlined_call_operand.vmem [shape: f32[1,32], index: 8, kind: input, shape index: {}]
  %s9 = inlined_call_operand.hbm [shape: f32[2,8,32], index: 9, kind: output, shape index: {}]
  %s10 = sld [smem:[#allocation0]]
  $region97: #{tpu_custom_call.1} parent=0
    _
  %s12 = ssub.s32 1, %s10
  %s13 = scalar_select 0, %s12, %s10
  $region1: #{tpu_custom_call.1} parent=0
    #allocation4 [shape = 'u8[4096]{0}', space=vmem, size = 0x1000, scoped, tag = 'input window, operand 0']
    #allocation5 [shape = 's32[2]{0}', space=sflag, size = 0x8, scoped, tag = 'scoped memory for tpu_custom_call.1']
    #allocation6 [shape = 's32[2]{0}', space=sflag, size = 0x8, scoped, tag = 'scoped memory for tpu_custom_call.1']
    #allocation7 [shape = 'u8[4096]{0}', space=vmem, size = 0x1000, scoped, tag = 'input window, operand 1']
    #allocation8 [shape = 's32[2]{0}', space=sflag, size = 0x8, scoped, tag = 'scoped memory for tpu_custom_call.1']
    #allocation9 [shape = 'u8[1024]{0}', space=vmem, size = 0x400, scoped, tag = 'input window, operand 2']
    #allocation10 [shape = 'u8[8192]{0}', space=vmem, size = 0x2000, scoped, tag = 'input window, operand 3, single buffered']
    #allocation11 [shape = 's32[1]{0}', space=sflag, size = 0x4, scoped, tag = 'scoped memory for tpu_custom_call.1']
    #allocation12 [shape = 'u8[8192]{0}', space=vmem, size = 0x2000, scoped, tag = 'input window, operand 5, single buffered']
    #allocation13 [shape = 'u8[8192]{0}', space=vmem, size = 0x2000, scoped, tag = 'input window, operand 7, single buffered']
    #allocation14 [shape = 's32[1]{0}', space=sflag, size = 0x4, scoped, tag = 'scoped memory for tpu_custom_call.1']
    #allocation15 [shape = 'u8[8192]{0}', space=vmem, size = 0x2000, scoped, tag = 'output window, operand 0']
    %14 = vsyncpa [#allocation5], 0
    %s15 = scalar_lea.sflag [#allocation5], 1
    %16 = vsyncpa %s15, 0
    %17 = vsyncpa [#allocation8], 0
    %s18 = scalar_lea.sflag [#allocation8], 1
    %19 = vsyncpa %s18, 0
    %20 = vsyncpa [#allocation11], 0
    %21 = vsyncpa [#allocation14], 0
    %22 = vsyncpa [#allocation6], 0
    %s23 = scalar_lea.sflag [#allocation6], 1
    %24 = vsyncpa %s23, 0
    loop: start=0, step=1, limit=4
    $region2: #{tpu_custom_call.1} parent=1 // loop_pre_header
      _
    $region3: #{tpu_custom_call.1} parent=1 // loop_header
      %s26 = sphi 0, %s30
      %p27 = scmp.ge.s32.totalorder %s26, 4
      %s33 = sphi 0, %s45
      %s34 = sphi 0, %s41
      %s35 = sphi 0, %s33
      %s36 = sphi 0, %s34
      %s37 = sphi 0, %s35
      %s38 = sphi 0, %s36
      %s48 = sphi 0, %s50
      %s51 = sphi 0, %s48
      %s52 = sphi 0, %s51
      %s68 = sphi 0, %s52
      %s74 = sphi 0, %s76
      %s77 = sphi 0, %s74
      %s78 = sphi 0, %s77
      %s94 = sphi 0, %s78
      %s100 = sphi 0, %s102
      %s103 = sphi 0, %s100
      %s104 = sphi 0, %s103
      %s120 = sphi 0, %s104
      %s124 = sphi 0, %s124
      %s126 = sphi 0, %s124
      %s127 = sphi 0, %s126
      %s141 = sphi 0, %s127
      %s145 = sphi 0, %s145
      %s147 = sphi 0, %s145
      %s148 = sphi 0, %s147
      %s162 = sphi 0, %s148
      %s166 = sphi 0, %s166
      %s168 = sphi 0, %s166
      %s169 = sphi 0, %s168
      %s183 = sphi 0, %s169
      %s187 = sphi 0, %s187
      %s189 = sphi 0, %s187
      %s190 = sphi 0, %s189
      %s204 = sphi 0, %s190
      %s208 = sphi 0, %s208
      %s210 = sphi 0, %s208
      %s211 = sphi 0, %s210
      %s225 = sphi 0, %s211
      %s229 = sphi 0, %s229
      %s231 = sphi 0, %s229
      %s232 = sphi 0, %s231
      %s246 = sphi 0, %s232
      %s254 = sphi 0, %s256
      %s257 = sphi 0, %s254
      %s258 = sphi 0, %s257
      %s274 = sphi 0, %s258
    $region4: #{tpu_custom_call.1} parent=1 // loop_header_branch
      %29 = sbr.rel (%p27) target = $region8
    $region5: #{tpu_custom_call.1} parent=1 // loop_body
      %s31 = ssub.s32 %s26, 1
      %s32 = ssub.s32 %s26, 2
      %s39 = sadd.s32 1, %s34
      %p40 = scmp.ge.s32.totalorder %s39, 1
      %s41 = scalar_select %p40, 0, %s39
      %s42 = sadd.s32 1, %s33
      %s43 = scalar_select %p40, %s42, %s33
      %p44 = scmp.ge.s32.totalorder %s43, 2
      %s45 = scalar_select %p44, 0, %s43
      %s46 = ssub.s32 %s33, %s45
      %p47 = scmp.eq.s32.totalorder %s46, 0
      %s49 = sadd.s32 %s48, 1
      %s50 = scalar_select %p47, %s48, %s49
      %p53 = pneg %p47
      %p54 = scmp.eq.s32.totalorder %s26, 1
      %p55 = por %p53, %p54
      %p56 = scmp.ne.s32.totalorder %s48, %s51
      %p57 = scmp.eq.s32.totalorder %s26, 0
      %p58 = por %p56, %p57
      %p59 = scmp.ne.s32.totalorder %s48, %s51
      %p60 = scmp.eq.s32.totalorder %s31, 1
      %p61 = por %p59, %p60
      %p62 = scmp.ne.s32.totalorder %s51, %s52
      %p63 = scmp.eq.s32.totalorder %s31, 0
      %p64 = por %p62, %p63
      %p65 = scmp.ne.s32.totalorder %s51, %s52
      %p66 = scmp.eq.s32.totalorder %s32, 1
      %p67 = por %p65, %p66
      %p69 = scmp.ne.s32.totalorder %s52, %s68
      %p70 = scmp.eq.s32.totalorder %s32, 0
      %p71 = por %p69, %p70
      %s72 = ssub.s32 %s33, %s45
      %p73 = scmp.eq.s32.totalorder %s72, 0
      %s75 = sadd.s32 %s74, 1
      %s76 = scalar_select %p73, %s74, %s75
      %p79 = pneg %p73
      %p80 = scmp.eq.s32.totalorder %s26, 1
      %p81 = por %p79, %p80
      %p82 = scmp.ne.s32.totalorder %s74, %s77
      %p83 = scmp.eq.s32.totalorder %s26, 0
      %p84 = por %p82, %p83
      %p85 = scmp.ne.s32.totalorder %s74, %s77
      %p86 = scmp.eq.s32.totalorder %s31, 1
      %p87 = por %p85, %p86
      %p88 = scmp.ne.s32.totalorder %s77, %s78
      %p89 = scmp.eq.s32.totalorder %s31, 0
      %p90 = por %p88, %p89
      %p91 = scmp.ne.s32.totalorder %s77, %s78
      %p92 = scmp.eq.s32.totalorder %s32, 1
      %p93 = por %p91, %p92
      %p95 = scmp.ne.s32.totalorder %s78, %s94
      %p96 = scmp.eq.s32.totalorder %s32, 0
      %p97 = por %p95, %p96
      %s98 = ssub.s32 %s33, %s45
      %p99 = scmp.eq.s32.totalorder %s98, 0
      %s101 = sadd.s32 %s100, 1
      %s102 = scalar_select %p99, %s100, %s101
      %p105 = pneg %p99
      %p106 = scmp.eq.s32.totalorder %s26, 1
      %p107 = por %p105, %p106
      %p108 = scmp.ne.s32.totalorder %s100, %s103
      %p109 = scmp.eq.s32.totalorder %s26, 0
      %p110 = por %p108, %p109
      %p111 = scmp.ne.s32.totalorder %s100, %s103
      %p112 = scmp.eq.s32.totalorder %s31, 1
      %p113 = por %p111, %p112
      %p114 = scmp.ne.s32.totalorder %s103, %s104
      %p115 = scmp.eq.s32.totalorder %s31, 0
      %p116 = por %p114, %p115
      %p117 = scmp.ne.s32.totalorder %s103, %s104
      %p118 = scmp.eq.s32.totalorder %s32, 1
      %p119 = por %p117, %p118
      %p121 = scmp.ne.s32.totalorder %s104, %s120
      %p122 = scmp.eq.s32.totalorder %s32, 0
      %p123 = por %p121, %p122
      %s125 = sadd.s32 %s124, 1
      %p128 = scmp.eq.s32.totalorder %s26, 1
      %p129 = scmp.ne.s32.totalorder %s124, %s126
      %p130 = scmp.eq.s32.totalorder %s26, 0
      %p131 = por %p129, %p130
      %p132 = scmp.ne.s32.totalorder %s124, %s126
      %p133 = scmp.eq.s32.totalorder %s31, 1
      %p134 = por %p132, %p133
      %p135 = scmp.ne.s32.totalorder %s126, %s127
      %p136 = scmp.eq.s32.totalorder %s31, 0
      %p137 = por %p135, %p136
      %p138 = scmp.ne.s32.totalorder %s126, %s127
      %p139 = scmp.eq.s32.totalorder %s32, 1
      %p140 = por %p138, %p139
      %p142 = scmp.ne.s32.totalorder %s127, %s141
      %p143 = scmp.eq.s32.totalorder %s32, 0
      %p144 = por %p142, %p143
      %s146 = sadd.s32 %s145, 1
      %p149 = scmp.eq.s32.totalorder %s26, 1
      %p150 = scmp.ne.s32.totalorder %s145, %s147
      %p151 = scmp.eq.s32.totalorder %s26, 0
      %p152 = por %p150, %p151
      %p153 = scmp.ne.s32.totalorder %s145, %s147
      %p154 = scmp.eq.s32.totalorder %s31, 1
      %p155 = por %p153, %p154
      %p156 = scmp.ne.s32.totalorder %s147, %s148
      %p157 = scmp.eq.s32.totalorder %s31, 0
      %p158 = por %p156, %p157
      %p159 = scmp.ne.s32.totalorder %s147, %s148
      %p160 = scmp.eq.s32.totalorder %s32, 1
      %p161 = por %p159, %p160
      %p163 = scmp.ne.s32.totalorder %s148, %s162
      %p164 = scmp.eq.s32.totalorder %s32, 0
      %p165 = por %p163, %p164
      %s167 = sadd.s32 %s166, 1
      %p170 = scmp.eq.s32.totalorder %s26, 1
      %p171 = scmp.ne.s32.totalorder %s166, %s168
      %p172 = scmp.eq.s32.totalorder %s26, 0
      %p173 = por %p171, %p172
      %p174 = scmp.ne.s32.totalorder %s166, %s168
      %p175 = scmp.eq.s32.totalorder %s31, 1
      %p176 = por %p174, %p175
      %p177 = scmp.ne.s32.totalorder %s168, %s169
      %p178 = scmp.eq.s32.totalorder %s31, 0
      %p179 = por %p177, %p178
      %p180 = scmp.ne.s32.totalorder %s168, %s169
      %p181 = scmp.eq.s32.totalorder %s32, 1
      %p182 = por %p180, %p181
      %p184 = scmp.ne.s32.totalorder %s169, %s183
      %p185 = scmp.eq.s32.totalorder %s32, 0
      %p186 = por %p184, %p185
      %s188 = sadd.s32 %s187, 1
      %p191 = scmp.eq.s32.totalorder %s26, 1
      %p192 = scmp.ne.s32.totalorder %s187, %s189
      %p193 = scmp.eq.s32.totalorder %s26, 0
      %p194 = por %p192, %p193
      %p195 = scmp.ne.s32.totalorder %s187, %s189
      %p196 = scmp.eq.s32.totalorder %s31, 1
      %p197 = por %p195, %p196
      %p198 = scmp.ne.s32.totalorder %s189, %s190
      %p199 = scmp.eq.s32.totalorder %s31, 0
      %p200 = por %p198, %p199
      %p201 = scmp.ne.s32.totalorder %s189, %s190
      %p202 = scmp.eq.s32.totalorder %s32, 1
      %p203 = por %p201, %p202
      %p205 = scmp.ne.s32.totalorder %s190, %s204
      %p206 = scmp.eq.s32.totalorder %s32, 0
      %p207 = por %p205, %p206
      %s209 = sadd.s32 %s208, 1
      %p212 = scmp.eq.s32.totalorder %s26, 1
      %p213 = scmp.ne.s32.totalorder %s208, %s210
      %p214 = scmp.eq.s32.totalorder %s26, 0
      %p215 = por %p213, %p214
      %p216 = scmp.ne.s32.totalorder %s208, %s210
      %p217 = scmp.eq.s32.totalorder %s31, 1
      %p218 = por %p216, %p217
      %p219 = scmp.ne.s32.totalorder %s210, %s211
      %p220 = scmp.eq.s32.totalorder %s31, 0
      %p221 = por %p219, %p220
      %p222 = scmp.ne.s32.totalorder %s210, %s211
      %p223 = scmp.eq.s32.totalorder %s32, 1
      %p224 = por %p222, %p223
      %p226 = scmp.ne.s32.totalorder %s211, %s225
      %p227 = scmp.eq.s32.totalorder %s32, 0
      %p228 = por %p226, %p227
      %s230 = sadd.s32 %s229, 1
      %p233 = scmp.eq.s32.totalorder %s26, 1
      %p234 = scmp.ne.s32.totalorder %s229, %s231
      %p235 = scmp.eq.s32.totalorder %s26, 0
      %p236 = por %p234, %p235
      %p237 = scmp.ne.s32.totalorder %s229, %s231
      %p238 = scmp.eq.s32.totalorder %s31, 1
      %p239 = por %p237, %p238
      %p240 = scmp.ne.s32.totalorder %s231, %s232
      %p241 = scmp.eq.s32.totalorder %s31, 0
      %p242 = por %p240, %p241
      %p243 = scmp.ne.s32.totalorder %s231, %s232
      %p244 = scmp.eq.s32.totalorder %s32, 1
      %p245 = por %p243, %p244
      %p247 = scmp.ne.s32.totalorder %s232, %s246
      %p248 = scmp.eq.s32.totalorder %s32, 0
      %p249 = por %p247, %p248
      %s250 = ssub.s32 %s33, %s45
      %s251 = ssub.s32 %s34, %s41
      %s252 = sor.u32 %s250, %s251
      %p253 = scmp.eq.s32.totalorder %s252, 0
      %s255 = sadd.s32 %s254, 1
      %s256 = scalar_select %p253, %s254, %s255
      %p259 = pneg %p253
      %p260 = scmp.eq.s32.totalorder %s26, 1
      %p261 = por %p259, %p260
      %p262 = scmp.ne.s32.totalorder %s254, %s257
      %p263 = scmp.eq.s32.totalorder %s26, 0
      %p264 = por %p262, %p263
      %p265 = scmp.ne.s32.totalorder %s254, %s257
      %p266 = scmp.eq.s32.totalorder %s31, 1
      %p267 = por %p265, %p266
      %p268 = scmp.ne.s32.totalorder %s257, %s258
      %p269 = scmp.eq.s32.totalorder %s31, 0
      %p270 = por %p268, %p269
      %p271 = scmp.ne.s32.totalorder %s257, %s258
      %p272 = scmp.eq.s32.totalorder %s32, 1
      %p273 = por %p271, %p272
      %p275 = scmp.ne.s32.totalorder %s258, %s274
      %p276 = scmp.eq.s32.totalorder %s32, 0
      %p277 = por %p275, %p276
      %p278 = scmp.le.s32.totalorder 1, %s26
      %p279 = scmp.lt.s32.totalorder %s26, 3
      %p280 = pnand %p278, %p279
      %p281 = pneg %p280
      // Predicated region
      $region9: #{tpu_custom_call.1} parent=5 // pred_check
        _
      $region10: #{tpu_custom_call.1} parent=5 // pred_check_branch
        %283 = sbr.rel (%p280) target = $region12
      $region11: #{tpu_custom_call.1} parent=5 // pred_region
        %s284 = ssub.s32 %s26, 1
        // Predicated region
        $region13: #{tpu_custom_call.1} parent=11 // pred_check
          %p285 = pneg %p137
        $region14: #{tpu_custom_call.1} parent=11 // pred_check_branch
          %287 = sbr.rel (%p285) target = $region16
        $region15: #{tpu_custom_call.1} parent=11 // pred_region
          %289 = vsyncadd [#allocation11], 0
          %s290 = sshll.u32 %s3, 4
          %s291 = int_to_ptr.hbm [resolvable:$true] %s290
          %s292 = sshll.u32 [#allocation10], 4
          %s293 = int_to_ptr.vmem [resolvable:$true] %s292
          %298 = dma.hbm_to_vmem [thread:$0]  %s291, 256, %s293, [#allocation11], 64, 64, 4
        $region16: #{tpu_custom_call.1} parent=11 // pred_fallthru
          _
        // Predicated region
        $region17: #{tpu_custom_call.1} parent=11 // pred_check
          %p299 = pneg %p158
        $region18: #{tpu_custom_call.1} parent=11 // pred_check_branch
          %301 = sbr.rel (%p299) target = $region20
        $region19: #{tpu_custom_call.1} parent=11 // pred_region
          _
        $region20: #{tpu_custom_call.1} parent=11 // pred_fallthru
          _
        // Predicated region
        $region21: #{tpu_custom_call.1} parent=11 // pred_check
          %p302 = pneg %p179
        $region22: #{tpu_custom_call.1} parent=11 // pred_check_branch
          %304 = sbr.rel (%p302) target = $region24
        $region23: #{tpu_custom_call.1} parent=11 // pred_region
          %306 = vsyncadd [#allocation11], 0
          %s307 = sshll.u32 %s5, 4
          %s308 = int_to_ptr.hbm [resolvable:$true] %s307
          %s309 = sshll.u32 [#allocation12], 4
          %s310 = int_to_ptr.vmem [resolvable:$true] %s309
          %315 = dma.hbm_to_vmem [thread:$0]  %s308, 256, %s310, [#allocation11], 64, 64, 4
        $region24: #{tpu_custom_call.1} parent=11 // pred_fallthru
          _
        // Predicated region
        $region25: #{tpu_custom_call.1} parent=11 // pred_check
          %p316 = pneg %p200
        $region26: #{tpu_custom_call.1} parent=11 // pred_check_branch
          %318 = sbr.rel (%p316) target = $region28
        $region27: #{tpu_custom_call.1} parent=11 // pred_region
          _
        $region28: #{tpu_custom_call.1} parent=11 // pred_fallthru
          _
        // Predicated region
        $region29: #{tpu_custom_call.1} parent=11 // pred_check
          %p319 = pneg %p221
        $region30: #{tpu_custom_call.1} parent=11 // pred_check_branch
          %321 = sbr.rel (%p319) target = $region32
        $region31: #{tpu_custom_call.1} parent=11 // pred_region
          %323 = vsyncadd [#allocation14], 0
          %s324 = sshll.u32 %s7, 4
          %s325 = int_to_ptr.hbm [resolvable:$true] %s324
          %s326 = sshll.u32 [#allocation13], 4
          %s327 = int_to_ptr.vmem [resolvable:$true] %s326
          %332 = dma.hbm_to_vmem [thread:$0]  %s325, 256, %s327, [#allocation14], 64, 64, 4
        $region32: #{tpu_custom_call.1} parent=11 // pred_fallthru
          _
        // Predicated region
        $region33: #{tpu_custom_call.1} parent=11 // pred_check
          %p333 = pneg %p242
        $region34: #{tpu_custom_call.1} parent=11 // pred_check_branch
          %335 = sbr.rel (%p333) target = $region36
        $region35: #{tpu_custom_call.1} parent=11 // pred_region
          _
        $region36: #{tpu_custom_call.1} parent=11 // pred_fallthru
          _
      $region12: #{tpu_custom_call.1} parent=5 // pred_fallthru
        _
      %p336 = scmp.lt.s32.totalorder %s26, 2
      // Predicated region
      $region37: #{tpu_custom_call.1} parent=5 // pred_check
        %p337 = pneg %p336
      $region38: #{tpu_custom_call.1} parent=5 // pred_check_branch
        %339 = sbr.rel (%p337) target = $region40
      $region39: #{tpu_custom_call.1} parent=5 // pred_region
        // Predicated region
        $region41: #{tpu_custom_call.1} parent=39 // pred_check
          %p340 = pneg %p58
        $region42: #{tpu_custom_call.1} parent=39 // pred_check_branch
          %342 = sbr.rel (%p340) target = $region44
        $region43: #{tpu_custom_call.1} parent=39 // pred_region
          %s343 = sand.u32 %s48, 1
          %s344 = scalar_lea.sflag [#allocation5], %s343
          %s345 = sand.u32 %s48, 1
          %s346 = smul.addr %s345, 4
          %s347 = scalar_lea.vmem [#allocation4], %s346
          %349 = vsyncadd %s344, 0
          %s350 = smul.addr %s33, 4
          %s351 = scalar_lea.hbm %s0, %s350
          %s353 = sshll.u32 %s351, 4
          %s354 = int_to_ptr.hbm [resolvable:$true] %s353
          %s355 = sshll.u32 %s347, 4
          %s356 = int_to_ptr.vmem [resolvable:$true] %s355
          %358 = dma.hbm_to_vmem [thread:$0]  %s354, 64, %s356, %s344
        $region44: #{tpu_custom_call.1} parent=39 // pred_fallthru
          _
        // Predicated region
        $region45: #{tpu_custom_call.1} parent=39 // pred_check
          %p359 = pneg %p84
        $region46: #{tpu_custom_call.1} parent=39 // pred_check_branch
          %361 = sbr.rel (%p359) target = $region48
        $region47: #{tpu_custom_call.1} parent=39 // pred_region
          %s362 = sand.u32 %s26, 1
          %s363 = scalar_lea.sflag [#allocation8], %s362
          %s364 = sand.u32 %s74, 1
          %s365 = smul.addr %s364, 4
          %s366 = scalar_lea.vmem [#allocation7], %s365
          %368 = vsyncadd %s363, 0
          %s369 = smul.addr %s33, 4
          %s370 = scalar_lea.hbm %s1, %s369
          %s372 = sshll.u32 %s370, 4
          %s373 = int_to_ptr.hbm [resolvable:$true] %s372
          %s374 = sshll.u32 %s366, 4
          %s375 = int_to_ptr.vmem [resolvable:$true] %s374
          %377 = dma.hbm_to_vmem [thread:$0]  %s373, 64, %s375, %s363
        $region48: #{tpu_custom_call.1} parent=39 // pred_fallthru
          _
        // Predicated region
        $region49: #{tpu_custom_call.1} parent=39 // pred_check
          %p378 = pneg %p110
        $region50: #{tpu_custom_call.1} parent=39 // pred_check_branch
          %380 = sbr.rel (%p378) target = $region52
        $region51: #{tpu_custom_call.1} parent=39 // pred_region
          %s381 = sand.u32 %s26, 1
          %s382 = scalar_lea.sflag [#allocation8], %s381
          %s383 = sand.u32 %s100, 1
          %s384 = scalar_lea.vmem [#allocation9], %s383
          %386 = vsyncadd %s382, 0
          %s387 = scalar_lea.hbm %s2, %s33
          %s389 = sshll.u32 %s387, 4
          %s390 = int_to_ptr.hbm [resolvable:$true] %s389
          %s391 = sshll.u32 %s384, 4
          %s392 = int_to_ptr.vmem [resolvable:$true] %s391
          %394 = dma.hbm_to_vmem [thread:$0]  %s390, 16, %s392, %s382
        $region52: #{tpu_custom_call.1} parent=39 // pred_fallthru
          _
      $region40: #{tpu_custom_call.1} parent=5 // pred_fallthru
        _
      %p395 = scmp.le.s32.totalorder 1, %s26
      %p396 = scmp.lt.s32.totalorder %s26, 3
      %p397 = pnand %p395, %p396
      %p398 = pneg %p397
      // Predicated region
      $region53: #{tpu_custom_call.1} parent=5 // pred_check
        _
      $region54: #{tpu_custom_call.1} parent=5 // pred_check_branch
        %400 = sbr.rel (%p397) target = $region56
      $region55: #{tpu_custom_call.1} parent=5 // pred_region
        %s401 = ssub.s32 %s26, 1
        %s402 = sand.u32 %s51, 1
        %s403 = scalar_lea.sflag [#allocation5], %s402
        %s404 = sand.u32 %s51, 1
        %s405 = smul.addr %s404, 4
        %s406 = scalar_lea.vmem [#allocation4], %s405
        // Predicated region
        $region57: #{tpu_custom_call.1} parent=55 // pred_check
          %p407 = pneg %p64
        $region58: #{tpu_custom_call.1} parent=55 // pred_check_branch
          %409 = sbr.rel (%p407) target = $region60
        $region59: #{tpu_custom_call.1} parent=55 // pred_region
          %411 = dma.done %s403, 64
        $region60: #{tpu_custom_call.1} parent=55 // pred_fallthru
          _
        %s412 = sand.u32 %s31, 1
        %s413 = scalar_lea.sflag [#allocation8], %s412
        %s414 = sand.u32 %s77, 1
        %s415 = smul.addr %s414, 4
        %s416 = scalar_lea.vmem [#allocation7], %s415
        // Predicated region
        $region61: #{tpu_custom_call.1} parent=55 // pred_check
          %p417 = pneg %p90
        $region62: #{tpu_custom_call.1} parent=55 // pred_check_branch
          %419 = sbr.rel (%p417) target = $region64
        $region63: #{tpu_custom_call.1} parent=55 // pred_region
          %421 = dma.done %s413, 64
        $region64: #{tpu_custom_call.1} parent=55 // pred_fallthru
          _
        %s422 = sand.u32 %s31, 1
        %s423 = scalar_lea.sflag [#allocation8], %s422
        %s424 = sand.u32 %s103, 1
        %s425 = scalar_lea.vmem [#allocation9], %s424
        // Predicated region
        $region65: #{tpu_custom_call.1} parent=55 // pred_check
          %p426 = pneg %p116
        $region66: #{tpu_custom_call.1} parent=55 // pred_check_branch
          %428 = sbr.rel (%p426) target = $region68
        $region67: #{tpu_custom_call.1} parent=55 // pred_region
          %430 = dma.done %s423, 16
        $region68: #{tpu_custom_call.1} parent=55 // pred_fallthru
          _
        // Predicated region
        $region69: #{tpu_custom_call.1} parent=55 // pred_check
          %p431 = pneg %p137
        $region70: #{tpu_custom_call.1} parent=55 // pred_check_branch
          %433 = sbr.rel (%p431) target = $region72
        $region71: #{tpu_custom_call.1} parent=55 // pred_region
          %435 = dma.done [#allocation11], 256
        $region72: #{tpu_custom_call.1} parent=55 // pred_fallthru
          _
        // Predicated region
        $region73: #{tpu_custom_call.1} parent=55 // pred_check
          %p436 = pneg %p179
        $region74: #{tpu_custom_call.1} parent=55 // pred_check_branch
          %438 = sbr.rel (%p436) target = $region76
        $region75: #{tpu_custom_call.1} parent=55 // pred_region
          %440 = dma.done [#allocation11], 256
        $region76: #{tpu_custom_call.1} parent=55 // pred_fallthru
          _
        // Predicated region
        $region77: #{tpu_custom_call.1} parent=55 // pred_check
          %p441 = pneg %p221
        $region78: #{tpu_custom_call.1} parent=55 // pred_check_branch
          %443 = sbr.rel (%p441) target = $region80
        $region79: #{tpu_custom_call.1} parent=55 // pred_region
          %445 = dma.done [#allocation14], 256
        $region80: #{tpu_custom_call.1} parent=55 // pred_fallthru
          _
        %s446 = sand.u32 %s51, 1
        %s447 = scalar_lea.sflag [#allocation5], %s446
        %s448 = sand.u32 %s51, 1
        %s449 = smul.addr %s448, 4
        %s450 = scalar_lea.vmem [#allocation4], %s449
        %p451 = pneg %p64
        %p452 = pneg %p61
        %s453 = sand.u32 %s31, 1
        %s454 = scalar_lea.sflag [#allocation8], %s453
        %s455 = sand.u32 %s77, 1
        %s456 = smul.addr %s455, 4
        %s457 = scalar_lea.vmem [#allocation7], %s456
        %p458 = pneg %p90
        %p459 = pneg %p87
        %s460 = sand.u32 %s31, 1
        %s461 = scalar_lea.sflag [#allocation8], %s460
        %s462 = sand.u32 %s103, 1
        %s463 = scalar_lea.vmem [#allocation9], %s462
        %p464 = pneg %p116
        %p465 = pneg %p113
        %p466 = pneg %p137
        %p467 = pneg %p134
        %p468 = pneg %p158
        %p469 = pneg %p155
        %p470 = pneg %p179
        %p471 = pneg %p176
        %p472 = pneg %p200
        %p473 = pneg %p197
        %p474 = pneg %p221
        %p475 = pneg %p218
        %p476 = pneg %p242
        %p477 = pneg %p239
        %p478 = pneg %p270
        %p479 = pneg %p267
        %s480 = sand.u32 %s257, 1
        %s481 = scalar_lea.sflag [#allocation6], %s480
        %s482 = sand.u32 %s257, 1
        %s483 = smul.addr %s482, 8
        %s484 = scalar_lea.vmem [#allocation15], %s483
        %p486 = scmp.eq.s32.totalorder %s36, 0
        // Predicated region
        $region81: #{tpu_custom_call.1} parent=55 // pred_check
          %p487 = pneg %p486
        $region82: #{tpu_custom_call.1} parent=55 // pred_check_branch
          %489 = sbr.rel (%p487) target = $region84
        $region83: #{tpu_custom_call.1} parent=55 // pred_region
          %v490 = vld [vmem:[%s406] sm:$0xf]
          %v491 = vld [vmem:[%s416] sm:$0xf]
          %v492 = vld [vmem:[#allocation12] sm:$0xf]
          %v493 = vld [vmem:[#allocation12 + $0x4] sm:$0xf]
          %v494 = vld [vmem:[#allocation12 + $0x8] sm:$0xf]
          %v495 = vld [vmem:[#allocation12 + $0xc] sm:$0xf]
          %v496 = vld [vmem:[%s6] sm:$0x1]
          %v498 = vperm.slane %v496, 0
          %v504 = vunpack.c.l.b16 %v492
          %v505 = vunpack.c.l.b16 %v493
          %v506 = vunpack.c.l.b16 %v494
          %v507 = vunpack.c.l.b16 %v495
          %v508 = vpack.c.b16 %v505, %v504
          %v509 = vpack.c.b16 %v507, %v506
          %vm512 = vcmask 261120
          %v514 = vsel %vm512, %v490, 0
          %516 = vmatpush.bf16.msra.mxu0 0
          %517 = vmatpush.bf16.msra.mxu0 0
          %518 = vmatpush.bf16.msra.mxu0 0
          %519 = vmatpush.bf16.msra.mxu0 0
          %520 = vmatpush.bf16.msra.mxu0 0
          %521 = vmatpush.bf16.msra.mxu0 0
          %522 = vmatpush.bf16.msra.mxu0 %v509
          %523 = vmatpush.bf16.msra.mxu0 %v508
          %524 = vmatmul.bf16.gmra.mxu0 %v514
          %v525 = vpop.f32.mrf.mxu0
          %v526 = vadd.f32 %v498, %v525
          %v527 = vpop.f32.mrf.mxu0
          %528 = vdwg.mxu0
          %v529 = vld [vmem:[#allocation13] sm:$0xf]
          %v530 = vld [vmem:[#allocation13 + $0x4] sm:$0xf]
          %v531 = vld [vmem:[#allocation13 + $0x8] sm:$0xf]
          %v532 = vld [vmem:[#allocation13 + $0xc] sm:$0xf]
          %v533 = vld [vmem:[%s8] sm:$0x1]
          %v535 = vperm.slane %v533, 0
          %v541 = vunpack.c.l.b16 %v529
          %v542 = vunpack.c.l.b16 %v530
          %v543 = vunpack.c.l.b16 %v531
          %v544 = vunpack.c.l.b16 %v532
          %v545 = vpack.c.b16 %v542, %v541
          %v546 = vpack.c.b16 %v544, %v543
          %v550 = vsel %vm512, %v491, 0
          %552 = vmatpush.bf16.msra.mxu0 0
          %553 = vmatpush.bf16.msra.mxu0 0
          %554 = vmatpush.bf16.msra.mxu0 0
          %555 = vmatpush.bf16.msra.mxu0 0
          %556 = vmatpush.bf16.msra.mxu0 0
          %557 = vmatpush.bf16.msra.mxu0 0
          %558 = vmatpush.bf16.msra.mxu0 %v546
          %559 = vmatpush.bf16.msra.mxu0 %v545
          %560 = vmatmul.bf16.gmra.mxu0 %v550
          %v561 = vpop.f32.mrf.mxu0
          %v562 = vadd.f32 %v535, %v561
          %v563 = vpop.f32.mrf.mxu0
          %564 = vdwg.mxu0
          %566 = vrot.lane.b32.xlu0 %v526, 120
          %v567 = vpop.permute.xlu0 %566
          %569 = vrot.lane.b32.xlu0 %v526, 112
          %v570 = vpop.permute.xlu0 %569
          %572 = vrot.lane.b32.xlu0 %v526, 104
          %v573 = vpop.permute.xlu0 %572
          %v575 = vrot.slane %v570, 4
          %vm576 = vcmask 1047556
          %v577 = vsel %vm576, %v575, %v526
          %v578 = vrot.slane %v526, 4
          %v579 = vsel %vm576, %v570, %v578
          %v581 = vunpack.c.l.s4 1983009808
          %v582 = vunpack.c.0.s8 %v581
          %v583 = vperm.slane %v577, %v582
          %v585 = vunpack.c.l.s4 1983009808
          %v586 = vunpack.c.0.s8 %v585
          %v587 = vperm.slane %v579, %v586
          %v588 = vrot.slane %v573, 4
          %v589 = vsel %vm576, %v588, %v567
          %v590 = vrot.slane %v567, 4
          %v591 = vsel %vm576, %v573, %v590
          %v593 = vunpack.c.l.s4 1983009808
          %v594 = vunpack.c.0.s8 %v593
          %v595 = vperm.slane %v589, %v594
          %v597 = vunpack.c.l.s4 1983009808
          %v598 = vunpack.c.0.s8 %v597
          %v599 = vperm.slane %v591, %v598
          %v600 = vrot.slane %v595, 4
          %v601 = vsel %vm576, %v600, %v583
          %v602 = vrot.slane %v583, 4
          %v603 = vsel %vm576, %v595, %v602
          %v605 = vunpack.c.l.s4 1934713408
          %v606 = vunpack.c.0.s8 %v605
          %v607 = vperm.slane %v601, %v606
          %v609 = vunpack.c.l.s4 1934713408
          %v610 = vunpack.c.0.s8 %v609
          %v611 = vperm.slane %v603, %v610
          %v612 = vrot.slane %v599, 4
          %v613 = vsel %vm576, %v612, %v587
          %v614 = vrot.slane %v587, 4
          %v615 = vsel %vm576, %v599, %v614
          %v617 = vunpack.c.l.s4 1934713408
          %v618 = vunpack.c.0.s8 %v617
          %v619 = vperm.slane %v613, %v618
          %v621 = vunpack.c.l.s4 1934713408
          %v622 = vunpack.c.0.s8 %v621
          %v623 = vperm.slane %v615, %v622
          %v624 = vrot.slane %v607, 4
          %v625 = vsel %vm576, 0.0, %v624
          %v626 = vrot.slane %v611, 4
          %v627 = vsel %vm576, 0.0, %v626
          %v628 = vrot.slane %v619, 4
          %v629 = vsel %vm576, 0.0, %v628
          %v630 = vrot.slane %v623, 4
          %v631 = vsel %vm576, 0.0, %v630
          %632 = vrot.lane.b32.xlu0 %v526, 96
          %v633 = vpop.permute.xlu0 %632
          %634 = vrot.lane.b32.xlu0 %v567, 96
          %v635 = vpop.permute.xlu0 %634
          %636 = vrot.lane.b32.xlu0 %v570, 96
          %v637 = vpop.permute.xlu0 %636
          %638 = vrot.lane.b32.xlu0 %v573, 96
          %v639 = vpop.permute.xlu0 %638
          %v644 = vrot.slane %v637, 4
          %v645 = vsel %vm576, %v644, %v633
          %v646 = vrot.slane %v633, 4
          %v647 = vsel %vm576, %v637, %v646
          %v649 = vunpack.c.l.s4 1983009808
          %v650 = vunpack.c.0.s8 %v649
          %v651 = vperm.slane %v645, %v650
          %v653 = vunpack.c.l.s4 1983009808
          %v654 = vunpack.c.0.s8 %v653
          %v655 = vperm.slane %v647, %v654
          %v656 = vrot.slane %v639, 4
          %v657 = vsel %vm576, %v656, %v635
          %v658 = vrot.slane %v635, 4
          %v659 = vsel %vm576, %v639, %v658
          %v661 = vunpack.c.l.s4 1983009808
          %v662 = vunpack.c.0.s8 %v661
          %v663 = vperm.slane %v657, %v662
          %v665 = vunpack.c.l.s4 1983009808
          %v666 = vunpack.c.0.s8 %v665
          %v667 = vperm.slane %v659, %v666
          %v668 = vrot.slane %v663, 4
          %v669 = vsel %vm576, %v668, %v651
          %v670 = vrot.slane %v651, 4
          %v671 = vsel %vm576, %v663, %v670
          %v673 = vunpack.c.l.s4 1934713408
          %v674 = vunpack.c.0.s8 %v673
          %v675 = vperm.slane %v669, %v674
          %v677 = vunpack.c.l.s4 1934713408
          %v678 = vunpack.c.0.s8 %v677
          %v679 = vperm.slane %v671, %v678
          %v680 = vrot.slane %v667, 4
          %v681 = vsel %vm576, %v680, %v655
          %v682 = vrot.slane %v655, 4
          %v683 = vsel %vm576, %v667, %v682
          %v685 = vunpack.c.l.s4 1934713408
          %v686 = vunpack.c.0.s8 %v685
          %v687 = vperm.slane %v681, %v686
          %v689 = vunpack.c.l.s4 1934713408
          %v690 = vunpack.c.0.s8 %v689
          %v691 = vperm.slane %v683, %v690
          %v692 = vrot.slane %v675, 4
          %v693 = vsel %vm576, 0.0, %v692
          %v694 = vrot.slane %v679, 4
          %v695 = vsel %vm576, 0.0, %v694
          %v696 = vrot.slane %v687, 4
          %v697 = vsel %vm576, 0.0, %v696
          %v698 = vrot.slane %v691, 4
          %v699 = vsel %vm576, 0.0, %v698
          %701 = vrot.lane.b32.xlu0 %v562, 120
          %v702 = vpop.permute.xlu0 %701
          %704 = vrot.lane.b32.xlu0 %v562, 112
          %v705 = vpop.permute.xlu0 %704
          %707 = vrot.lane.b32.xlu0 %v562, 104
          %v708 = vpop.permute.xlu0 %707
          %v710 = vrot.slane %v705, 4
          %v711 = vsel %vm576, %v710, %v562
          %v712 = vrot.slane %v562, 4
          %v713 = vsel %vm576, %v705, %v712
          %v715 = vunpack.c.l.s4 1983009808
          %v716 = vunpack.c.0.s8 %v715
          %v717 = vperm.slane %v711, %v716
          %v719 = vunpack.c.l.s4 1983009808
          %v720 = vunpack.c.0.s8 %v719
          %v721 = vperm.slane %v713, %v720
          %v722 = vrot.slane %v708, 4
          %v723 = vsel %vm576, %v722, %v702
          %v724 = vrot.slane %v702, 4
          %v725 = vsel %vm576, %v708, %v724
          %v727 = vunpack.c.l.s4 1983009808
          %v728 = vunpack.c.0.s8 %v727
          %v729 = vperm.slane %v723, %v728
          %v731 = vunpack.c.l.s4 1983009808
          %v732 = vunpack.c.0.s8 %v731
          %v733 = vperm.slane %v725, %v732
          %v734 = vrot.slane %v729, 4
          %v735 = vsel %vm576, %v734, %v717
          %v736 = vrot.slane %v717, 4
          %v737 = vsel %vm576, %v729, %v736
          %v739 = vunpack.c.l.s4 1934713408
          %v740 = vunpack.c.0.s8 %v739
          %v741 = vperm.slane %v735, %v740
          %v743 = vunpack.c.l.s4 1934713408
          %v744 = vunpack.c.0.s8 %v743
          %v745 = vperm.slane %v737, %v744
          %v746 = vrot.slane %v733, 4
          %v747 = vsel %vm576, %v746, %v721
          %v748 = vrot.slane %v721, 4
          %v749 = vsel %vm576, %v733, %v748
          %v751 = vunpack.c.l.s4 1934713408
          %v752 = vunpack.c.0.s8 %v751
          %v753 = vperm.slane %v747, %v752
          %v755 = vunpack.c.l.s4 1934713408
          %v756 = vunpack.c.0.s8 %v755
          %v757 = vperm.slane %v749, %v756
          %v758 = vrot.slane %v741, 4
          %v759 = vsel %vm576, 0.0, %v758
          %v760 = vrot.slane %v745, 4
          %v761 = vsel %vm576, 0.0, %v760
          %v762 = vrot.slane %v753, 4
          %v763 = vsel %vm576, 0.0, %v762
          %v764 = vrot.slane %v757, 4
          %v765 = vsel %vm576, 0.0, %v764
          %774 = vrot.lane.b32.xlu0 %v741, 8
          %v775 = vpop.permute.xlu0 %774
          %776 = vrot.lane.b32.xlu0 %v759, 8
          %v777 = vpop.permute.xlu0 %776
          %778 = vrot.lane.b32.xlu0 %v745, 8
          %v779 = vpop.permute.xlu0 %778
          %780 = vrot.lane.b32.xlu0 %v761, 8
          %v781 = vpop.permute.xlu0 %780
          %782 = vrot.lane.b32.xlu0 %v753, 8
          %v783 = vpop.permute.xlu0 %782
          %784 = vrot.lane.b32.xlu0 %v763, 8
          %v785 = vpop.permute.xlu0 %784
          %786 = vrot.lane.b32.xlu0 %v757, 8
          %v787 = vpop.permute.xlu0 %786
          %788 = vrot.lane.b32.xlu0 %v765, 8
          %v789 = vpop.permute.xlu0 %788
          %vm798 = vcmask 64512
          %v799 = vsel %vm798, %v607, %v775
          %v800 = vsel %vm798, %v625, %v777
          %v801 = vsel %vm798, %v611, %v779
          %v802 = vsel %vm798, %v627, %v781
          %v803 = vsel %vm798, %v619, %v783
          %v804 = vsel %vm798, %v629, %v785
          %v805 = vsel %vm798, %v623, %v787
          %v806 = vsel %vm798, %v631, %v789
          %v807 = vrot.slane %v801, 4
          %v808 = vsel %vm576, %v807, %v799
          %v810 = vunpack.c.l.s4 1983009808
          %v811 = vunpack.c.0.s8 %v810
          %v812 = vperm.slane %v808, %v811
          %v813 = vrot.slane %v802, 4
          %v814 = vsel %vm576, %v813, %v800
          %v816 = vunpack.c.l.s4 1983009808
          %v817 = vunpack.c.0.s8 %v816
          %v818 = vperm.slane %v814, %v817
          %v819 = vrot.slane %v805, 4
          %v820 = vsel %vm576, %v819, %v803
          %v822 = vunpack.c.l.s4 1983009808
          %v823 = vunpack.c.0.s8 %v822
          %v824 = vperm.slane %v820, %v823
          %v825 = vrot.slane %v806, 4
          %v826 = vsel %vm576, %v825, %v804
          %v828 = vunpack.c.l.s4 1983009808
          %v829 = vunpack.c.0.s8 %v828
          %v830 = vperm.slane %v826, %v829
          %v831 = vrot.slane %v818, 4
          %v832 = vsel %vm576, %v831, %v812
          %v833 = vrot.slane %v812, 4
          %v834 = vsel %vm576, %v818, %v833
          %v836 = vunpack.c.l.s4 1934713408
          %v837 = vunpack.c.0.s8 %v836
          %v838 = vperm.slane %v832, %v837
          %v840 = vunpack.c.l.s4 1934713408
          %v841 = vunpack.c.0.s8 %v840
          %v842 = vperm.slane %v834, %v841
          %v843 = vrot.slane %v830, 4
          %v844 = vsel %vm576, %v843, %v824
          %v845 = vrot.slane %v824, 4
          %v846 = vsel %vm576, %v830, %v845
          %v848 = vunpack.c.l.s4 1934713408
          %v849 = vunpack.c.0.s8 %v848
          %v850 = vperm.slane %v844, %v849
          %v852 = vunpack.c.l.s4 1934713408
          %v853 = vunpack.c.0.s8 %v852
          %v854 = vperm.slane %v846, %v853
          %v855 = vrot.slane %v850, 4
          %v856 = vsel %vm576, %v855, %v838
          %v857 = vrot.slane %v838, 4
          %v858 = vsel %vm576, %v850, %v857
          %v859 = vrot.slane %v854, 4
          %v860 = vsel %vm576, %v859, %v842
          %v861 = vrot.slane %v842, 4
          %v862 = vsel %vm576, %v854, %v861
          %v863 = vpack.c.bf16 %v856, %v856
          %v864 = vpack.c.bf16 %v858, %v858
          %v865 = vpack.c.bf16 %v860, %v860
          %v866 = vpack.c.bf16 %v862, %v862
          %vm867 = vcmask 125952
          %868 = vst.msk [vmem:[#allocation2] sm:$0xf] %vm867, %v863
          %869 = vst.msk [vmem:[#allocation2 + $0x4] sm:$0xf] %vm867, %v864
          %870 = vst.msk [vmem:[#allocation2 + $0x8] sm:$0xf] %vm867, %v865
          %871 = vst.msk [vmem:[#allocation2 + $0xc] sm:$0xf] %vm867, %v866
          %v872 = vsel %vm576, %v694, %v675
          %v874 = vunpack.c.l.s4 1983009808
          %v875 = vunpack.c.0.s8 %v874
          %v876 = vperm.slane %v872, %v875
          %v877 = vrot.slane %v695, 4
          %v878 = vsel %vm576, %v877, %v693
          %v880 = vunpack.c.l.s4 1983009808
          %v881 = vunpack.c.0.s8 %v880
          %v882 = vperm.slane %v878, %v881
          %v883 = vsel %vm576, %v698, %v687
          %v885 = vunpack.c.l.s4 1983009808
          %v886 = vunpack.c.0.s8 %v885
          %v887 = vperm.slane %v883, %v886
          %v888 = vrot.slane %v699, 4
          %v889 = vsel %vm576, %v888, %v697
          %v891 = vunpack.c.l.s4 1983009808
          %v892 = vunpack.c.0.s8 %v891
          %v893 = vperm.slane %v889, %v892
          %v894 = vrot.slane %v882, 4
          %v895 = vsel %vm576, %v894, %v876
          %v896 = vrot.slane %v876, 4
          %v897 = vsel %vm576, %v882, %v896
          %v899 = vunpack.c.l.s4 1934713408
          %v900 = vunpack.c.0.s8 %v899
          %v901 = vperm.slane %v895, %v900
          %v903 = vunpack.c.l.s4 1934713408
          %v904 = vunpack.c.0.s8 %v903
          %v905 = vperm.slane %v897, %v904
          %v906 = vrot.slane %v893, 4
          %v907 = vsel %vm576, %v906, %v887
          %v908 = vrot.slane %v887, 4
          %v909 = vsel %vm576, %v893, %v908
          %v911 = vunpack.c.l.s4 1934713408
          %v912 = vunpack.c.0.s8 %v911
          %v913 = vperm.slane %v907, %v912
          %v915 = vunpack.c.l.s4 1934713408
          %v916 = vunpack.c.0.s8 %v915
          %v917 = vperm.slane %v909, %v916
          %v918 = vrot.slane %v913, 4
          %v919 = vsel %vm576, %v918, %v901
          %v920 = vrot.slane %v901, 4
          %v921 = vsel %vm576, %v913, %v920
          %v922 = vrot.slane %v917, 4
          %v923 = vsel %vm576, %v922, %v905
          %v924 = vrot.slane %v905, 4
          %v925 = vsel %vm576, %v917, %v924
          %v926 = vpack.c.bf16 %v919, %v919
          %v927 = vpack.c.bf16 %v921, %v921
          %v928 = vpack.c.bf16 %v923, %v923
          %v929 = vpack.c.bf16 %v925, %v925
          %vm930 = vcmask 60416
          %931 = vst.msk [vmem:[#allocation3] sm:$0xf] %vm930, %v926
          %932 = vst.msk [vmem:[#allocation3 + $0x4] sm:$0xf] %vm930, %v927
          %933 = vst.msk [vmem:[#allocation3 + $0x8] sm:$0xf] %vm930, %v928
          %934 = vst.msk [vmem:[#allocation3 + $0xc] sm:$0xf] %vm930, %v929
        $region84: #{tpu_custom_call.1} parent=55 // pred_fallthru
          _
        %s935 = smul.u32 %s36, 8
        %s936 = sshra.s32 %s935, 3
        %s937 = sand.u32 %s935, 7
        %s938 = smul.addr %s936, 4
        %s939 = scalar_lea.vmem %s406, %s938 [#allocation4]
        %v940 = vld [vmem:[%s939] sm:$0xf]
        %v941 = vld [vmem:[#allocation10] sm:$0xf]
        %v942 = vld [vmem:[#allocation10 + $0x4] sm:$0xf]
        %v943 = vld [vmem:[#allocation10 + $0x8] sm:$0xf]
        %v944 = vld [vmem:[#allocation10 + $0xc] sm:$0xf]
        %v945 = vld [vmem:[%s4] sm:$0x1]
        %v947 = vperm.slane %v945, 0
        %v953 = vunpack.c.l.b16 %v941
        %v954 = vunpack.c.l.b16 %v942
        %v955 = vunpack.c.l.b16 %v943
        %v956 = vunpack.c.l.b16 %v944
        %v957 = vpack.c.b16 %v954, %v953
        %v958 = vpack.c.b16 %v956, %v955
        %vm961 = vcmask 261120
        %v963 = vsel %vm961, %v940, 0
        %965 = vmatpush.bf16.msra.mxu0 0
        %966 = vmatpush.bf16.msra.mxu0 0
        %967 = vmatpush.bf16.msra.mxu0 0
        %968 = vmatpush.bf16.msra.mxu0 0
        %969 = vmatpush.bf16.msra.mxu0 0
        %970 = vmatpush.bf16.msra.mxu0 0
        %971 = vmatpush.bf16.msra.mxu0 %v958
        %972 = vmatpush.bf16.msra.mxu0 %v957
        %973 = vmatmul.bf16.gmra.mxu0 %v963
        %v974 = vpop.f32.mrf.mxu0
        %v975 = vadd.f32 %v947, %v974
        %v976 = vpop.f32.mrf.mxu0
        %977 = vdwg.mxu0
        %979 = vrot.lane.b32.xlu0 %v975, 112
        %v980 = vpop.permute.xlu0 %979
        %982 = vrot.lane.b32.xlu0 %v975, 96
        %v983 = vpop.permute.xlu0 %982
        %985 = vrot.lane.b32.xlu0 %v975, 80
        %v986 = vpop.permute.xlu0 %985
        %v988 = vrot.slane %v983, 4
        %vm989 = vcmask 1047556
        %v990 = vsel %vm989, %v988, %v975
        %v991 = vrot.slane %v975, 4
        %v992 = vsel %vm989, %v983, %v991
        %v994 = vunpack.c.l.s4 1983009808
        %v995 = vunpack.c.0.s8 %v994
        %v996 = vperm.slane %v990, %v995
        %v998 = vunpack.c.l.s4 1983009808
        %v999 = vunpack.c.0.s8 %v998
        %v1000 = vperm.slane %v992, %v999
        %v1001 = vrot.slane %v986, 4
        %v1002 = vsel %vm989, %v1001, %v980
        %v1003 = vrot.slane %v980, 4
        %v1004 = vsel %vm989, %v986, %v1003
        %v1006 = vunpack.c.l.s4 1983009808
        %v1007 = vunpack.c.0.s8 %v1006
        %v1008 = vperm.slane %v1002, %v1007
        %v1010 = vunpack.c.l.s4 1983009808
        %v1011 = vunpack.c.0.s8 %v1010
        %v1012 = vperm.slane %v1004, %v1011
        %v1013 = vrot.slane %v1008, 4
        %v1014 = vsel %vm989, %v1013, %v996
        %v1015 = vrot.slane %v996, 4
        %v1016 = vsel %vm989, %v1008, %v1015
        %v1018 = vunpack.c.l.s4 1934713408
        %v1019 = vunpack.c.0.s8 %v1018
        %v1020 = vperm.slane %v1014, %v1019
        %v1022 = vunpack.c.l.s4 1934713408
        %v1023 = vunpack.c.0.s8 %v1022
        %v1024 = vperm.slane %v1016, %v1023
        %v1025 = vrot.slane %v1012, 4
        %v1026 = vsel %vm989, %v1025, %v1000
        %v1027 = vrot.slane %v1000, 4
        %v1028 = vsel %vm989, %v1012, %v1027
        %v1030 = vunpack.c.l.s4 1934713408
        %v1031 = vunpack.c.0.s8 %v1030
        %v1032 = vperm.slane %v1026, %v1031
        %v1034 = vunpack.c.l.s4 1934713408
        %v1035 = vunpack.c.0.s8 %v1034
        %v1036 = vperm.slane %v1028, %v1035
        %v1037 = vrot.slane %v1020, 4
        %v1038 = vsel %vm989, 0.0, %v1037
        %v1039 = vrot.slane %v1024, 4
        %v1040 = vsel %vm989, 0.0, %v1039
        %v1041 = vrot.slane %v1032, 4
        %v1042 = vsel %vm989, 0.0, %v1041
        %v1043 = vrot.slane %v1036, 4
        %v1044 = vsel %vm989, 0.0, %v1043
        %v1045 = vsel %vm989, %v1039, %v1020
        %v1047 = vunpack.c.l.s4 1983009808
        %v1048 = vunpack.c.0.s8 %v1047
        %v1049 = vperm.slane %v1045, %v1048
        %v1050 = vrot.slane %v1040, 4
        %v1051 = vsel %vm989, %v1050, %v1038
        %v1053 = vunpack.c.l.s4 1983009808
        %v1054 = vunpack.c.0.s8 %v1053
        %v1055 = vperm.slane %v1051, %v1054
        %v1056 = vsel %vm989, %v1043, %v1032
        %v1058 = vunpack.c.l.s4 1983009808
        %v1059 = vunpack.c.0.s8 %v1058
        %v1060 = vperm.slane %v1056, %v1059
        %v1061 = vrot.slane %v1044, 4
        %v1062 = vsel %vm989, %v1061, %v1042
        %v1064 = vunpack.c.l.s4 1983009808
        %v1065 = vunpack.c.0.s8 %v1064
        %v1066 = vperm.slane %v1062, %v1065
        %v1067 = vrot.slane %v1055, 4
        %v1068 = vsel %vm989, %v1067, %v1049
        %v1069 = vrot.slane %v1049, 4
        %v1070 = vsel %vm989, %v1055, %v1069
        %v1072 = vunpack.c.l.s4 1934713408
        %v1073 = vunpack.c.0.s8 %v1072
        %v1074 = vperm.slane %v1068, %v1073
        %v1076 = vunpack.c.l.s4 1934713408
        %v1077 = vunpack.c.0.s8 %v1076
        %v1078 = vperm.slane %v1070, %v1077
        %v1079 = vrot.slane %v1066, 4
        %v1080 = vsel %vm989, %v1079, %v1060
        %v1081 = vrot.slane %v1060, 4
        %v1082 = vsel %vm989, %v1066, %v1081
        %v1084 = vunpack.c.l.s4 1934713408
        %v1085 = vunpack.c.0.s8 %v1084
        %v1086 = vperm.slane %v1080, %v1085
        %v1088 = vunpack.c.l.s4 1934713408
        %v1089 = vunpack.c.0.s8 %v1088
        %v1090 = vperm.slane %v1082, %v1089
        %v1091 = vrot.slane %v1086, 4
        %v1092 = vsel %vm989, %v1091, %v1074
        %v1093 = vrot.slane %v1074, 4
        %v1094 = vsel %vm989, %v1086, %v1093
        %v1095 = vrot.slane %v1090, 4
        %v1096 = vsel %vm989, %v1095, %v1078
        %v1097 = vrot.slane %v1078, 4
        %v1098 = vsel %vm989, %v1090, %v1097
        %v1099 = vpack.c.bf16 %v1092, %v1092
        %v1100 = vpack.c.bf16 %v1094, %v1094
        %v1101 = vpack.c.bf16 %v1096, %v1096
        %v1102 = vpack.c.bf16 %v1098, %v1098
        %v1103 = vld [vmem:[#allocation2] sm:$0xf]
        %v1104 = vld [vmem:[#allocation2 + $0x4] sm:$0xf]
        %v1105 = vld [vmem:[#allocation2 + $0x8] sm:$0xf]
        %v1106 = vld [vmem:[#allocation2 + $0xc] sm:$0xf]
        %v1107 = vld [vmem:[%s425] sm:$0x1]
        %v1109 = vperm.slane %v1107, 0
        %vm1111 = vcmask 130048
        %v1113 = vsel %vm1111, %v1099, 0
        %v1116 = vsel %vm1111, %v1103, 0
        %1118 = vmatpush.bf16.xpose.msra.mxu0 0
        %1119 = vmatpush.bf16.xpose.msra.mxu0 0
        %1120 = vmatpush.bf16.xpose.msra.mxu0 0
        %1121 = vmatpush.bf16.xpose.msra.mxu0 0
        %1122 = vmatpush.bf16.xpose.msra.mxu0 0
        %1123 = vmatpush.bf16.xpose.msra.mxu0 0
        %1124 = vmatpush.bf16.xpose.msra.mxu0 0
        %1125 = vmatpush.bf16.xpose.msra.mxu0 %v1116
        %1126 = vmatmul.bf16.gmra.mxu0 %v1113
        %v1127 = vpop.f32.mrf.mxu0
        %v1128 = vadd.f32 %v1109, %v1127
        %v1129 = vpop.f32.mrf.mxu0
        %1130 = vdwg.mxu0
        %v1132 = vsel %vm1111, %v1100, 0
        %v1135 = vsel %vm1111, %v1104, 0
        %1137 = vmatpush.bf16.xpose.msra.mxu0 0
        %1138 = vmatpush.bf16.xpose.msra.mxu0 0
        %1139 = vmatpush.bf16.xpose.msra.mxu0 0
        %1140 = vmatpush.bf16.xpose.msra.mxu0 0
        %1141 = vmatpush.bf16.xpose.msra.mxu0 0
        %1142 = vmatpush.bf16.xpose.msra.mxu0 0
        %1143 = vmatpush.bf16.xpose.msra.mxu0 0
        %1144 = vmatpush.bf16.xpose.msra.mxu0 %v1135
        %1145 = vmatmul.bf16.gmra.mxu0 %v1132
        %v1146 = vpop.f32.mrf.mxu0
        %v1147 = vadd.f32 %v1109, %v1146
        %v1148 = vpop.f32.mrf.mxu0
        %1149 = vdwg.mxu0
        %v1151 = vsel %vm1111, %v1101, 0
        %v1154 = vsel %vm1111, %v1105, 0
        %1156 = vmatpush.bf16.xpose.msra.mxu0 0
        %1157 = vmatpush.bf16.xpose.msra.mxu0 0
        %1158 = vmatpush.bf16.xpose.msra.mxu0 0
        %1159 = vmatpush.bf16.xpose.msra.mxu0 0
        %1160 = vmatpush.bf16.xpose.msra.mxu0 0
        %1161 = vmatpush.bf16.xpose.msra.mxu0 0
        %1162 = vmatpush.bf16.xpose.msra.mxu0 0
        %1163 = vmatpush.bf16.xpose.msra.mxu0 %v1154
        %1164 = vmatmul.bf16.gmra.mxu0 %v1151
        %v1165 = vpop.f32.mrf.mxu0
        %v1166 = vadd.f32 %v1109, %v1165
        %v1167 = vpop.f32.mrf.mxu0
        %1168 = vdwg.mxu0
        %v1170 = vsel %vm1111, %v1102, 0
        %v1173 = vsel %vm1111, %v1106, 0
        %1175 = vmatpush.bf16.xpose.msra.mxu0 0
        %1176 = vmatpush.bf16.xpose.msra.mxu0 0
        %1177 = vmatpush.bf16.xpose.msra.mxu0 0
        %1178 = vmatpush.bf16.xpose.msra.mxu0 0
        %1179 = vmatpush.bf16.xpose.msra.mxu0 0
        %1180 = vmatpush.bf16.xpose.msra.mxu0 0
        %1181 = vmatpush.bf16.xpose.msra.mxu0 0
        %1182 = vmatpush.bf16.xpose.msra.mxu0 %v1173
        %1183 = vmatmul.bf16.gmra.mxu0 %v1170
        %v1184 = vpop.f32.mrf.mxu0
        %v1185 = vadd.f32 %v1109, %v1184
        %v1186 = vpop.f32.mrf.mxu0
        %1187 = vdwg.mxu0
        %vm1188 = vcmask 64512
        %v1189 = vsel %vm1188, %v1128, -inf
        %1190 = vmax.xlane.f32.xlu0 %v1189
        %v1191 = vpop.xlane.xlu0 %1190
        %v1192 = vsel %vm1188, %v1147, -inf
        %1193 = vmax.xlane.f32.xlu0 %v1192
        %v1194 = vpop.xlane.xlu0 %1193
        %v1195 = vsel %vm1188, %v1166, -inf
        %1196 = vmax.xlane.f32.xlu0 %v1195
        %v1197 = vpop.xlane.xlu0 %1196
        %v1198 = vsel %vm1188, %v1185, -inf
        %1199 = vmax.xlane.f32.xlu0 %v1198
        %v1200 = vpop.xlane.xlu0 %1199
        %v1201 = vsub.f32 %v1128, %v1191
        %v1202 = vsub.f32 %v1147, %v1194
        %v1203 = vsub.f32 %v1166, %v1197
        %v1204 = vsub.f32 %v1185, %v1200
        %v1205 = vmul.f32 %v1201, 1.442695
        %v1206 = vpow.pop %v1205
        %v1207 = vmul.f32 %v1202, 1.442695
        %v1208 = vpow.pop %v1207
        %v1209 = vmul.f32 %v1203, 1.442695
        %v1210 = vpow.pop %v1209
        %v1211 = vmul.f32 %v1204, 1.442695
        %v1212 = vpow.pop %v1211
        %v1213 = vsel %vm1188, %v1206, 0.0
        %1214 = vadd.xlane.f32.xlu0 %v1213
        %v1215 = vpop.xlane.xlu0 %1214
        %v1216 = vsel %vm1188, %v1208, 0.0
        %1217 = vadd.xlane.f32.xlu0 %v1216
        %v1218 = vpop.xlane.xlu0 %1217
        %v1219 = vsel %vm1188, %v1210, 0.0
        %1220 = vadd.xlane.f32.xlu0 %v1219
        %v1221 = vpop.xlane.xlu0 %1220
        %v1222 = vsel %vm1188, %v1212, 0.0
        %1223 = vadd.xlane.f32.xlu0 %v1222
        %v1224 = vpop.xlane.xlu0 %1223
        %v1225 = vpack.c.bf16 %v1206, %v1206
        %v1226 = vpack.c.bf16 %v1208, %v1208
        %v1227 = vpack.c.bf16 %v1210, %v1210
        %v1228 = vpack.c.bf16 %v1212, %v1212
        %v1229 = vld [vmem:[#allocation3] sm:$0xf]
        %v1230 = vld [vmem:[#allocation3 + $0x4] sm:$0xf]
        %v1231 = vld [vmem:[#allocation3 + $0x8] sm:$0xf]
        %v1232 = vld [vmem:[#allocation3 + $0xc] sm:$0xf]
        %v1234 = vsel %vm1188, %v1225, 0
        %vm1236 = vcmask 1043456
        %v1238 = vsel %vm1236, %v1229, 0
        %1240 = vmatpush.bf16.msra.mxu0 0
        %1241 = vmatpush.bf16.msra.mxu0 0
        %1242 = vmatpush.bf16.msra.mxu0 0
        %1243 = vmatpush.bf16.msra.mxu0 0
        %1244 = vmatpush.bf16.msra.mxu0 0
        %1245 = vmatpush.bf16.msra.mxu0 0
        %1246 = vmatpush.bf16.msra.mxu0 0
        %1247 = vmatpush.bf16.msra.mxu0 %v1238
        %1248 = vmatmul.bf16.gmra.mxu0 %v1234
        %v1249 = vpop.f32.mrf.mxu0
        %v1250 = vadd.f32 0.0, %v1249
        %v1251 = vpop.f32.mrf.mxu0
        %1252 = vdwg.mxu0
        %v1254 = vsel %vm1188, %v1226, 0
        %v1257 = vsel %vm1236, %v1230, 0
        %1259 = vmatpush.bf16.msra.mxu0 0
        %1260 = vmatpush.bf16.msra.mxu0 0
        %1261 = vmatpush.bf16.msra.mxu0 0
        %1262 = vmatpush.bf16.msra.mxu0 0
        %1263 = vmatpush.bf16.msra.mxu0 0
        %1264 = vmatpush.bf16.msra.mxu0 0
        %1265 = vmatpush.bf16.msra.mxu0 0
        %1266 = vmatpush.bf16.msra.mxu0 %v1257
        %1267 = vmatmul.bf16.gmra.mxu0 %v1254
        %v1268 = vpop.f32.mrf.mxu0
        %v1269 = vadd.f32 0.0, %v1268
        %v1270 = vpop.f32.mrf.mxu0
        %1271 = vdwg.mxu0
        %v1273 = vsel %vm1188, %v1227, 0
        %v1276 = vsel %vm1236, %v1231, 0
        %1278 = vmatpush.bf16.msra.mxu0 0
        %1279 = vmatpush.bf16.msra.mxu0 0
        %1280 = vmatpush.bf16.msra.mxu0 0
        %1281 = vmatpush.bf16.msra.mxu0 0
        %1282 = vmatpush.bf16.msra.mxu0 0
        %1283 = vmatpush.bf16.msra.mxu0 0
        %1284 = vmatpush.bf16.msra.mxu0 0
        %1285 = vmatpush.bf16.msra.mxu0 %v1276
        %1286 = vmatmul.bf16.gmra.mxu0 %v1273
        %v1287 = vpop.f32.mrf.mxu0
        %v1288 = vadd.f32 0.0, %v1287
        %v1289 = vpop.f32.mrf.mxu0
        %1290 = vdwg.mxu0
        %v1292 = vsel %vm1188, %v1228, 0
        %v1295 = vsel %vm1236, %v1232, 0
        %1297 = vmatpush.bf16.msra.mxu0 0
        %1298 = vmatpush.bf16.msra.mxu0 0
        %1299 = vmatpush.bf16.msra.mxu0 0
        %1300 = vmatpush.bf16.msra.mxu0 0
        %1301 = vmatpush.bf16.msra.mxu0 0
        %1302 = vmatpush.bf16.msra.mxu0 0
        %1303 = vmatpush.bf16.msra.mxu0 0
        %1304 = vmatpush.bf16.msra.mxu0 %v1295
        %1305 = vmatmul.bf16.gmra.mxu0 %v1292
        %v1306 = vpop.f32.mrf.mxu0
        %v1307 = vadd.f32 0.0, %v1306
        %v1308 = vpop.f32.mrf.mxu0
        %1309 = vdwg.mxu0
        %v1310 = vrcp.pop %v1215
        %v1311 = vrcp.pop %v1218
        %v1312 = vrcp.pop %v1221
        %v1313 = vrcp.pop %v1224
        %v1314 = vmul.f32 %v1250, %v1310
        %v1315 = vmul.f32 %v1269, %v1311
        %v1316 = vmul.f32 %v1288, %v1312
        %v1317 = vmul.f32 %v1307, %v1313
        %v1318 = vrot.slane %v1316, 4
        %v1319 = vsel %vm989, %v1318, %v1314
        %v1320 = vrot.slane %v1314, 4
        %v1321 = vsel %vm989, %v1316, %v1320
        %v1323 = vunpack.c.l.s4 1983009808
        %v1324 = vunpack.c.0.s8 %v1323
        %v1325 = vperm.slane %v1319, %v1324
        %v1327 = vunpack.c.l.s4 1983009808
        %v1328 = vunpack.c.0.s8 %v1327
        %v1329 = vperm.slane %v1321, %v1328
        %v1330 = vrot.slane %v1317, 4
        %v1331 = vsel %vm989, %v1330, %v1315
        %v1332 = vrot.slane %v1315, 4
        %v1333 = vsel %vm989, %v1317, %v1332
        %v1335 = vunpack.c.l.s4 1983009808
        %v1336 = vunpack.c.0.s8 %v1335
        %v1337 = vperm.slane %v1331, %v1336
        %v1339 = vunpack.c.l.s4 1983009808
        %v1340 = vunpack.c.0.s8 %v1339
        %v1341 = vperm.slane %v1333, %v1340
        %v1342 = vrot.slane %v1337, 4
        %v1343 = vsel %vm989, %v1342, %v1325
        %v1344 = vrot.slane %v1325, 4
        %v1345 = vsel %vm989, %v1337, %v1344
        %v1347 = vunpack.c.l.s4 1934713408
        %v1348 = vunpack.c.0.s8 %v1347
        %v1349 = vperm.slane %v1343, %v1348
        %v1351 = vunpack.c.l.s4 1934713408
        %v1352 = vunpack.c.0.s8 %v1351
        %v1353 = vperm.slane %v1345, %v1352
        %v1354 = vrot.slane %v1341, 4
        %v1355 = vsel %vm989, %v1354, %v1329
        %v1356 = vrot.slane %v1329, 4
        %v1357 = vsel %vm989, %v1341, %v1356
        %v1359 = vunpack.c.l.s4 1934713408
        %v1360 = vunpack.c.0.s8 %v1359
        %v1361 = vperm.slane %v1355, %v1360
        %v1363 = vunpack.c.l.s4 1934713408
        %v1364 = vunpack.c.0.s8 %v1363
        %v1365 = vperm.slane %v1357, %v1364
        %v1366 = vrot.slane %v1349, 4
        %v1367 = vsel %vm989, 0.0, %v1366
        %v1368 = vrot.slane %v1353, 4
        %v1369 = vsel %vm989, 0.0, %v1368
        %v1370 = vrot.slane %v1361, 4
        %v1371 = vsel %vm989, 0.0, %v1370
        %v1372 = vrot.slane %v1365, 4
        %v1373 = vsel %vm989, 0.0, %v1372
        %v1374 = vsel %vm989, %v1368, %v1349
        %v1376 = vunpack.c.l.s4 1983009808
        %v1377 = vunpack.c.0.s8 %v1376
        %v1378 = vperm.slane %v1374, %v1377
        %v1379 = vrot.slane %v1369, 4
        %v1380 = vsel %vm989, %v1379, %v1367
        %v1382 = vunpack.c.l.s4 1983009808
        %v1383 = vunpack.c.0.s8 %v1382
        %v1384 = vperm.slane %v1380, %v1383
        %v1385 = vsel %vm989, %v1372, %v1361
        %v1387 = vunpack.c.l.s4 1983009808
        %v1388 = vunpack.c.0.s8 %v1387
        %v1389 = vperm.slane %v1385, %v1388
        %v1390 = vrot.slane %v1373, 4
        %v1391 = vsel %vm989, %v1390, %v1371
        %v1393 = vunpack.c.l.s4 1983009808
        %v1394 = vunpack.c.0.s8 %v1393
        %v1395 = vperm.slane %v1391, %v1394
        %v1396 = vrot.slane %v1384, 4
        %v1397 = vsel %vm989, %v1396, %v1378
        %v1398 = vrot.slane %v1378, 4
        %v1399 = vsel %vm989, %v1384, %v1398
        %v1401 = vunpack.c.l.s4 1934713408
        %v1402 = vunpack.c.0.s8 %v1401
        %v1403 = vperm.slane %v1397, %v1402
        %v1405 = vunpack.c.l.s4 1934713408
        %v1406 = vunpack.c.0.s8 %v1405
        %v1407 = vperm.slane %v1399, %v1406
        %v1408 = vrot.slane %v1395, 4
        %v1409 = vsel %vm989, %v1408, %v1389
        %v1410 = vrot.slane %v1389, 4
        %v1411 = vsel %vm989, %v1395, %v1410
        %v1413 = vunpack.c.l.s4 1934713408
        %v1414 = vunpack.c.0.s8 %v1413
        %v1415 = vperm.slane %v1409, %v1414
        %v1417 = vunpack.c.l.s4 1934713408
        %v1418 = vunpack.c.0.s8 %v1417
        %v1419 = vperm.slane %v1411, %v1418
        %v1420 = vrot.slane %v1415, 4
        %v1421 = vsel %vm989, %v1420, %v1403
        %v1422 = vrot.slane %v1403, 4
        %v1423 = vsel %vm989, %v1415, %v1422
        %v1424 = vrot.slane %v1419, 4
        %v1425 = vsel %vm989, %v1424, %v1407
        %v1426 = vrot.slane %v1407, 4
        %v1427 = vsel %vm989, %v1419, %v1426
        %1429 = vrot.lane.b32.xlu0 %v1423, 8
        %v1430 = vpop.permute.xlu0 %1429
        %1433 = vrot.lane.b32.xlu0 %v1425, 16
        %v1434 = vpop.permute.xlu0 %1433
        %1437 = vrot.lane.b32.xlu0 %v1427, 24
        %v1438 = vpop.permute.xlu0 %1437
        %v1440 = vsel %vm1188, %v1421, %v1430
        %v1441 = vsel %vm1111, %v1440, %v1434
        %vm1442 = vcmask 195584
        %v1443 = vsel %vm1442, %v1441, %v1438
        %1444 = vst.msk [vmem:[%s484] sm:$0xff] %vm961, %v1443
        %s1445 = sand.u32 %s257, 1
        %s1446 = scalar_lea.sflag [#allocation6], %s1445
        %s1447 = sand.u32 %s257, 1
        %s1448 = smul.addr %s1447, 8
        %s1449 = scalar_lea.vmem [#allocation15], %s1448
        // Predicated region
        $region85: #{tpu_custom_call.1} parent=55 // pred_check
          %p1450 = pneg %p267
        $region86: #{tpu_custom_call.1} parent=55 // pred_check_branch
          %1452 = sbr.rel (%p1450) target = $region88
        $region87: #{tpu_custom_call.1} parent=55 // pred_region
          %1454 = vsyncadd %s1446, 0
          %s1455 = sadd.s32 %s36, %s35
          %s1456 = smul.addr %s1455, 8
          %s1457 = scalar_lea.hbm %s9, %s1456
          %s1459 = sshll.u32 %s1449, 4
          %s1460 = int_to_ptr.vmem [resolvable:$true] %s1459
          %s1461 = sshll.u32 %s1457, 4
          %s1462 = int_to_ptr.hbm [resolvable:$true] %s1461
          %1464 = dma.vmem_to_hbm [thread:$0]  %s1460, 128, %s1462, %s1446
        $region88: #{tpu_custom_call.1} parent=55 // pred_fallthru
          _
      $region56: #{tpu_custom_call.1} parent=5 // pred_fallthru
        _
      %p1465 = scmp.le.s32.totalorder 2, %s26
      // Predicated region
      $region89: #{tpu_custom_call.1} parent=5 // pred_check
        %p1466 = pneg %p1465
      $region90: #{tpu_custom_call.1} parent=5 // pred_check_branch
        %1468 = sbr.rel (%p1466) target = $region92
      $region91: #{tpu_custom_call.1} parent=5 // pred_region
        %s1469 = ssub.s32 %s26, 2
        // Predicated region
        $region93: #{tpu_custom_call.1} parent=91 // pred_check
          %p1470 = pneg %p273
        $region94: #{tpu_custom_call.1} parent=91 // pred_check_branch
          %1472 = sbr.rel (%p1470) target = $region96
        $region95: #{tpu_custom_call.1} parent=91 // pred_region
          %s1473 = sand.u32 %s258, 1
          %s1474 = scalar_lea.sflag [#allocation6], %s1473
          %s1475 = sand.u32 %s258, 1
          %s1476 = smul.addr %s1475, 8
          %s1477 = scalar_lea.vmem [#allocation15], %s1476
          %1479 = dma.done %s1474, 128
        $region96: #{tpu_custom_call.1} parent=91 // pred_fallthru
          _
      $region92: #{tpu_custom_call.1} parent=5 // pred_fallthru
        _
    $region6: #{tpu_custom_call.1} parent=1 // loop_footer
      %s30 = sadd.s32 1, %s26
    $region7: #{tpu_custom_call.1} parent=1 // loop_footer_branch
      %25 = sbr.rel target = $region3
    $region8: #{tpu_custom_call.1} parent=1 // loop_exit
      _
    %1480 = vsyncpa [#allocation5], 1
    %s1481 = scalar_lea.sflag [#allocation5], 1
    %1482 = vsyncpa %s1481, 1
    %1483 = vsyncpa [#allocation8], 1
    %s1484 = scalar_lea.sflag [#allocation8], 1
    %1485 = vsyncpa %s1484, 1
    %1486 = vsyncpa [#allocation11], 1
    %1487 = vsyncpa [#allocation14], 1
    %1488 = vsyncpa [#allocation6], 1
    %s1489 = scalar_lea.sflag [#allocation6], 1
    %1490 = vsyncpa %s1489, 1

// kernel: tpu_custom_call.1
$region0: #{tpu_custom_call.1}
  #allocation0 [shape = 'u32[]', space=smem, size = 0x4, offset = 0x4, fixed_abs, tag = 'smem constant byte address 0x4 - core index']
  #allocation1 [shape = 'u32[72,128]{1,0:T(1,128)}', space=vmem, size = 0x9000, scoped, tag = 'internal scratch']
  #allocation2 [shape = 'bf16[4,8,16]{2,1,0:T(8,128)(2,1)}', space=vmem, size = 0x2000, scoped, tag = 'scratch operand']
  #allocation3 [shape = 'bf16[4,8,8]{2,1,0:T(8,128)(2,1)}', space=vmem, size = 0x2000, scoped, tag = 'scratch operand']
  %s0 = inlined_call_operand.hbm [shape: bf16[2,8,32], index: 0, kind: input, shape index: {}]
  %s1 = inlined_call_operand.hbm [shape: bf16[2,8,32], index: 1, kind: input, shape index: {}]
  %s2 = inlined_call_operand.hbm [shape: f32[2,1,8], index: 2, kind: input, shape index: {}]
  %s3 = inlined_call_operand.hbm [shape: bf16[32,64], index: 3, kind: input, shape index: {}]
  %s4 = inlined_call_operand.vmem [shape: f32[1,64], index: 4, kind: input, shape index: {}]
  %s5 = inlined_call_operand.hbm [shape: bf16[32,64], index: 5, kind: input, shape index: {}]
  %s6 = inlined_call_operand.vmem [shape: f32[1,64], index: 6, kind: input, shape index: {}]
  %s7 = inlined_call_operand.hbm [shape: bf16[32,32], index: 7, kind: input, shape index: {}]
  %s8 = inlined_call_operand.vmem [shape: f32[1,32], index: 8, kind: input, shape index: {}]
  %s9 = inlined_call_operand.hbm [shape: f32[2,8,32], index: 9, kind: output, shape index: {}]
  %s10 = sld [smem:[#allocation0]]
  $region97: #{tpu_custom_call.1} parent=0
    _
  %s12 = ssub.s32 1, %s10
  %s13 = scalar_select 0, %s12, %s10
  $region1: #{tpu_custom_call.1} parent=0
    #allocation4 [shape = 'u8[4096]{0}', space=vmem, size = 0x1000, scoped, tag = 'input window, operand 0']
    #allocation5 [shape = 's32[2]{0}', space=sflag, size = 0x8, scoped, tag = 'scoped memory for tpu_custom_call.1']
    #allocation6 [shape = 's32[2]{0}', space=sflag, size = 0x8, scoped, tag = 'scoped memory for tpu_custom_call.1']
    #allocation7 [shape = 'u8[4096]{0}', space=vmem, size = 0x1000, scoped, tag = 'input window, operand 1']
    #allocation8 [shape = 's32[2]{0}', space=sflag, size = 0x8, scoped, tag = 'scoped memory for tpu_custom_call.1']
    #allocation9 [shape = 'u8[1024]{0}', space=vmem, size = 0x400, scoped, tag = 'input window, operand 2']
    #allocation10 [shape = 'u8[8192]{0}', space=vmem, size = 0x2000, scoped, tag = 'input window, operand 3, single buffered']
    #allocation11 [shape = 's32[1]{0}', space=sflag, size = 0x4, scoped, tag = 'scoped memory for tpu_custom_call.1']
    #allocation12 [shape = 'u8[8192]{0}', space=vmem, size = 0x2000, scoped, tag = 'input window, operand 5, single buffered']
    #allocation13 [shape = 'u8[8192]{0}', space=vmem, size = 0x2000, scoped, tag = 'input window, operand 7, single buffered']
    #allocation14 [shape = 's32[1]{0}', space=sflag, size = 0x4, scoped, tag = 'scoped memory for tpu_custom_call.1']
    #allocation15 [shape = 'u8[8192]{0}', space=vmem, size = 0x2000, scoped, tag = 'output window, operand 0']
    %14 = vsyncpa [#allocation5], 0
    %s15 = scalar_lea.sflag [#allocation5], 1
    %16 = vsyncpa %s15, 0
    %17 = vsyncpa [#allocation8], 0
    %s18 = scalar_lea.sflag [#allocation8], 1
    %19 = vsyncpa %s18, 0
    %20 = vsyncpa [#allocation11], 0
    %21 = vsyncpa [#allocation14], 0
    %22 = vsyncpa [#allocation6], 0
    %s23 = scalar_lea.sflag [#allocation6], 1
    %24 = vsyncpa %s23, 0
    loop: start=0, step=1, limit=4
    $region2: #{tpu_custom_call.1} parent=1 // loop_pre_header
      _
    $region3: #{tpu_custom_call.1} parent=1 // loop_header
      %s26 = sphi 0, %s30
      %p27 = scmp.ge.s32.totalorder %s26, 4
      %s33 = sphi 0, %s45
      %s34 = sphi 0, %s41
      %s35 = sphi 0, %s33
      %s36 = sphi 0, %s34
      %s37 = sphi 0, %s35
      %s38 = sphi 0, %s36
      %s48 = sphi 0, %s50
      %s51 = sphi 0, %s48
      %s52 = sphi 0, %s51
      %s68 = sphi 0, %s52
      %s74 = sphi 0, %s76
      %s77 = sphi 0, %s74
      %s78 = sphi 0, %s77
      %s94 = sphi 0, %s78
      %s100 = sphi 0, %s102
      %s103 = sphi 0, %s100
      %s104 = sphi 0, %s103
      %s120 = sphi 0, %s104
      %s124 = sphi 0, %s124
      %s126 = sphi 0, %s124
      %s127 = sphi 0, %s126
      %s141 = sphi 0, %s127
      %s145 = sphi 0, %s145
      %s147 = sphi 0, %s145
      %s148 = sphi 0, %s147
      %s162 = sphi 0, %s148
      %s166 = sphi 0, %s166
      %s168 = sphi 0, %s166
      %s169 = sphi 0, %s168
      %s183 = sphi 0, %s169
      %s187 = sphi 0, %s187
      %s189 = sphi 0, %s187
      %s190 = sphi 0, %s189
      %s204 = sphi 0, %s190
      %s208 = sphi 0, %s208
      %s210 = sphi 0, %s208
      %s211 = sphi 0, %s210
      %s225 = sphi 0, %s211
      %s229 = sphi 0, %s229
      %s231 = sphi 0, %s229
      %s232 = sphi 0, %s231
      %s246 = sphi 0, %s232
      %s254 = sphi 0, %s256
      %s257 = sphi 0, %s254
      %s258 = sphi 0, %s257
      %s274 = sphi 0, %s258
    $region4: #{tpu_custom_call.1} parent=1 // loop_header_branch
      %29 = sbr.rel (%p27) target = $region8
    $region5: #{tpu_custom_call.1} parent=1 // loop_body
      %s31 = ssub.s32 %s26, 1
      %s32 = ssub.s32 %s26, 2
      %s39 = sadd.s32 1, %s34
      %p40 = scmp.ge.s32.totalorder %s39, 1
      %s41 = scalar_select %p40, 0, %s39
      %s42 = sadd.s32 1, %s33
      %s43 = scalar_select %p40, %s42, %s33
      %p44 = scmp.ge.s32.totalorder %s43, 2
      %s45 = scalar_select %p44, 0, %s43
      %s46 = ssub.s32 %s33, %s45
      %p47 = scmp.eq.s32.totalorder %s46, 0
      %s49 = sadd.s32 %s48, 1
      %s50 = scalar_select %p47, %s48, %s49
      %p53 = pneg %p47
      %p54 = scmp.eq.s32.totalorder %s26, 1
      %p55 = por %p53, %p54
      %p56 = scmp.ne.s32.totalorder %s48, %s51
      %p57 = scmp.eq.s32.totalorder %s26, 0
      %p58 = por %p56, %p57
      %p59 = scmp.ne.s32.totalorder %s48, %s51
      %p60 = scmp.eq.s32.totalorder %s31, 1
      %p61 = por %p59, %p60
      %p62 = scmp.ne.s32.totalorder %s51, %s52
      %p63 = scmp.eq.s32.totalorder %s31, 0
      %p64 = por %p62, %p63
      %p65 = scmp.ne.s32.totalorder %s51, %s52
      %p66 = scmp.eq.s32.totalorder %s32, 1
      %p67 = por %p65, %p66
      %p69 = scmp.ne.s32.totalorder %s52, %s68
      %p70 = scmp.eq.s32.totalorder %s32, 0
      %p71 = por %p69, %p70
      %s72 = ssub.s32 %s33, %s45
      %p73 = scmp.eq.s32.totalorder %s72, 0
      %s75 = sadd.s32 %s74, 1
      %s76 = scalar_select %p73, %s74, %s75
      %p79 = pneg %p73
      %p80 = scmp.eq.s32.totalorder %s26, 1
      %p81 = por %p79, %p80
      %p82 = scmp.ne.s32.totalorder %s74, %s77
      %p83 = scmp.eq.s32.totalorder %s26, 0
      %p84 = por %p82, %p83
      %p85 = scmp.ne.s32.totalorder %s74, %s77
      %p86 = scmp.eq.s32.totalorder %s31, 1
      %p87 = por %p85, %p86
      %p88 = scmp.ne.s32.totalorder %s77, %s78
      %p89 = scmp.eq.s32.totalorder %s31, 0
      %p90 = por %p88, %p89
      %p91 = scmp.ne.s32.totalorder %s77, %s78
      %p92 = scmp.eq.s32.totalorder %s32, 1
      %p93 = por %p91, %p92
      %p95 = scmp.ne.s32.totalorder %s78, %s94
      %p96 = scmp.eq.s32.totalorder %s32, 0
      %p97 = por %p95, %p96
      %s98 = ssub.s32 %s33, %s45
      %p99 = scmp.eq.s32.totalorder %s98, 0
      %s101 = sadd.s32 %s100, 1
      %s102 = scalar_select %p99, %s100, %s101
      %p105 = pneg %p99
      %p106 = scmp.eq.s32.totalorder %s26, 1
      %p107 = por %p105, %p106
      %p108 = scmp.ne.s32.totalorder %s100, %s103
      %p109 = scmp.eq.s32.totalorder %s26, 0
      %p110 = por %p108, %p109
      %p111 = scmp.ne.s32.totalorder %s100, %s103
      %p112 = scmp.eq.s32.totalorder %s31, 1
      %p113 = por %p111, %p112
      %p114 = scmp.ne.s32.totalorder %s103, %s104
      %p115 = scmp.eq.s32.totalorder %s31, 0
      %p116 = por %p114, %p115
      %p117 = scmp.ne.s32.totalorder %s103, %s104
      %p118 = scmp.eq.s32.totalorder %s32, 1
      %p119 = por %p117, %p118
      %p121 = scmp.ne.s32.totalorder %s104, %s120
      %p122 = scmp.eq.s32.totalorder %s32, 0
      %p123 = por %p121, %p122
      %s125 = sadd.s32 %s124, 1
      %p128 = scmp.eq.s32.totalorder %s26, 1
      %p129 = scmp.ne.s32.totalorder %s124, %s126
      %p130 = scmp.eq.s32.totalorder %s26, 0
      %p131 = por %p129, %p130
      %p132 = scmp.ne.s32.totalorder %s124, %s126
      %p133 = scmp.eq.s32.totalorder %s31, 1
      %p134 = por %p132, %p133
      %p135 = scmp.ne.s32.totalorder %s126, %s127
      %p136 = scmp.eq.s32.totalorder %s31, 0
      %p137 = por %p135, %p136
      %p138 = scmp.ne.s32.totalorder %s126, %s127
      %p139 = scmp.eq.s32.totalorder %s32, 1
      %p140 = por %p138, %p139
      %p142 = scmp.ne.s32.totalorder %s127, %s141
      %p143 = scmp.eq.s32.totalorder %s32, 0
      %p144 = por %p142, %p143
      %s146 = sadd.s32 %s145, 1
      %p149 = scmp.eq.s32.totalorder %s26, 1
      %p150 = scmp.ne.s32.totalorder %s145, %s147
      %p151 = scmp.eq.s32.totalorder %s26, 0
      %p152 = por %p150, %p151
      %p153 = scmp.ne.s32.totalorder %s145, %s147
      %p154 = scmp.eq.s32.totalorder %s31, 1
      %p155 = por %p153, %p154
      %p156 = scmp.ne.s32.totalorder %s147, %s148
      %p157 = scmp.eq.s32.totalorder %s31, 0
      %p158 = por %p156, %p157
      %p159 = scmp.ne.s32.totalorder %s147, %s148
      %p160 = scmp.eq.s32.totalorder %s32, 1
      %p161 = por %p159, %p160
      %p163 = scmp.ne.s32.totalorder %s148, %s162
      %p164 = scmp.eq.s32.totalorder %s32, 0
      %p165 = por %p163, %p164
      %s167 = sadd.s32 %s166, 1
      %p170 = scmp.eq.s32.totalorder %s26, 1
      %p171 = scmp.ne.s32.totalorder %s166, %s168
      %p172 = scmp.eq.s32.totalorder %s26, 0
      %p173 = por %p171, %p172
      %p174 = scmp.ne.s32.totalorder %s166, %s168
      %p175 = scmp.eq.s32.totalorder %s31, 1
      %p176 = por %p174, %p175
      %p177 = scmp.ne.s32.totalorder %s168, %s169
      %p178 = scmp.eq.s32.totalorder %s31, 0
      %p179 = por %p177, %p178
      %p180 = scmp.ne.s32.totalorder %s168, %s169
      %p181 = scmp.eq.s32.totalorder %s32, 1
      %p182 = por %p180, %p181
      %p184 = scmp.ne.s32.totalorder %s169, %s183
      %p185 = scmp.eq.s32.totalorder %s32, 0
      %p186 = por %p184, %p185
      %s188 = sadd.s32 %s187, 1
      %p191 = scmp.eq.s32.totalorder %s26, 1
      %p192 = scmp.ne.s32.totalorder %s187, %s189
      %p193 = scmp.eq.s32.totalorder %s26, 0
      %p194 = por %p192, %p193
      %p195 = scmp.ne.s32.totalorder %s187, %s189
      %p196 = scmp.eq.s32.totalorder %s31, 1
      %p197 = por %p195, %p196
      %p198 = scmp.ne.s32.totalorder %s189, %s190
      %p199 = scmp.eq.s32.totalorder %s31, 0
      %p200 = por %p198, %p199
      %p201 = scmp.ne.s32.totalorder %s189, %s190
      %p202 = scmp.eq.s32.totalorder %s32, 1
      %p203 = por %p201, %p202
      %p205 = scmp.ne.s32.totalorder %s190, %s204
      %p206 = scmp.eq.s32.totalorder %s32, 0
      %p207 = por %p205, %p206
      %s209 = sadd.s32 %s208, 1
      %p212 = scmp.eq.s32.totalorder %s26, 1
      %p213 = scmp.ne.s32.totalorder %s208, %s210
      %p214 = scmp.eq.s32.totalorder %s26, 0
      %p215 = por %p213, %p214
      %p216 = scmp.ne.s32.totalorder %s208, %s210
      %p217 = scmp.eq.s32.totalorder %s31, 1
      %p218 = por %p216, %p217
      %p219 = scmp.ne.s32.totalorder %s210, %s211
      %p220 = scmp.eq.s32.totalorder %s31, 0
      %p221 = por %p219, %p220
      %p222 = scmp.ne.s32.totalorder %s210, %s211
      %p223 = scmp.eq.s32.totalorder %s32, 1
      %p224 = por %p222, %p223
      %p226 = scmp.ne.s32.totalorder %s211, %s225
      %p227 = scmp.eq.s32.totalorder %s32, 0
      %p228 = por %p226, %p227
      %s230 = sadd.s32 %s229, 1
      %p233 = scmp.eq.s32.totalorder %s26, 1
      %p234 = scmp.ne.s32.totalorder %s229, %s231
      %p235 = scmp.eq.s32.totalorder %s26, 0
      %p236 = por %p234, %p235
      %p237 = scmp.ne.s32.totalorder %s229, %s231
      %p238 = scmp.eq.s32.totalorder %s31, 1
      %p239 = por %p237, %p238
      %p240 = scmp.ne.s32.totalorder %s231, %s232
      %p241 = scmp.eq.s32.totalorder %s31, 0
      %p242 = por %p240, %p241
      %p243 = scmp.ne.s32.totalorder %s231, %s232
      %p244 = scmp.eq.s32.totalorder %s32, 1
      %p245 = por %p243, %p244
      %p247 = scmp.ne.s32.totalorder %s232, %s246
      %p248 = scmp.eq.s32.totalorder %s32, 0
      %p249 = por %p247, %p248
      %s250 = ssub.s32 %s33, %s45
      %s251 = ssub.s32 %s34, %s41
      %s252 = sor.u32 %s250, %s251
      %p253 = scmp.eq.s32.totalorder %s252, 0
      %s255 = sadd.s32 %s254, 1
      %s256 = scalar_select %p253, %s254, %s255
      %p259 = pneg %p253
      %p260 = scmp.eq.s32.totalorder %s26, 1
      %p261 = por %p259, %p260
      %p262 = scmp.ne.s32.totalorder %s254, %s257
      %p263 = scmp.eq.s32.totalorder %s26, 0
      %p264 = por %p262, %p263
      %p265 = scmp.ne.s32.totalorder %s254, %s257
      %p266 = scmp.eq.s32.totalorder %s31, 1
      %p267 = por %p265, %p266
      %p268 = scmp.ne.s32.totalorder %s257, %s258
      %p269 = scmp.eq.s32.totalorder %s31, 0
      %p270 = por %p268, %p269
      %p271 = scmp.ne.s32.totalorder %s257, %s258
      %p272 = scmp.eq.s32.totalorder %s32, 1
      %p273 = por %p271, %p272
      %p275 = scmp.ne.s32.totalorder %s258, %s274
      %p276 = scmp.eq.s32.totalorder %s32, 0
      %p277 = por %p275, %p276
      %p278 = scmp.le.s32.totalorder 1, %s26
      %p279 = scmp.lt.s32.totalorder %s26, 3
      %p280 = pnand %p278, %p279
      %p281 = pneg %p280
      // Predicated region
      $region9: #{tpu_custom_call.1} parent=5 // pred_check
        _
      $region10: #{tpu_custom_call.1} parent=5 // pred_check_branch
        %283 = sbr.rel (%p280) target = $region12
      $region11: #{tpu_custom_call.1} parent=5 // pred_region
        %s284 = ssub.s32 %s26, 1
        // Predicated region
        $region13: #{tpu_custom_call.1} parent=11 // pred_check
          %p285 = pneg %p137
        $region14: #{tpu_custom_call.1} parent=11 // pred_check_branch
          %287 = sbr.rel (%p285) target = $region16
        $region15: #{tpu_custom_call.1} parent=11 // pred_region
          %289 = vsyncadd [#allocation11], 0
          %s290 = sshll.u32 %s3, 4
          %s291 = int_to_ptr.hbm [resolvable:$true] %s290
          %s292 = sshll.u32 [#allocation10], 4
          %s293 = int_to_ptr.vmem [resolvable:$true] %s292
          %298 = dma.hbm_to_vmem [thread:$0]  %s291, 256, %s293, [#allocation11], 64, 64, 4
        $region16: #{tpu_custom_call.1} parent=11 // pred_fallthru
          _
        // Predicated region
        $region17: #{tpu_custom_call.1} parent=11 // pred_check
          %p299 = pneg %p158
        $region18: #{tpu_custom_call.1} parent=11 // pred_check_branch
          %301 = sbr.rel (%p299) target = $region20
        $region19: #{tpu_custom_call.1} parent=11 // pred_region
          _
        $region20: #{tpu_custom_call.1} parent=11 // pred_fallthru
          _
        // Predicated region
        $region21: #{tpu_custom_call.1} parent=11 // pred_check
          %p302 = pneg %p179
        $region22: #{tpu_custom_call.1} parent=11 // pred_check_branch
          %304 = sbr.rel (%p302) target = $region24
        $region23: #{tpu_custom_call.1} parent=11 // pred_region
          %306 = vsyncadd [#allocation11], 0
          %s307 = sshll.u32 %s5, 4
          %s308 = int_to_ptr.hbm [resolvable:$true] %s307
          %s309 = sshll.u32 [#allocation12], 4
          %s310 = int_to_ptr.vmem [resolvable:$true] %s309
          %315 = dma.hbm_to_vmem [thread:$0]  %s308, 256, %s310, [#allocation11], 64, 64, 4
        $region24: #{tpu_custom_call.1} parent=11 // pred_fallthru
          _
        // Predicated region
        $region25: #{tpu_custom_call.1} parent=11 // pred_check
          %p316 = pneg %p200
        $region26: #{tpu_custom_call.1} parent=11 // pred_check_branch
          %318 = sbr.rel (%p316) target = $region28
        $region27: #{tpu_custom_call.1} parent=11 // pred_region
          _
        $region28: #{tpu_custom_call.1} parent=11 // pred_fallthru
          _
        // Predicated region
        $region29: #{tpu_custom_call.1} parent=11 // pred_check
          %p319 = pneg %p221
        $region30: #{tpu_custom_call.1} parent=11 // pred_check_branch
          %321 = sbr.rel (%p319) target = $region32
        $region31: #{tpu_custom_call.1} parent=11 // pred_region
          %323 = vsyncadd [#allocation14], 0
          %s324 = sshll.u32 %s7, 4
          %s325 = int_to_ptr.hbm [resolvable:$true] %s324
          %s326 = sshll.u32 [#allocation13], 4
          %s327 = int_to_ptr.vmem [resolvable:$true] %s326
          %332 = dma.hbm_to_vmem [thread:$0]  %s325, 256, %s327, [#allocation14], 64, 64, 4
        $region32: #{tpu_custom_call.1} parent=11 // pred_fallthru
          _
        // Predicated region
        $region33: #{tpu_custom_call.1} parent=11 // pred_check
          %p333 = pneg %p242
        $region34: #{tpu_custom_call.1} parent=11 // pred_check_branch
          %335 = sbr.rel (%p333) target = $region36
        $region35: #{tpu_custom_call.1} parent=11 // pred_region
          _
        $region36: #{tpu_custom_call.1} parent=11 // pred_fallthru
          _
      $region12: #{tpu_custom_call.1} parent=5 // pred_fallthru
        _
      %p336 = scmp.lt.s32.totalorder %s26, 2
      // Predicated region
      $region37: #{tpu_custom_call.1} parent=5 // pred_check
        %p337 = pneg %p336
      $region38: #{tpu_custom_call.1} parent=5 // pred_check_branch
        %339 = sbr.rel (%p337) target = $region40
      $region39: #{tpu_custom_call.1} parent=5 // pred_region
        // Predicated region
        $region41: #{tpu_custom_call.1} parent=39 // pred_check
          %p340 = pneg %p58
        $region42: #{tpu_custom_call.1} parent=39 // pred_check_branch
          %342 = sbr.rel (%p340) target = $region44
        $region43: #{tpu_custom_call.1} parent=39 // pred_region
          %s343 = sand.u32 %s48, 1
          %s344 = scalar_lea.sflag [#allocation5], %s343
          %s345 = sand.u32 %s48, 1
          %s346 = smul.addr %s345, 4
          %s347 = scalar_lea.vmem [#allocation4], %s346
          %349 = vsyncadd %s344, 0
          %s350 = smul.addr %s33, 4
          %s351 = scalar_lea.hbm %s0, %s350
          %s353 = sshll.u32 %s351, 4
          %s354 = int_to_ptr.hbm [resolvable:$true] %s353
          %s355 = sshll.u32 %s347, 4
          %s356 = int_to_ptr.vmem [resolvable:$true] %s355
          %358 = dma.hbm_to_vmem [thread:$0]  %s354, 64, %s356, %s344
        $region44: #{tpu_custom_call.1} parent=39 // pred_fallthru
          _
        // Predicated region
        $region45: #{tpu_custom_call.1} parent=39 // pred_check
          %p359 = pneg %p84
        $region46: #{tpu_custom_call.1} parent=39 // pred_check_branch
          %361 = sbr.rel (%p359) target = $region48
        $region47: #{tpu_custom_call.1} parent=39 // pred_region
          %s362 = sand.u32 %s26, 1
          %s363 = scalar_lea.sflag [#allocation8], %s362
          %s364 = sand.u32 %s74, 1
          %s365 = smul.addr %s364, 4
          %s366 = scalar_lea.vmem [#allocation7], %s365
          %368 = vsyncadd %s363, 0
          %s369 = smul.addr %s33, 4
          %s370 = scalar_lea.hbm %s1, %s369
          %s372 = sshll.u32 %s370, 4
          %s373 = int_to_ptr.hbm [resolvable:$true] %s372
          %s374 = sshll.u32 %s366, 4
          %s375 = int_to_ptr.vmem [resolvable:$true] %s374
          %377 = dma.hbm_to_vmem [thread:$0]  %s373, 64, %s375, %s363
        $region48: #{tpu_custom_call.1} parent=39 // pred_fallthru
          _
        // Predicated region
        $region49: #{tpu_custom_call.1} parent=39 // pred_check
          %p378 = pneg %p110
        $region50: #{tpu_custom_call.1} parent=39 // pred_check_branch
          %380 = sbr.rel (%p378) target = $region52
        $region51: #{tpu_custom_call.1} parent=39 // pred_region
          %s381 = sand.u32 %s26, 1
          %s382 = scalar_lea.sflag [#allocation8], %s381
          %s383 = sand.u32 %s100, 1
          %s384 = scalar_lea.vmem [#allocation9], %s383
          %386 = vsyncadd %s382, 0
          %s387 = scalar_lea.hbm %s2, %s33
          %s389 = sshll.u32 %s387, 4
          %s390 = int_to_ptr.hbm [resolvable:$true] %s389
          %s391 = sshll.u32 %s384, 4
          %s392 = int_to_ptr.vmem [resolvable:$true] %s391
          %394 = dma.hbm_to_vmem [thread:$0]  %s390, 16, %s392, %s382
        $region52: #{tpu_custom_call.1} parent=39 // pred_fallthru
          _
      $region40: #{tpu_custom_call.1} parent=5 // pred_fallthru
        _
      %p395 = scmp.le.s32.totalorder 1, %s26
      %p396 = scmp.lt.s32.totalorder %s26, 3
      %p397 = pnand %p395, %p396
      %p398 = pneg %p397
      // Predicated region
      $region53: #{tpu_custom_call.1} parent=5 // pred_check
        _
      $region54: #{tpu_custom_call.1} parent=5 // pred_check_branch
        %400 = sbr.rel (%p397) target = $region56
      $region55: #{tpu_custom_call.1} parent=5 // pred_region
        %s401 = ssub.s32 %s26, 1
        %s402 = sand.u32 %s51, 1
        %s403 = scalar_lea.sflag [#allocation5], %s402
        %s404 = sand.u32 %s51, 1
        %s405 = smul.addr %s404, 4
        %s406 = scalar_lea.vmem [#allocation4], %s405
        // Predicated region
        $region57: #{tpu_custom_call.1} parent=55 // pred_check
          %p407 = pneg %p64
        $region58: #{tpu_custom_call.1} parent=55 // pred_check_branch
          %409 = sbr.rel (%p407) target = $region60
        $region59: #{tpu_custom_call.1} parent=55 // pred_region
          %411 = dma.done %s403, 64
        $region60: #{tpu_custom_call.1} parent=55 // pred_fallthru
          _
        %s412 = sand.u32 %s31, 1
        %s413 = scalar_lea.sflag [#allocation8], %s412
        %s414 = sand.u32 %s77, 1
        %s415 = smul.addr %s414, 4
        %s416 = scalar_lea.vmem [#allocation7], %s415
        // Predicated region
        $region61: #{tpu_custom_call.1} parent=55 // pred_check
          %p417 = pneg %p90
        $region62: #{tpu_custom_call.1} parent=55 // pred_check_branch
          %419 = sbr.rel (%p417) target = $region64
        $region63: #{tpu_custom_call.1} parent=55 // pred_region
          %421 = dma.done %s413, 64
        $region64: #{tpu_custom_call.1} parent=55 // pred_fallthru
          _
        %s422 = sand.u32 %s31, 1
        %s423 = scalar_lea.sflag [#allocation8], %s422
        %s424 = sand.u32 %s103, 1
        %s425 = scalar_lea.vmem [#allocation9], %s424
        // Predicated region
        $region65: #{tpu_custom_call.1} parent=55 // pred_check
          %p426 = pneg %p116
        $region66: #{tpu_custom_call.1} parent=55 // pred_check_branch
          %428 = sbr.rel (%p426) target = $region68
        $region67: #{tpu_custom_call.1} parent=55 // pred_region
          %430 = dma.done %s423, 16
        $region68: #{tpu_custom_call.1} parent=55 // pred_fallthru
          _
        // Predicated region
        $region69: #{tpu_custom_call.1} parent=55 // pred_check
          %p431 = pneg %p137
        $region70: #{tpu_custom_call.1} parent=55 // pred_check_branch
          %433 = sbr.rel (%p431) target = $region72
        $region71: #{tpu_custom_call.1} parent=55 // pred_region
          %435 = dma.done [#allocation11], 256
        $region72: #{tpu_custom_call.1} parent=55 // pred_fallthru
          _
        // Predicated region
        $region73: #{tpu_custom_call.1} parent=55 // pred_check
          %p436 = pneg %p179
        $region74: #{tpu_custom_call.1} parent=55 // pred_check_branch
          %438 = sbr.rel (%p436) target = $region76
        $region75: #{tpu_custom_call.1} parent=55 // pred_region
          %440 = dma.done [#allocation11], 256
        $region76: #{tpu_custom_call.1} parent=55 // pred_fallthru
          _
        // Predicated region
        $region77: #{tpu_custom_call.1} parent=55 // pred_check
          %p441 = pneg %p221
        $region78: #{tpu_custom_call.1} parent=55 // pred_check_branch
          %443 = sbr.rel (%p441) target = $region80
        $region79: #{tpu_custom_call.1} parent=55 // pred_region
          %445 = dma.done [#allocation14], 256
        $region80: #{tpu_custom_call.1} parent=55 // pred_fallthru
          _
        %s446 = sand.u32 %s51, 1
        %s447 = scalar_lea.sflag [#allocation5], %s446
        %s448 = sand.u32 %s51, 1
        %s449 = smul.addr %s448, 4
        %s450 = scalar_lea.vmem [#allocation4], %s449
        %p451 = pneg %p64
        %p452 = pneg %p61
        %s453 = sand.u32 %s31, 1
        %s454 = scalar_lea.sflag [#allocation8], %s453
        %s455 = sand.u32 %s77, 1
        %s456 = smul.addr %s455, 4
        %s457 = scalar_lea.vmem [#allocation7], %s456
        %p458 = pneg %p90
        %p459 = pneg %p87
        %s460 = sand.u32 %s31, 1
        %s461 = scalar_lea.sflag [#allocation8], %s460
        %s462 = sand.u32 %s103, 1
        %s463 = scalar_lea.vmem [#allocation9], %s462
        %p464 = pneg %p116
        %p465 = pneg %p113
        %p466 = pneg %p137
        %p467 = pneg %p134
        %p468 = pneg %p158
        %p469 = pneg %p155
        %p470 = pneg %p179
        %p471 = pneg %p176
        %p472 = pneg %p200
        %p473 = pneg %p197
        %p474 = pneg %p221
        %p475 = pneg %p218
        %p476 = pneg %p242
        %p477 = pneg %p239
        %p478 = pneg %p270
        %p479 = pneg %p267
        %s480 = sand.u32 %s257, 1
        %s481 = scalar_lea.sflag [#allocation6], %s480
        %s482 = sand.u32 %s257, 1
        %s483 = smul.addr %s482, 8
        %s484 = scalar_lea.vmem [#allocation15], %s483
        %p486 = scmp.eq.s32.totalorder %s36, 0
        // Predicated region
        $region81: #{tpu_custom_call.1} parent=55 // pred_check
          %p487 = pneg %p486
        $region82: #{tpu_custom_call.1} parent=55 // pred_check_branch
          %489 = sbr.rel (%p487) target = $region84
        $region83: #{tpu_custom_call.1} parent=55 // pred_region
          %v490 = vld [vmem:[%s406] sm:$0xf]
          %v491 = vld [vmem:[%s416] sm:$0xf]
          %v492 = vld [vmem:[#allocation12] sm:$0xf]
          %v493 = vld [vmem:[#allocation12 + $0x4] sm:$0xf]
          %v494 = vld [vmem:[#allocation12 + $0x8] sm:$0xf]
          %v495 = vld [vmem:[#allocation12 + $0xc] sm:$0xf]
          %v496 = vld [vmem:[%s6] sm:$0x1]
          %v498 = vperm.slane %v496, 0
          %v504 = vunpack.c.l.b16 %v492
          %v505 = vunpack.c.l.b16 %v493
          %v506 = vunpack.c.l.b16 %v494
          %v507 = vunpack.c.l.b16 %v495
          %v508 = vpack.c.b16 %v505, %v504
          %v509 = vpack.c.b16 %v507, %v506
          %vm512 = vcmask 261120
          %v514 = vsel %vm512, %v490, 0
          %516 = vmatpush.bf16.msra.mxu0 0
          %517 = vmatpush.bf16.msra.mxu0 0
          %518 = vmatpush.bf16.msra.mxu0 0
          %519 = vmatpush.bf16.msra.mxu0 0
          %520 = vmatpush.bf16.msra.mxu0 0
          %521 = vmatpush.bf16.msra.mxu0 0
          %522 = vmatpush.bf16.msra.mxu0 %v509
          %523 = vmatpush.bf16.msra.mxu0 %v508
          %524 = vmatmul.bf16.gmra.mxu0 %v514
          %v525 = vpop.f32.mrf.mxu0
          %v526 = vadd.f32 %v498, %v525
          %v527 = vpop.f32.mrf.mxu0
          %528 = vdwg.mxu0
          %v529 = vld [vmem:[#allocation13] sm:$0xf]
          %v530 = vld [vmem:[#allocation13 + $0x4] sm:$0xf]
          %v531 = vld [vmem:[#allocation13 + $0x8] sm:$0xf]
          %v532 = vld [vmem:[#allocation13 + $0xc] sm:$0xf]
          %v533 = vld [vmem:[%s8] sm:$0x1]
          %v535 = vperm.slane %v533, 0
          %v541 = vunpack.c.l.b16 %v529
          %v542 = vunpack.c.l.b16 %v530
          %v543 = vunpack.c.l.b16 %v531
          %v544 = vunpack.c.l.b16 %v532
          %v545 = vpack.c.b16 %v542, %v541
          %v546 = vpack.c.b16 %v544, %v543
          %v550 = vsel %vm512, %v491, 0
          %552 = vmatpush.bf16.msra.mxu0 0
          %553 = vmatpush.bf16.msra.mxu0 0
          %554 = vmatpush.bf16.msra.mxu0 0
          %555 = vmatpush.bf16.msra.mxu0 0
          %556 = vmatpush.bf16.msra.mxu0 0
          %557 = vmatpush.bf16.msra.mxu0 0
          %558 = vmatpush.bf16.msra.mxu0 %v546
          %559 = vmatpush.bf16.msra.mxu0 %v545
          %560 = vmatmul.bf16.gmra.mxu0 %v550
          %v561 = vpop.f32.mrf.mxu0
          %v562 = vadd.f32 %v535, %v561
          %v563 = vpop.f32.mrf.mxu0
          %564 = vdwg.mxu0
          %566 = vrot.lane.b32.xlu0 %v526, 120
          %v567 = vpop.permute.xlu0 %566
          %569 = vrot.lane.b32.xlu0 %v526, 112
          %v570 = vpop.permute.xlu0 %569
          %572 = vrot.lane.b32.xlu0 %v526, 104
          %v573 = vpop.permute.xlu0 %572
          %v575 = vrot.slane %v570, 4
          %vm576 = vcmask 1047556
          %v577 = vsel %vm576, %v575, %v526
          %v578 = vrot.slane %v526, 4
          %v579 = vsel %vm576, %v570, %v578
          %v581 = vunpack.c.l.s4 1983009808
          %v582 = vunpack.c.0.s8 %v581
          %v583 = vperm.slane %v577, %v582
          %v585 = vunpack.c.l.s4 1983009808
          %v586 = vunpack.c.0.s8 %v585
          %v587 = vperm.slane %v579, %v586
          %v588 = vrot.slane %v573, 4
          %v589 = vsel %vm576, %v588, %v567
          %v590 = vrot.slane %v567, 4
          %v591 = vsel %vm576, %v573, %v590
          %v593 = vunpack.c.l.s4 1983009808
          %v594 = vunpack.c.0.s8 %v593
          %v595 = vperm.slane %v589, %v594
          %v597 = vunpack.c.l.s4 1983009808
          %v598 = vunpack.c.0.s8 %v597
          %v599 = vperm.slane %v591, %v598
          %v600 = vrot.slane %v595, 4
          %v601 = vsel %vm576, %v600, %v583
          %v602 = vrot.slane %v583, 4
          %v603 = vsel %vm576, %v595, %v602
          %v605 = vunpack.c.l.s4 1934713408
          %v606 = vunpack.c.0.s8 %v605
          %v607 = vperm.slane %v601, %v606
          %v609 = vunpack.c.l.s4 1934713408
          %v610 = vunpack.c.0.s8 %v609
          %v611 = vperm.slane %v603, %v610
          %v612 = vrot.slane %v599, 4
          %v613 = vsel %vm576, %v612, %v587
          %v614 = vrot.slane %v587, 4
          %v615 = vsel %vm576, %v599, %v614
          %v617 = vunpack.c.l.s4 1934713408
          %v618 = vunpack.c.0.s8 %v617
          %v619 = vperm.slane %v613, %v618
          %v621 = vunpack.c.l.s4 1934713408
          %v622 = vunpack.c.0.s8 %v621
          %v623 = vperm.slane %v615, %v622
          %v624 = vrot.slane %v607, 4
          %v625 = vsel %vm576, 0.0, %v624
          %v626 = vrot.slane %v611, 4
          %v627 = vsel %vm576, 0.0, %v626
          %v628 = vrot.slane %v619, 4
          %v629 = vsel %vm576, 0.0, %v628
          %v630 = vrot.slane %v623, 4
          %v631 = vsel %vm576, 0.0, %v630
          %632 = vrot.lane.b32.xlu0 %v526, 96
          %v633 = vpop.permute.xlu0 %632
          %634 = vrot.lane.b32.xlu0 %v567, 96
          %v635 = vpop.permute.xlu0 %634
          %636 = vrot.lane.b32.xlu0 %v570, 96
          %v637 = vpop.permute.xlu0 %636
          %638 = vrot.lane.b32.xlu0 %v573, 96
          %v639 = vpop.permute.xlu0 %638
          %v644 = vrot.slane %v637, 4
          %v645 = vsel %vm576, %v644, %v633
          %v646 = vrot.slane %v633, 4
          %v647 = vsel %vm576, %v637, %v646
          %v649 = vunpack.c.l.s4 1983009808
          %v650 = vunpack.c.0.s8 %v649
          %v651 = vperm.slane %v645, %v650
          %v653 = vunpack.c.l.s4 1983009808
          %v654 = vunpack.c.0.s8 %v653
          %v655 = vperm.slane %v647, %v654
          %v656 = vrot.slane %v639, 4
          %v657 = vsel %vm576, %v656, %v635
          %v658 = vrot.slane %v635, 4
          %v659 = vsel %vm576, %v639, %v658
          %v661 = vunpack.c.l.s4 1983009808
          %v662 = vunpack.c.0.s8 %v661
          %v663 = vperm.slane %v657, %v662
          %v665 = vunpack.c.l.s4 1983009808
          %v666 = vunpack.c.0.s8 %v665
          %v667 = vperm.slane %v659, %v666
          %v668 = vrot.slane %v663, 4
          %v669 = vsel %vm576, %v668, %v651
          %v670 = vrot.slane %v651, 4
          %v671 = vsel %vm576, %v663, %v670
          %v673 = vunpack.c.l.s4 1934713408
          %v674 = vunpack.c.0.s8 %v673
          %v675 = vperm.slane %v669, %v674
          %v677 = vunpack.c.l.s4 1934713408
          %v678 = vunpack.c.0.s8 %v677
          %v679 = vperm.slane %v671, %v678
          %v680 = vrot.slane %v667, 4
          %v681 = vsel %vm576, %v680, %v655
          %v682 = vrot.slane %v655, 4
          %v683 = vsel %vm576, %v667, %v682
          %v685 = vunpack.c.l.s4 1934713408
          %v686 = vunpack.c.0.s8 %v685
          %v687 = vperm.slane %v681, %v686
          %v689 = vunpack.c.l.s4 1934713408
          %v690 = vunpack.c.0.s8 %v689
          %v691 = vperm.slane %v683, %v690
          %v692 = vrot.slane %v675, 4
          %v693 = vsel %vm576, 0.0, %v692
          %v694 = vrot.slane %v679, 4
          %v695 = vsel %vm576, 0.0, %v694
          %v696 = vrot.slane %v687, 4
          %v697 = vsel %vm576, 0.0, %v696
          %v698 = vrot.slane %v691, 4
          %v699 = vsel %vm576, 0.0, %v698
          %701 = vrot.lane.b32.xlu0 %v562, 120
          %v702 = vpop.permute.xlu0 %701
          %704 = vrot.lane.b32.xlu0 %v562, 112
          %v705 = vpop.permute.xlu0 %704
          %707 = vrot.lane.b32.xlu0 %v562, 104
          %v708 = vpop.permute.xlu0 %707
          %v710 = vrot.slane %v705, 4
          %v711 = vsel %vm576, %v710, %v562
          %v712 = vrot.slane %v562, 4
          %v713 = vsel %vm576, %v705, %v712
          %v715 = vunpack.c.l.s4 1983009808
          %v716 = vunpack.c.0.s8 %v715
          %v717 = vperm.slane %v711, %v716
          %v719 = vunpack.c.l.s4 1983009808
          %v720 = vunpack.c.0.s8 %v719
          %v721 = vperm.slane %v713, %v720
          %v722 = vrot.slane %v708, 4
          %v723 = vsel %vm576, %v722, %v702
          %v724 = vrot.slane %v702, 4
          %v725 = vsel %vm576, %v708, %v724
          %v727 = vunpack.c.l.s4 1983009808
          %v728 = vunpack.c.0.s8 %v727
          %v729 = vperm.slane %v723, %v728
          %v731 = vunpack.c.l.s4 1983009808
          %v732 = vunpack.c.0.s8 %v731
          %v733 = vperm.slane %v725, %v732
          %v734 = vrot.slane %v729, 4
          %v735 = vsel %vm576, %v734, %v717
          %v736 = vrot.slane %v717, 4
          %v737 = vsel %vm576, %v729, %v736
          %v739 = vunpack.c.l.s4 1934713408
          %v740 = vunpack.c.0.s8 %v739
          %v741 = vperm.slane %v735, %v740
          %v743 = vunpack.c.l.s4 1934713408
          %v744 = vunpack.c.0.s8 %v743
          %v745 = vperm.slane %v737, %v744
          %v746 = vrot.slane %v733, 4
          %v747 = vsel %vm576, %v746, %v721
          %v748 = vrot.slane %v721, 4
          %v749 = vsel %vm576, %v733, %v748
          %v751 = vunpack.c.l.s4 1934713408
          %v752 = vunpack.c.0.s8 %v751
          %v753 = vperm.slane %v747, %v752
          %v755 = vunpack.c.l.s4 1934713408
          %v756 = vunpack.c.0.s8 %v755
          %v757 = vperm.slane %v749, %v756
          %v758 = vrot.slane %v741, 4
          %v759 = vsel %vm576, 0.0, %v758
          %v760 = vrot.slane %v745, 4
          %v761 = vsel %vm576, 0.0, %v760
          %v762 = vrot.slane %v753, 4
          %v763 = vsel %vm576, 0.0, %v762
          %v764 = vrot.slane %v757, 4
          %v765 = vsel %vm576, 0.0, %v764
          %774 = vrot.lane.b32.xlu0 %v741, 8
          %v775 = vpop.permute.xlu0 %774
          %776 = vrot.lane.b32.xlu0 %v759, 8
          %v777 = vpop.permute.xlu0 %776
          %778 = vrot.lane.b32.xlu0 %v745, 8
          %v779 = vpop.permute.xlu0 %778
          %780 = vrot.lane.b32.xlu0 %v761, 8
          %v781 = vpop.permute.xlu0 %780
          %782 = vrot.lane.b32.xlu0 %v753, 8
          %v783 = vpop.permute.xlu0 %782
          %784 = vrot.lane.b32.xlu0 %v763, 8
          %v785 = vpop.permute.xlu0 %784
          %786 = vrot.lane.b32.xlu0 %v757, 8
          %v787 = vpop.permute.xlu0 %786
          %788 = vrot.lane.b32.xlu0 %v765, 8
          %v789 = vpop.permute.xlu0 %788
          %vm798 = vcmask 64512
          %v799 = vsel %vm798, %v607, %v775
          %v800 = vsel %vm798, %v625, %v777
          %v801 = vsel %vm798, %v611, %v779
          %v802 = vsel %vm798, %v627, %v781
          %v803 = vsel %vm798, %v619, %v783
          %v804 = vsel %vm798, %v629, %v785
          %v805 = vsel %vm798, %v623, %v787
          %v806 = vsel %vm798, %v631, %v789
          %v807 = vrot.slane %v801, 4
          %v808 = vsel %vm576, %v807, %v799
          %v810 = vunpack.c.l.s4 1983009808
          %v811 = vunpack.c.0.s8 %v810
          %v812 = vperm.slane %v808, %v811
          %v813 = vrot.slane %v802, 4
          %v814 = vsel %vm576, %v813, %v800
          %v816 = vunpack.c.l.s4 1983009808
          %v817 = vunpack.c.0.s8 %v816
          %v818 = vperm.slane %v814, %v817
          %v819 = vrot.slane %v805, 4
          %v820 = vsel %vm576, %v819, %v803
          %v822 = vunpack.c.l.s4 1983009808
          %v823 = vunpack.c.0.s8 %v822
          %v824 = vperm.slane %v820, %v823
          %v825 = vrot.slane %v806, 4
          %v826 = vsel %vm576, %v825, %v804
          %v828 = vunpack.c.l.s4 1983009808
          %v829 = vunpack.c.0.s8 %v828
          %v830 = vperm.slane %v826, %v829
          %v831 = vrot.slane %v818, 4
          %v832 = vsel %vm576, %v831, %v812
          %v833 = vrot.slane %v812, 4
          %v834 = vsel %vm576, %v818, %v833
          %v836 = vunpack.c.l.s4 1934713408
          %v837 = vunpack.c.0.s8 %v836
          %v838 = vperm.slane %v832, %v837
          %v840 = vunpack.c.l.s4 1934713408
          %v841 = vunpack.c.0.s8 %v840
          %v842 = vperm.slane %v834, %v841
          %v843 = vrot.slane %v830, 4
          %v844 = vsel %vm576, %v843, %v824
          %v845 = vrot.slane %v824, 4
          %v846 = vsel %vm576, %v830, %v845
          %v848 = vunpack.c.l.s4 1934713408
          %v849 = vunpack.c.0.s8 %v848
          %v850 = vperm.slane %v844, %v849
          %v852 = vunpack.c.l.s4 1934713408
          %v853 = vunpack.c.0.s8 %v852
          %v854 = vperm.slane %v846, %v853
          %v855 = vrot.slane %v850, 4
          %v856 = vsel %vm576, %v855, %v838
          %v857 = vrot.slane %v838, 4
          %v858 = vsel %vm576, %v850, %v857
          %v859 = vrot.slane %v854, 4
          %v860 = vsel %vm576, %v859, %v842
          %v861 = vrot.slane %v842, 4
          %v862 = vsel %vm576, %v854, %v861
          %v863 = vpack.c.bf16 %v856, %v856
          %v864 = vpack.c.bf16 %v858, %v858
          %v865 = vpack.c.bf16 %v860, %v860
          %v866 = vpack.c.bf16 %v862, %v862
          %vm867 = vcmask 125952
          %868 = vst.msk [vmem:[#allocation2] sm:$0xf] %vm867, %v863
          %869 = vst.msk [vmem:[#allocation2 + $0x4] sm:$0xf] %vm867, %v864
          %870 = vst.msk [vmem:[#allocation2 + $0x8] sm:$0xf] %vm867, %v865
          %871 = vst.msk [vmem:[#allocation2 + $0xc] sm:$0xf] %vm867, %v866
          %v872 = vsel %vm576, %v694, %v675
          %v874 = vunpack.c.l.s4 1983009808
          %v875 = vunpack.c.0.s8 %v874
          %v876 = vperm.slane %v872, %v875
          %v877 = vrot.slane %v695, 4
          %v878 = vsel %vm576, %v877, %v693
          %v880 = vunpack.c.l.s4 1983009808
          %v881 = vunpack.c.0.s8 %v880
          %v882 = vperm.slane %v878, %v881
          %v883 = vsel %vm576, %v698, %v687
          %v885 = vunpack.c.l.s4 1983009808
          %v886 = vunpack.c.0.s8 %v885
          %v887 = vperm.slane %v883, %v886
          %v888 = vrot.slane %v699, 4
          %v889 = vsel %vm576, %v888, %v697
          %v891 = vunpack.c.l.s4 1983009808
          %v892 = vunpack.c.0.s8 %v891
          %v893 = vperm.slane %v889, %v892
          %v894 = vrot.slane %v882, 4
          %v895 = vsel %vm576, %v894, %v876
          %v896 = vrot.slane %v876, 4
          %v897 = vsel %vm576, %v882, %v896
          %v899 = vunpack.c.l.s4 1934713408
          %v900 = vunpack.c.0.s8 %v899
          %v901 = vperm.slane %v895, %v900
          %v903 = vunpack.c.l.s4 1934713408
          %v904 = vunpack.c.0.s8 %v903
          %v905 = vperm.slane %v897, %v904
          %v906 = vrot.slane %v893, 4
          %v907 = vsel %vm576, %v906, %v887
          %v908 = vrot.slane %v887, 4
          %v909 = vsel %vm576, %v893, %v908
          %v911 = vunpack.c.l.s4 1934713408
          %v912 = vunpack.c.0.s8 %v911
          %v913 = vperm.slane %v907, %v912
          %v915 = vunpack.c.l.s4 1934713408
          %v916 = vunpack.c.0.s8 %v915
          %v917 = vperm.slane %v909, %v916
          %v918 = vrot.slane %v913, 4
          %v919 = vsel %vm576, %v918, %v901
          %v920 = vrot.slane %v901, 4
          %v921 = vsel %vm576, %v913, %v920
          %v922 = vrot.slane %v917, 4
          %v923 = vsel %vm576, %v922, %v905
          %v924 = vrot.slane %v905, 4
          %v925 = vsel %vm576, %v917, %v924
          %v926 = vpack.c.bf16 %v919, %v919
          %v927 = vpack.c.bf16 %v921, %v921
          %v928 = vpack.c.bf16 %v923, %v923
          %v929 = vpack.c.bf16 %v925, %v925
          %vm930 = vcmask 60416
          %931 = vst.msk [vmem:[#allocation3] sm:$0xf] %vm930, %v926
          %932 = vst.msk [vmem:[#allocation3 + $0x4] sm:$0xf] %vm930, %v927
          %933 = vst.msk [vmem:[#allocation3 + $0x8] sm:$0xf] %vm930, %v928
          %934 = vst.msk [vmem:[#allocation3 + $0xc] sm:$0xf] %vm930, %v929
        $region84: #{tpu_custom_call.1} parent=55 // pred_fallthru
          _
        %s935 = smul.u32 %s36, 8
        %s936 = sshra.s32 %s935, 3
        %s937 = sand.u32 %s935, 7
        %s938 = smul.addr %s936, 4
        %s939 = scalar_lea.vmem %s406, %s938 [#allocation4]
        %v940 = vld [vmem:[%s939] sm:$0xf]
        %v941 = vld [vmem:[#allocation10] sm:$0xf]
        %v942 = vld [vmem:[#allocation10 + $0x4] sm:$0xf]
        %v943 = vld [vmem:[#allocation10 + $0x8] sm:$0xf]
        %v944 = vld [vmem:[#allocation10 + $0xc] sm:$0xf]
        %v945 = vld [vmem:[%s4] sm:$0x1]
        %v947 = vperm.slane %v945, 0
        %v953 = vunpack.c.l.b16 %v941
        %v954 = vunpack.c.l.b16 %v942
        %v955 = vunpack.c.l.b16 %v943
        %v956 = vunpack.c.l.b16 %v944
        %v957 = vpack.c.b16 %v954, %v953
        %v958 = vpack.c.b16 %v956, %v955
        %vm961 = vcmask 261120
        %v963 = vsel %vm961, %v940, 0
        %965 = vmatpush.bf16.msra.mxu0 0
        %966 = vmatpush.bf16.msra.mxu0 0
        %967 = vmatpush.bf16.msra.mxu0 0
        %968 = vmatpush.bf16.msra.mxu0 0
        %969 = vmatpush.bf16.msra.mxu0 0
        %970 = vmatpush.bf16.msra.mxu0 0
        %971 = vmatpush.bf16.msra.mxu0 %v958
        %972 = vmatpush.bf16.msra.mxu0 %v957
        %973 = vmatmul.bf16.gmra.mxu0 %v963
        %v974 = vpop.f32.mrf.mxu0
        %v975 = vadd.f32 %v947, %v974
        %v976 = vpop.f32.mrf.mxu0
        %977 = vdwg.mxu0
        %979 = vrot.lane.b32.xlu0 %v975, 112
        %v980 = vpop.permute.xlu0 %979
        %982 = vrot.lane.b32.xlu0 %v975, 96
        %v983 = vpop.permute.xlu0 %982
        %985 = vrot.lane.b32.xlu0 %v975, 80
        %v986 = vpop.permute.xlu0 %985
        %v988 = vrot.slane %v983, 4
        %vm989 = vcmask 1047556
        %v990 = vsel %vm989, %v988, %v975
        %v991 = vrot.slane %v975, 4
        %v992 = vsel %vm989, %v983, %v991
        %v994 = vunpack.c.l.s4 1983009808
        %v995 = vunpack.c.0.s8 %v994
        %v996 = vperm.slane %v990, %v995
        %v998 = vunpack.c.l.s4 1983009808
        %v999 = vunpack.c.0.s8 %v998
        %v1000 = vperm.slane %v992, %v999
        %v1001 = vrot.slane %v986, 4
        %v1002 = vsel %vm989, %v1001, %v980
        %v1003 = vrot.slane %v980, 4
        %v1004 = vsel %vm989, %v986, %v1003
        %v1006 = vunpack.c.l.s4 1983009808
        %v1007 = vunpack.c.0.s8 %v1006
        %v1008 = vperm.slane %v1002, %v1007
        %v1010 = vunpack.c.l.s4 1983009808
        %v1011 = vunpack.c.0.s8 %v1010
        %v1012 = vperm.slane %v1004, %v1011
        %v1013 = vrot.slane %v1008, 4
        %v1014 = vsel %vm989, %v1013, %v996
        %v1015 = vrot.slane %v996, 4
        %v1016 = vsel %vm989, %v1008, %v1015
        %v1018 = vunpack.c.l.s4 1934713408
        %v1019 = vunpack.c.0.s8 %v1018
        %v1020 = vperm.slane %v1014, %v1019
        %v1022 = vunpack.c.l.s4 1934713408
        %v1023 = vunpack.c.0.s8 %v1022
        %v1024 = vperm.slane %v1016, %v1023
        %v1025 = vrot.slane %v1012, 4
        %v1026 = vsel %vm989, %v1025, %v1000
        %v1027 = vrot.slane %v1000, 4
        %v1028 = vsel %vm989, %v1012, %v1027
        %v1030 = vunpack.c.l.s4 1934713408
        %v1031 = vunpack.c.0.s8 %v1030
        %v1032 = vperm.slane %v1026, %v1031
        %v1034 = vunpack.c.l.s4 1934713408
        %v1035 = vunpack.c.0.s8 %v1034
        %v1036 = vperm.slane %v1028, %v1035
        %v1037 = vrot.slane %v1020, 4
        %v1038 = vsel %vm989, 0.0, %v1037
        %v1039 = vrot.slane %v1024, 4
        %v1040 = vsel %vm989, 0.0, %v1039
        %v1041 = vrot.slane %v1032, 4
        %v1042 = vsel %vm989, 0.0, %v1041
        %v1043 = vrot.slane %v1036, 4
        %v1044 = vsel %vm989, 0.0, %v1043
        %v1045 = vsel %vm989, %v1039, %v1020
        %v1047 = vunpack.c.l.s4 1983009808
        %v1048 = vunpack.c.0.s8 %v1047
        %v1049 = vperm.slane %v1045, %v1048
        %v1050 = vrot.slane %v1040, 4
        %v1051 = vsel %vm989, %v1050, %v1038
        %v1053 = vunpack.c.l.s4 1983009808
        %v1054 = vunpack.c.0.s8 %v1053
        %v1055 = vperm.slane %v1051, %v1054
        %v1056 = vsel %vm989, %v1043, %v1032
        %v1058 = vunpack.c.l.s4 1983009808
        %v1059 = vunpack.c.0.s8 %v1058
        %v1060 = vperm.slane %v1056, %v1059
        %v1061 = vrot.slane %v1044, 4
        %v1062 = vsel %vm989, %v1061, %v1042
        %v1064 = vunpack.c.l.s4 1983009808
        %v1065 = vunpack.c.0.s8 %v1064
        %v1066 = vperm.slane %v1062, %v1065
        %v1067 = vrot.slane %v1055, 4
        %v1068 = vsel %vm989, %v1067, %v1049
        %v1069 = vrot.slane %v1049, 4
        %v1070 = vsel %vm989, %v1055, %v1069
        %v1072 = vunpack.c.l.s4 1934713408
        %v1073 = vunpack.c.0.s8 %v1072
        %v1074 = vperm.slane %v1068, %v1073
        %v1076 = vunpack.c.l.s4 1934713408
        %v1077 = vunpack.c.0.s8 %v1076
        %v1078 = vperm.slane %v1070, %v1077
        %v1079 = vrot.slane %v1066, 4
        %v1080 = vsel %vm989, %v1079, %v1060
        %v1081 = vrot.slane %v1060, 4
        %v1082 = vsel %vm989, %v1066, %v1081
        %v1084 = vunpack.c.l.s4 1934713408
        %v1085 = vunpack.c.0.s8 %v1084
        %v1086 = vperm.slane %v1080, %v1085
        %v1088 = vunpack.c.l.s4 1934713408
        %v1089 = vunpack.c.0.s8 %v1088
        %v1090 = vperm.slane %v1082, %v1089
        %v1091 = vrot.slane %v1086, 4
        %v1092 = vsel %vm989, %v1091, %v1074
        %v1093 = vrot.slane %v1074, 4
        %v1094 = vsel %vm989, %v1086, %v1093
        %v1095 = vrot.slane %v1090, 4
        %v1096 = vsel %vm989, %v1095, %v1078
        %v1097 = vrot.slane %v1078, 4
        %v1098 = vsel %vm989, %v1090, %v1097
        %v1099 = vpack.c.bf16 %v1092, %v1092
        %v1100 = vpack.c.bf16 %v1094, %v1094
        %v1101 = vpack.c.bf16 %v1096, %v1096
        %v1102 = vpack.c.bf16 %v1098, %v1098
        %v1103 = vld [vmem:[#allocation2] sm:$0xf]
        %v1104 = vld [vmem:[#allocation2 + $0x4] sm:$0xf]
        %v1105 = vld [vmem:[#allocation2 + $0x8] sm:$0xf]
        %v1106 = vld [vmem:[#allocation2 + $0xc] sm:$0xf]
        %v1107 = vld [vmem:[%s425] sm:$0x1]
        %v1109 = vperm.slane %v1107, 0
        %vm1111 = vcmask 130048
        %v1113 = vsel %vm1111, %v1099, 0
        %v1116 = vsel %vm1111, %v1103, 0
        %1118 = vmatpush.bf16.xpose.msra.mxu0 0
        %1119 = vmatpush.bf16.xpose.msra.mxu0 0
        %1120 = vmatpush.bf16.xpose.msra.mxu0 0
        %1121 = vmatpush.bf16.xpose.msra.mxu0 0
        %1122 = vmatpush.bf16.xpose.msra.mxu0 0
        %1123 = vmatpush.bf16.xpose.msra.mxu0 0
        %1124 = vmatpush.bf16.xpose.msra.mxu0 0
        %1125 = vmatpush.bf16.xpose.msra.mxu0 %v1116
        %1126 = vmatmul.bf16.gmra.mxu0 %v1113
        %v1127 = vpop.f32.mrf.mxu0
        %v1128 = vadd.f32 %v1109, %v1127
        %v1129 = vpop.f32.mrf.mxu0
        %1130 = vdwg.mxu0
        %v1132 = vsel %vm1111, %v1100, 0
        %v1135 = vsel %vm1111, %v1104, 0
        %1137 = vmatpush.bf16.xpose.msra.mxu0 0
        %1138 = vmatpush.bf16.xpose.msra.mxu0 0
        %1139 = vmatpush.bf16.xpose.msra.mxu0 0
        %1140 = vmatpush.bf16.xpose.msra.mxu0 0
        %1141 = vmatpush.bf16.xpose.msra.mxu0 0
        %1142 = vmatpush.bf16.xpose.msra.mxu0 0
        %1143 = vmatpush.bf16.xpose.msra.mxu0 0
        %1144 = vmatpush.bf16.xpose.msra.mxu0 %v1135
        %1145 = vmatmul.bf16.gmra.mxu0 %v1132
        %v1146 = vpop.f32.mrf.mxu0
        %v1147 = vadd.f32 %v1109, %v1146
        %v1148 = vpop.f32.mrf.mxu0
        %1149 = vdwg.mxu0
        %v1151 = vsel %vm1111, %v1101, 0
        %v1154 = vsel %vm1111, %v1105, 0
        %1156 = vmatpush.bf16.xpose.msra.mxu0 0
        %1157 = vmatpush.bf16.xpose.msra.mxu0 0
        %1158 = vmatpush.bf16.xpose.msra.mxu0 0
        %1159 = vmatpush.bf16.xpose.msra.mxu0 0
        %1160 = vmatpush.bf16.xpose.msra.mxu0 0
        %1161 = vmatpush.bf16.xpose.msra.mxu0 0
        %1162 = vmatpush.bf16.xpose.msra.mxu0 0
        %1163 = vmatpush.bf16.xpose.msra.mxu0 %v1154
        %1164 = vmatmul.bf16.gmra.mxu0 %v1151
        %v1165 = vpop.f32.mrf.mxu0
        %v1166 = vadd.f32 %v1109, %v1165
        %v1167 = vpop.f32.mrf.mxu0
        %1168 = vdwg.mxu0
        %v1170 = vsel %vm1111, %v1102, 0
        %v1173 = vsel %vm1111, %v1106, 0
        %1175 = vmatpush.bf16.xpose.msra.mxu0 0
        %1176 = vmatpush.bf16.xpose.msra.mxu0 0
        %1177 = vmatpush.bf16.xpose.msra.mxu0 0
        %1178 = vmatpush.bf16.xpose.msra.mxu0 0
        %1179 = vmatpush.bf16.xpose.msra.mxu0 0
        %1180 = vmatpush.bf16.xpose.msra.mxu0 0
        %1181 = vmatpush.bf16.xpose.msra.mxu0 0
        %1182 = vmatpush.bf16.xpose.msra.mxu0 %v1173
        %1183 = vmatmul.bf16.gmra.mxu0 %v1170
        %v1184 = vpop.f32.mrf.mxu0
        %v1185 = vadd.f32 %v1109, %v1184
        %v1186 = vpop.f32.mrf.mxu0
        %1187 = vdwg.mxu0
        %vm1188 = vcmask 64512
        %v1189 = vsel %vm1188, %v1128, -inf
        %1190 = vmax.xlane.f32.xlu0 %v1189
        %v1191 = vpop.xlane.xlu0 %1190
        %v1192 = vsel %vm1188, %v1147, -inf
        %1193 = vmax.xlane.f32.xlu0 %v1192
        %v1194 = vpop.xlane.xlu0 %1193
        %v1195 = vsel %vm1188, %v1166, -inf
        %1196 = vmax.xlane.f32.xlu0 %v1195
        %v1197 = vpop.xlane.xlu0 %1196
        %v1198 = vsel %vm1188, %v1185, -inf
        %1199 = vmax.xlane.f32.xlu0 %v1198
        %v1200 = vpop.xlane.xlu0 %1199
        %v1201 = vsub.f32 %v1128, %v1191
        %v1202 = vsub.f32 %v1147, %v1194
        %v1203 = vsub.f32 %v1166, %v1197
        %v1204 = vsub.f32 %v1185, %v1200
        %v1205 = vmul.f32 %v1201, 1.442695
        %v1206 = vpow.pop %v1205
        %v1207 = vmul.f32 %v1202, 1.442695
        %v1208 = vpow.pop %v1207
        %v1209 = vmul.f32 %v1203, 1.442695
        %v1210 = vpow.pop %v1209
        %v1211 = vmul.f32 %v1204, 1.442695
        %v1212 = vpow.pop %v1211
        %v1213 = vsel %vm1188, %v1206, 0.0
        %1214 = vadd.xlane.f32.xlu0 %v1213
        %v1215 = vpop.xlane.xlu0 %1214
        %v1216 = vsel %vm1188, %v1208, 0.0
        %1217 = vadd.xlane.f32.xlu0 %v1216
        %v1218 = vpop.xlane.xlu0 %1217
        %v1219 = vsel %vm1188, %v1210, 0.0
        %1220 = vadd.xlane.f32.xlu0 %v1219
        %v1221 = vpop.xlane.xlu0 %1220
        %v1222 = vsel %vm1188, %v1212, 0.0
        %1223 = vadd.xlane.f32.xlu0 %v1222
        %v1224 = vpop.xlane.xlu0 %1223
        %v1225 = vpack.c.bf16 %v1206, %v1206
        %v1226 = vpack.c.bf16 %v1208, %v1208
        %v1227 = vpack.c.bf16 %v1210, %v1210
        %v1228 = vpack.c.bf16 %v1212, %v1212
        %v1229 = vld [vmem:[#allocation3] sm:$0xf]
        %v1230 = vld [vmem:[#allocation3 + $0x4] sm:$0xf]
        %v1231 = vld [vmem:[#allocation3 + $0x8] sm:$0xf]
        %v1232 = vld [vmem:[#allocation3 + $0xc] sm:$0xf]
        %v1234 = vsel %vm1188, %v1225, 0
        %vm1236 = vcmask 1043456
        %v1238 = vsel %vm1236, %v1229, 0
        %1240 = vmatpush.bf16.msra.mxu0 0
        %1241 = vmatpush.bf16.msra.mxu0 0
        %1242 = vmatpush.bf16.msra.mxu0 0
        %1243 = vmatpush.bf16.msra.mxu0 0
        %1244 = vmatpush.bf16.msra.mxu0 0
        %1245 = vmatpush.bf16.msra.mxu0 0
        %1246 = vmatpush.bf16.msra.mxu0 0
        %1247 = vmatpush.bf16.msra.mxu0 %v1238
        %1248 = vmatmul.bf16.gmra.mxu0 %v1234
        %v1249 = vpop.f32.mrf.mxu0
        %v1250 = vadd.f32 0.0, %v1249
        %v1251 = vpop.f32.mrf.mxu0
        %1252 = vdwg.mxu0
        %v1254 = vsel %vm1188, %v1226, 0
        %v1257 = vsel %vm1236, %v1230, 0
        %1259 = vmatpush.bf16.msra.mxu0 0
        %1260 = vmatpush.bf16.msra.mxu0 0
        %1261 = vmatpush.bf16.msra.mxu0 0
        %1262 = vmatpush.bf16.msra.mxu0 0
        %1263 = vmatpush.bf16.msra.mxu0 0
        %1264 = vmatpush.bf16.msra.mxu0 0
        %1265 = vmatpush.bf16.msra.mxu0 0
        %1266 = vmatpush.bf16.msra.mxu0 %v1257
        %1267 = vmatmul.bf16.gmra.mxu0 %v1254
        %v1268 = vpop.f32.mrf.mxu0
        %v1269 = vadd.f32 0.0, %v1268
        %v1270 = vpop.f32.mrf.mxu0
        %1271 = vdwg.mxu0
        %v1273 = vsel %vm1188, %v1227, 0
        %v1276 = vsel %vm1236, %v1231, 0
        %1278 = vmatpush.bf16.msra.mxu0 0
        %1279 = vmatpush.bf16.msra.mxu0 0
        %1280 = vmatpush.bf16.msra.mxu0 0
        %1281 = vmatpush.bf16.msra.mxu0 0
        %1282 = vmatpush.bf16.msra.mxu0 0
        %1283 = vmatpush.bf16.msra.mxu0 0
        %1284 = vmatpush.bf16.msra.mxu0 0
        %1285 = vmatpush.bf16.msra.mxu0 %v1276
        %1286 = vmatmul.bf16.gmra.mxu0 %v1273
        %v1287 = vpop.f32.mrf.mxu0
        %v1288 = vadd.f32 0.0, %v1287
        %v1289 = vpop.f32.mrf.mxu0
        %1290 = vdwg.mxu0
        %v1292 = vsel %vm1188, %v1228, 0
        %v1295 = vsel %vm1236, %v1232, 0
        %1297 = vmatpush.bf16.msra.mxu0 0
        %1298 = vmatpush.bf16.msra.mxu0 0
        %1299 = vmatpush.bf16.msra.mxu0 0
        %1300 = vmatpush.bf16.msra.mxu0 0
        %1301 = vmatpush.bf16.msra.mxu0 0
        %1302 = vmatpush.bf16.msra.mxu0 0
        %1303 = vmatpush.bf16.msra.mxu0 0
        %1304 = vmatpush.bf16.msra.mxu0 %v1295
        %1305 = vmatmul.bf16.gmra.mxu0 %v1292
        %v1306 = vpop.f32.mrf.mxu0
        %v1307 = vadd.f32 0.0, %v1306
        %v1308 = vpop.f32.mrf.mxu0
        %1309 = vdwg.mxu0
        %v1310 = vrcp.pop %v1215
        %v1311 = vrcp.pop %v1218
        %v1312 = vrcp.pop %v1221
        %v1313 = vrcp.pop %v1224
        %v1314 = vmul.f32 %v1250, %v1310
        %v1315 = vmul.f32 %v1269, %v1311
        %v1316 = vmul.f32 %v1288, %v1312
        %v1317 = vmul.f32 %v1307, %v1313
        %v1318 = vrot.slane %v1316, 4
        %v1319 = vsel %vm989, %v1318, %v1314
        %v1320 = vrot.slane %v1314, 4
        %v1321 = vsel %vm989, %v1316, %v1320
        %v1323 = vunpack.c.l.s4 1983009808
        %v1324 = vunpack.c.0.s8 %v1323
        %v1325 = vperm.slane %v1319, %v1324
        %v1327 = vunpack.c.l.s4 1983009808
        %v1328 = vunpack.c.0.s8 %v1327
        %v1329 = vperm.slane %v1321, %v1328
        %v1330 = vrot.slane %v1317, 4
        %v1331 = vsel %vm989, %v1330, %v1315
        %v1332 = vrot.slane %v1315, 4
        %v1333 = vsel %vm989, %v1317, %v1332
        %v1335 = vunpack.c.l.s4 1983009808
        %v1336 = vunpack.c.0.s8 %v1335
        %v1337 = vperm.slane %v1331, %v1336
        %v1339 = vunpack.c.l.s4 1983009808
        %v1340 = vunpack.c.0.s8 %v1339
        %v1341 = vperm.slane %v1333, %v1340
        %v1342 = vrot.slane %v1337, 4
        %v1343 = vsel %vm989, %v1342, %v1325
        %v1344 = vrot.slane %v1325, 4
        %v1345 = vsel %vm989, %v1337, %v1344
        %v1347 = vunpack.c.l.s4 1934713408
        %v1348 = vunpack.c.0.s8 %v1347
        %v1349 = vperm.slane %v1343, %v1348
        %v1351 = vunpack.c.l.s4 1934713408
        %v1352 = vunpack.c.0.s8 %v1351
        %v1353 = vperm.slane %v1345, %v1352
        %v1354 = vrot.slane %v1341, 4
        %v1355 = vsel %vm989, %v1354, %v1329
        %v1356 = vrot.slane %v1329, 4
        %v1357 = vsel %vm989, %v1341, %v1356
        %v1359 = vunpack.c.l.s4 1934713408
        %v1360 = vunpack.c.0.s8 %v1359
        %v1361 = vperm.slane %v1355, %v1360
        %v1363 = vunpack.c.l.s4 1934713408
        %v1364 = vunpack.c.0.s8 %v1363
        %v1365 = vperm.slane %v1357, %v1364
        %v1366 = vrot.slane %v1349, 4
        %v1367 = vsel %vm989, 0.0, %v1366
        %v1368 = vrot.slane %v1353, 4
        %v1369 = vsel %vm989, 0.0, %v1368
        %v1370 = vrot.slane %v1361, 4
        %v1371 = vsel %vm989, 0.0, %v1370
        %v1372 = vrot.slane %v1365, 4
        %v1373 = vsel %vm989, 0.0, %v1372
        %v1374 = vsel %vm989, %v1368, %v1349
        %v1376 = vunpack.c.l.s4 1983009808
        %v1377 = vunpack.c.0.s8 %v1376
        %v1378 = vperm.slane %v1374, %v1377
        %v1379 = vrot.slane %v1369, 4
        %v1380 = vsel %vm989, %v1379, %v1367
        %v1382 = vunpack.c.l.s4 1983009808
        %v1383 = vunpack.c.0.s8 %v1382
        %v1384 = vperm.slane %v1380, %v1383
        %v1385 = vsel %vm989, %v1372, %v1361
        %v1387 = vunpack.c.l.s4 1983009808
        %v1388 = vunpack.c.0.s8 %v1387
        %v1389 = vperm.slane %v1385, %v1388
        %v1390 = vrot.slane %v1373, 4
        %v1391 = vsel %vm989, %v1390, %v1371
        %v1393 = vunpack.c.l.s4 1983009808
        %v1394 = vunpack.c.0.s8 %v1393
        %v1395 = vperm.slane %v1391, %v1394
        %v1396 = vrot.slane %v1384, 4
        %v1397 = vsel %vm989, %v1396, %v1378
        %v1398 = vrot.slane %v1378, 4
        %v1399 = vsel %vm989, %v1384, %v1398
        %v1401 = vunpack.c.l.s4 1934713408
        %v1402 = vunpack.c.0.s8 %v1401
        %v1403 = vperm.slane %v1397, %v1402
        %v1405 = vunpack.c.l.s4 1934713408
        %v1406 = vunpack.c.0.s8 %v1405
        %v1407 = vperm.slane %v1399, %v1406
        %v1408 = vrot.slane %v1395, 4
        %v1409 = vsel %vm989, %v1408, %v1389
        %v1410 = vrot.slane %v1389, 4
        %v1411 = vsel %vm989, %v1395, %v1410
        %v1413 = vunpack.c.l.s4 1934713408
        %v1414 = vunpack.c.0.s8 %v1413
        %v1415 = vperm.slane %v1409, %v1414
        %v1417 = vunpack.c.l.s4 1934713408
        %v1418 = vunpack.c.0.s8 %v1417
        %v1419 = vperm.slane %v1411, %v1418
        %v1420 = vrot.slane %v1415, 4
        %v1421 = vsel %vm989, %v1420, %v1403
        %v1422 = vrot.slane %v1403, 4
        %v1423 = vsel %vm989, %v1415, %v1422
        %v1424 = vrot.slane %v1419, 4
        %v1425 = vsel %vm989, %v1424, %v1407
        %v1426 = vrot.slane %v1407, 4
        %v1427 = vsel %vm989, %v1419, %v1426
        %1429 = vrot.lane.b32.xlu0 %v1423, 8
        %v1430 = vpop.permute.xlu0 %1429
        %1433 = vrot.lane.b32.xlu0 %v1425, 16
        %v1434 = vpop.permute.xlu0 %1433
        %1437 = vrot.lane.b32.xlu0 %v1427, 24
        %v1438 = vpop.permute.xlu0 %1437
        %v1440 = vsel %vm1188, %v1421, %v1430
        %v1441 = vsel %vm1111, %v1440, %v1434
        %vm1442 = vcmask 195584
        %v1443 = vsel %vm1442, %v1441, %v1438
        %1444 = vst.msk [vmem:[%s484] sm:$0xff] %vm961, %v1443
        %s1445 = sand.u32 %s257, 1
        %s1446 = scalar_lea.sflag [#allocation6], %s1445
        %s1447 = sand.u32 %s257, 1
        %s1448 = smul.addr %s1447, 8
        %s1449 = scalar_lea.vmem [#allocation15], %s1448
        // Predicated region
        $region85: #{tpu_custom_call.1} parent=55 // pred_check
          %p1450 = pneg %p267
        $region86: #{tpu_custom_call.1} parent=55 // pred_check_branch
          %1452 = sbr.rel (%p1450) target = $region88
        $region87: #{tpu_custom_call.1} parent=55 // pred_region
          %1454 = vsyncadd %s1446, 0
          %s1455 = sadd.s32 %s36, %s35
          %s1456 = smul.addr %s1455, 8
          %s1457 = scalar_lea.hbm %s9, %s1456
          %s1459 = sshll.u32 %s1449, 4
          %s1460 = int_to_ptr.vmem [resolvable:$true] %s1459
          %s1461 = sshll.u32 %s1457, 4
          %s1462 = int_to_ptr.hbm [resolvable:$true] %s1461
          %1464 = dma.vmem_to_hbm [thread:$0]  %s1460, 128, %s1462, %s1446
        $region88: #{tpu_custom_call.1} parent=55 // pred_fallthru
          _
      $region56: #{tpu_custom_call.1} parent=5 // pred_fallthru
        _
      %p1465 = scmp.le.s32.totalorder 2, %s26
      // Predicated region
      $region89: #{tpu_custom_call.1} parent=5 // pred_check
        %p1466 = pneg %p1465
      $region90: #{tpu_custom_call.1} parent=5 // pred_check_branch
        %1468 = sbr.rel (%p1466) target = $region92
      $region91: #{tpu_custom_call.1} parent=5 // pred_region
        %s1469 = ssub.s32 %s26, 2
        // Predicated region
        $region93: #{tpu_custom_call.1} parent=91 // pred_check
          %p1470 = pneg %p273
        $region94: #{tpu_custom_call.1} parent=91 // pred_check_branch
          %1472 = sbr.rel (%p1470) target = $region96
        $region95: #{tpu_custom_call.1} parent=91 // pred_region
          %s1473 = sand.u32 %s258, 1
          %s1474 = scalar_lea.sflag [#allocation6], %s1473
          %s1475 = sand.u32 %s258, 1
          %s1476 = smul.addr %s1475, 8
          %s1477 = scalar_lea.vmem [#allocation15], %s1476
          %1479 = dma.done %s1474, 128
        $region96: #{tpu_custom_call.1} parent=91 // pred_fallthru
          _
      $region92: #{tpu_custom_call.1} parent=5 // pred_fallthru
        _
    $region6: #{tpu_custom_call.1} parent=1 // loop_footer
      %s30 = sadd.s32 1, %s26
    $region7: #{tpu_custom_call.1} parent=1 // loop_footer_branch
      %25 = sbr.rel target = $region3
    $region8: #{tpu_custom_call.1} parent=1 // loop_exit
      _
    %1480 = vsyncpa [#allocation5], 1
    %s1481 = scalar_lea.sflag [#allocation5], 1
    %1482 = vsyncpa %s1481, 1
    %1483 = vsyncpa [#allocation8], 1
    %s1484 = scalar_lea.sflag [#allocation8], 1
    %1485 = vsyncpa %s1484, 1
    %1486 = vsyncpa [#allocation11], 1
    %1487 = vsyncpa [#allocation14], 1
    %1488 = vsyncpa [#allocation6], 1
    %s1489 = scalar_lea.sflag [#allocation6], 1
    %1490 = vsyncpa %s1489, 1

</llo_original>
